<compile_context>
chip_gen: v7x
topology: tpu7x:2x2x1
jax: 0.10.0
libtpu: 0.0.40
codegen_flags: <defaults>
</compile_context>

<pallas_src>
from typing import NamedTuple

import jax
import jax.numpy as jnp
from jax.experimental import pallas as pl
from jax.experimental.pallas import tpu as pltpu


# ----------------------------- Pallas kernel --------------------------------

def multibranch_kernel(
    conn_ref, pheno_ref,
    w1_ref, b1_ref, w2_ref, b2_ref, w3_ref, b3_ref,            # conn branch
    wp1_ref, bp1_ref, wp2_ref, bp2_ref,                        # pheno branch
    wc1a_ref, wc1b_ref, bc1_ref, wc2_ref, bc2_ref, wc3t_ref, bc3_ref,  # classifier
    out_ref,
    acc_ref,                                                   # (tb, 512) f32 scratch
):
    k = pl.program_id(1)
    nk = pl.num_programs(1)

    # ---- K-streamed first conn layer: acc += x_tile @ w1_tile (MXU, f32 acc)
    @pl.when(k == 0)
    def _init():
        acc_ref[...] = jnp.zeros_like(acc_ref)

    acc_ref[...] += jnp.dot(conn_ref[...], w1_ref[...],
                            preferred_element_type=jnp.float32)

    # ---- everything else is tiny; run it once, at the last K step ----------
    @pl.when(k == nk - 1)
    def _finalize():
        f32 = jnp.float32
        bf16 = jnp.bfloat16
        relu = lambda x: jnp.maximum(x, 0.0)

        # conn branch layers 1-3 (Dropout = identity in eval mode)
        h1 = relu(acc_ref[...] + b1_ref[...]).astype(bf16)
        h2 = relu(jnp.dot(h1, w2_ref[...], preferred_element_type=f32)
                  + b2_ref[...]).astype(bf16)
        out_conn = relu(jnp.dot(h2, w3_ref[...], preferred_element_type=f32)
                        + b3_ref[...]).astype(bf16)

        # pheno branch (pheno_dim pre-padded to 128 lanes)
        p = pheno_ref[...]
        hp = relu(jnp.dot(p, wp1_ref[...], preferred_element_type=f32)
                  + bp1_ref[...]).astype(bf16)
        out_pheno = relu(jnp.dot(hp, wp2_ref[...], preferred_element_type=f32)
                         + bp2_ref[...]).astype(bf16)

        # classifier layer 1: concat([out_conn, out_pheno]) @ Wc1 done as a
        # split matmul (no in-kernel concatenate)
        c1 = relu(jnp.dot(out_conn, wc1a_ref[...], preferred_element_type=f32)
                  + jnp.dot(out_pheno, wc1b_ref[...], preferred_element_type=f32)
                  + bc1_ref[...]).astype(bf16)
        c2 = relu(jnp.dot(c1, wc2_ref[...], preferred_element_type=f32)
                  + bc2_ref[...])                                  # (tb, 32) f32

        # final Linear(32 -> 1) on the VPU: elementwise mul + lane reduction
        w_last = wc3t_ref[...].astype(f32)                         # (1, 32)
        logit = jnp.sum(c2 * w_last, axis=-1, keepdims=True) + bc3_ref[...]  # (tb, 1)

        # lane-dense output slab: broadcast across 128 lanes, slice in wrapper
        out_ref[...] = jnp.broadcast_to(logit, out_ref.shape).astype(out_ref.dtype)


# --------------------------- Weight preparation -------------------------------

def _round_up(x, m):
    return (x + m - 1) // m * m


class PreparedParams(NamedTuple):
    k_tile: int
    conn_dim: int
    pheno_dim: int
    K_pad: int
    P_pad: int
    w1_p: jax.Array
    b1: jax.Array
    w2_b: jax.Array
    b2: jax.Array
    w3_b: jax.Array
    b3: jax.Array
    wp1_p: jax.Array
    bp1: jax.Array
    wp2_b: jax.Array
    bp2: jax.Array
    wc1a: jax.Array
    wc1b: jax.Array
    bc1: jax.Array
    wc2_b: jax.Array
    bc2: jax.Array
    wc3_t: jax.Array
    bc3: jax.Array


def prepare_params(params, *, k_tile=None):
    """Pad + cast weights ONCE (model-load time), not on every forward call.

    At the real conn_dim=19900 the per-call pad/cast of w1 would move ~60 MB of
    HBM per forward -- comparable to the kernel's entire dominant w1 stream.
    """
    (w1, b1, w2, b2, w3, b3,
     wp1, bp1, wp2, bp2,
     wc1, bc1, wc2, bc2, wc3, bc3) = params

    conn_dim, h_conn = w1.shape
    pheno_dim, h_pheno = wp1.shape
    embed_conn = w3.shape[1]

    if k_tile is None:
        # Big K tiles: w1 block (tk, 512) bf16 = 4 MB, so per-grid-step DMA time
        # dwarfs the ~0.35 us fixed pipeline overhead.
        k_tile = min(4096, _round_up(conn_dim, 128))
    assert k_tile % 128 == 0
    K_pad = _round_up(conn_dim, k_tile)
    P_pad = _round_up(pheno_dim, 128)

    bf16 = jnp.bfloat16
    f32 = jnp.float32
    w1_p = jnp.zeros((K_pad, h_conn), bf16).at[:conn_dim, :].set(w1.astype(bf16))
    wp1_p = jnp.zeros((P_pad, h_pheno), bf16).at[:pheno_dim, :].set(wp1.astype(bf16))

    return PreparedParams(
        k_tile=k_tile, conn_dim=conn_dim, pheno_dim=pheno_dim,
        K_pad=K_pad, P_pad=P_pad,
        w1_p=w1_p, b1=b1.astype(f32),
        w2_b=w2.astype(bf16), b2=b2.astype(f32),
        w3_b=w3.astype(bf16), b3=b3.astype(f32),
        wp1_p=wp1_p, bp1=bp1.astype(f32),
        wp2_b=wp2.astype(bf16), bp2=bp2.astype(f32),
        wc1a=wc1[:embed_conn, :].astype(bf16),     # conn half of fused layer
        wc1b=wc1[embed_conn:, :].astype(bf16),     # pheno half of fused layer
        bc1=bc1.astype(f32),
        wc2_b=wc2.astype(bf16), bc2=bc2.astype(f32),
        wc3_t=wc3.T.astype(bf16),                  # (1, 32), consumed by the VPU
        bc3=bc3.astype(f32),
    )


# ------------------------------- Forward wrapper ------------------------------

def multibranch_forward(conn_x, pheno_x, prepared: PreparedParams, *, batch_tile=None):
    p = prepared
    B, conn_dim = conn_x.shape
    _, pheno_dim = pheno_x.shape
    assert conn_dim == p.conn_dim and pheno_dim == p.pheno_dim

    h_conn = p.w1_p.shape[1]        # 512
    h_pheno = p.wp1_p.shape[1]      # 32
    embed_conn = p.w3_b.shape[1]
    embed_pheno = p.wp2_b.shape[1]
    h_c1 = p.wc1a.shape[1]          # 64
    h_c2 = p.wc2_b.shape[1]         # 32
    OUT_LANES = 128                 # lane-dense output slab width

    tk = p.k_tile
    K_pad = p.K_pad
    P_pad = p.P_pad

    # --- batch tile: 16-aligned (bf16 vreg = [16,128]); as large as possible to
    # --- bound w1 re-streaming, but >=2 tiles so the "parallel" axis feeds both
    # --- v7x TensorCores.
    if batch_tile is None:
        B16 = _round_up(B, 16)
        if B16 <= 16:
            tb = 16
        else:
            tb = min(512, _round_up((B16 + 1) // 2, 16))
    else:
        tb = batch_tile
    assert tb % 16 == 0, "bf16 conn tiles need 16-row-aligned batch tiles"

    B_pad = _round_up(B, tb)
    n_btiles = B_pad // tb
    n_ktiles = K_pad // tk

    # --- pad + cast activations (per-call, unavoidable) ----------------------
    bf16 = jnp.bfloat16
    conn_p = jnp.zeros((B_pad, K_pad), bf16).at[:B, :conn_dim].set(conn_x.astype(bf16))
    pheno_p = jnp.zeros((B_pad, P_pad), bf16).at[:B, :pheno_dim].set(pheno_x.astype(bf16))

    # --- BlockSpecs ----------------------------------------------------------
    def inv(arr):  # grid-invariant full block (fetched once, stays resident)
        return pl.BlockSpec(arr.shape, lambda i, k: (0, 0))

    in_specs = [
        pl.BlockSpec((tb, tk), lambda i, k: (i, k)),        # conn_x (M,K tiled)
        pl.BlockSpec((tb, P_pad), lambda i, k: (i, 0)),     # pheno_x (M tiled)
        pl.BlockSpec((tk, h_conn), lambda i, k: (k, 0)),    # w1 (K tiled / streamed)
        inv(p.b1),
        inv(p.w2_b), inv(p.b2),
        inv(p.w3_b), inv(p.b3),
        inv(p.wp1_p), inv(p.bp1),
        inv(p.wp2_b), inv(p.bp2),
        inv(p.wc1a), inv(p.wc1b), inv(p.bc1),
        inv(p.wc2_b), inv(p.bc2),
        inv(p.wc3_t), inv(p.bc3),
    ]
    out_spec = pl.BlockSpec((tb, OUT_LANES), lambda i, k: (i, 0))

    # --- VMEM budget: computed from the actual tile footprint (not a flat 48M)
    def nbytes(a):
        return a.size * a.dtype.itemsize

    resident_bytes = sum(nbytes(a) for a in (
        p.b1, p.w2_b, p.b2, p.w3_b, p.b3, p.wp1_p, p.bp1, p.wp2_b, p.bp2,
        p.wc1a, p.wc1b, p.bc1, p.wc2_b, p.bc2, p.wc3_t, p.bc3))
    stream_bytes = (tb * tk * 2            # conn tile (bf16)
                    + tk * h_conn * 2      # w1 tile (bf16)
                    + tb * P_pad * 2       # pheno tile (bf16)
                    + tb * OUT_LANES * 4)  # output slab (f32)
    acc_bytes = tb * h_conn * 4
    vmem_needed = 2 * (stream_bytes + resident_bytes) + acc_bytes  # double-buffered
    vmem_limit = max(int(1.25 * vmem_needed), 16 * 1024 * 1024)    # ~26 MiB at prod tiles

    # --- advisory cost estimate for XLA scheduling ---------------------------
    flops = 2 * B_pad * (K_pad * h_conn + h_conn * h_conn + h_conn * embed_conn
                         + P_pad * h_pheno + h_pheno * embed_pheno
                         + embed_conn * h_c1 + embed_pheno * h_c1
                         + h_c1 * h_c2 + h_c2)
    bytes_accessed = (2 * conn_p.size + 2 * pheno_p.size
                      + 2 * p.w1_p.size * n_btiles     # w1 re-streamed per batch tile
                      + resident_bytes
                      + 4 * B_pad * OUT_LANES)
    cost = pl.CostEstimate(flops=int(flops), transcendentals=0,
                           bytes_accessed=int(bytes_accessed))

    out = pl.pallas_call(
        multibranch_kernel,
        out_shape=jax.ShapeDtypeStruct((B_pad, OUT_LANES), jnp.float32),
        grid_spec=pltpu.PrefetchScalarGridSpec(
            num_scalar_prefetch=0,
            grid=(n_btiles, n_ktiles),          # batch (parallel) x K (reduction, last)
            in_specs=in_specs,
            out_specs=out_spec,
            scratch_shapes=[pltpu.VMEM((tb, h_conn), jnp.float32)],
        ),
        compiler_params=pltpu.CompilerParams(
            dimension_semantics=("parallel", "arbitrary"),
            vmem_limit_bytes=vmem_limit,
        ),
        cost_estimate=cost,
    )(conn_p, pheno_p,
      p.w1_p, p.b1, p.w2_b, p.b2, p.w3_b, p.b3,
      p.wp1_p, p.bp1, p.wp2_b, p.bp2,
      p.wc1a, p.wc1b, p.bc1, p.wc2_b, p.bc2, p.wc3_t, p.bc3)

    # logits = classifier(fused).squeeze(1): drop batch padding + lane padding
    return out[:B, 0]


# --------------------------- Parameter init ----------------------------------

def init_params(key, conn_dim, pheno_dim, embed_conn, embed_pheno):
    """Deterministic small-scale init; weights stored [in, out]."""
    def linear(k, fan_in, fan_out):
        kw, kb = jax.random.split(k)
        scale = 1.0 / jnp.sqrt(fan_in)
        w = jax.random.uniform(kw, (fan_in, fan_out), jnp.float32, -scale, scale)
        b = jax.random.uniform(kb, (1, fan_out), jnp.float32, -scale, scale)
        return w, b

    ks = jax.random.split(key, 8)
    w1, b1 = linear(ks[0], conn_dim, 512)
    w2, b2 = linear(ks[1], 512, 512)
    w3, b3 = linear(ks[2], 512, embed_conn)
    wp1, bp1 = linear(ks[3], pheno_dim, 32)
    wp2, bp2 = linear(ks[4], 32, embed_pheno)
    wc1, bc1 = linear(ks[5], embed_conn + embed_pheno, 64)
    wc2, bc2 = linear(ks[6], 64, 32)
    wc3, bc3 = linear(ks[7], 32, 1)
    return (w1, b1, w2, b2, w3, b3,
            wp1, bp1, wp2, bp2,
            wc1, bc1, wc2, bc2, wc3, bc3)


def reference_forward(conn_x, pheno_x, params):
    """Pure-JAX reference mirroring the PyTorch forward (eval mode), with the
    same bf16-weight / bf16-activation / f32-accumulation numerics policy."""
    (w1, b1, w2, b2, w3, b3,
     wp1, bp1, wp2, bp2,
     wc1, bc1, wc2, bc2, wc3, bc3) = params
    bf = lambda a: a.astype(jnp.bfloat16)
    relu = lambda x: jnp.maximum(x, 0.0)
    dot = lambda a, b: jnp.dot(bf(a), bf(b), preferred_element_type=jnp.float32)

    h = relu(dot(conn_x, w1) + b1)
    h = relu(dot(h, w2) + b2)
    out_conn = relu(dot(h, w3) + b3)
    hp = relu(dot(pheno_x, wp1) + bp1)
    out_pheno = relu(dot(hp, wp2) + bp2)
    fused = jnp.concatenate([out_conn, out_pheno], axis=1)
    c = relu(dot(fused, wc1) + bc1)
    c = relu(dot(c, wc2) + bc2)                                   # f32
    # final layer in f32 with bf16-rounded weight (matches the kernel's VPU path)
    logits = jnp.dot(c, bf(wc3).astype(jnp.float32)) + bc3
    return logits[:, 0]


# ---------------------------------- Main --------------------------------------

if __name__ == "__main__":
    # Small shapes consistent with the module's forward:
    #   conn_x: [batch, conn_dim], pheno_x: [batch, pheno_dim]
    batch = 32
    conn_dim = 512       # scaled-down stand-in for the real 19900
    pheno_dim = 6
    embed_conn = 256
    embed_pheno = 16

    key = jax.random.PRNGKey(0)
    k_params, k_conn, k_pheno = jax.random.split(key, 3)

    params = init_params(k_params, conn_dim, pheno_dim, embed_conn, embed_pheno)
    conn_x = jax.random.normal(k_conn, (batch, conn_dim), jnp.float32)
    pheno_x = jax.random.normal(k_pheno, (batch, pheno_dim), jnp.float32)

    # Pad / cast weights once (prod: at model-load time).  k_tile=128 keeps the
    # toy run exercising the K-reduction axis (4 steps); the production default
    # is k_tile=4096.  Default batch tiling gives 2 parallel batch tiles here.
    prepared = prepare_params(params, k_tile=128)

    logits = multibranch_forward(conn_x, pheno_x, prepared)
    logits = jax.block_until_ready(logits)

    ref = reference_forward(conn_x, pheno_x, params)
    assert logits.shape == (batch,), logits.shape
    assert jnp.allclose(logits, ref, atol=2e-3, rtol=2e-3), (logits, ref)

    print("KERNEL_OK")
</pallas_src>

<mosaic_0001>
module attributes {stable_mosaic.version = 11 : i64} {
  func.func @multibranch_kernel(%arg0: i32, %arg1: i32, %arg2: memref<16x128xbf16, #tpu.memory_space<vmem>>, %arg3: memref<16x128xbf16, #tpu.memory_space<vmem>>, %arg4: memref<128x512xbf16, #tpu.memory_space<vmem>>, %arg5: memref<1x512xf32, #tpu.memory_space<vmem>>, %arg6: memref<512x512xbf16, #tpu.memory_space<vmem>>, %arg7: memref<1x512xf32, #tpu.memory_space<vmem>>, %arg8: memref<512x256xbf16, #tpu.memory_space<vmem>>, %arg9: memref<1x256xf32, #tpu.memory_space<vmem>>, %arg10: memref<128x32xbf16, #tpu.memory_space<vmem>>, %arg11: memref<1x32xf32, #tpu.memory_space<vmem>>, %arg12: memref<32x16xbf16, #tpu.memory_space<vmem>>, %arg13: memref<1x16xf32, #tpu.memory_space<vmem>>, %arg14: memref<256x64xbf16, #tpu.memory_space<vmem>>, %arg15: memref<16x64xbf16, #tpu.memory_space<vmem>>, %arg16: memref<1x64xf32, #tpu.memory_space<vmem>>, %arg17: memref<64x32xbf16, #tpu.memory_space<vmem>>, %arg18: memref<1x32xf32, #tpu.memory_space<vmem>>, %arg19: memref<1x32xbf16, #tpu.memory_space<vmem>>, %arg20: memref<1x1xf32, #tpu.memory_space<vmem>>, %arg21: memref<16x128xf32, #tpu.memory_space<vmem>>, %arg22: memref<16x512xf32, #tpu.memory_space<vmem>>) attributes {dimension_semantics = [#tpu.dimension_semantics<parallel>, #tpu.dimension_semantics<arbitrary>], iteration_bounds = array<i64: 2, 4>, scalar_prefetch = 0 : i64, scratch_operands = 1 : i64, tpu.core_type = #tpu.core_type<tc>, window_params = [{transform_indices = @transform_0, window_bounds = array<i64: 16, 128>}, {transform_indices = @transform_1, window_bounds = array<i64: 16, 128>}, {transform_indices = @transform_2, window_bounds = array<i64: 128, 512>}, {pipeline_mode = #tpu.pipeline_mode<synchronous>, transform_indices = @transform_3, window_bounds = array<i64: 1, 512>}, {pipeline_mode = #tpu.pipeline_mode<synchronous>, transform_indices = @transform_4, window_bounds = array<i64: 512, 512>}, {pipeline_mode = #tpu.pipeline_mode<synchronous>, transform_indices = @transform_5, window_bounds = array<i64: 1, 512>}, {pipeline_mode = #tpu.pipeline_mode<synchronous>, transform_indices = @transform_6, window_bounds = array<i64: 512, 256>}, {pipeline_mode = #tpu.pipeline_mode<synchronous>, transform_indices = @transform_7, window_bounds = array<i64: 1, 256>}, {pipeline_mode = #tpu.pipeline_mode<synchronous>, transform_indices = @transform_8, window_bounds = array<i64: 128, 32>}, {pipeline_mode = #tpu.pipeline_mode<synchronous>, transform_indices = @transform_9, window_bounds = array<i64: 1, 32>}, {pipeline_mode = #tpu.pipeline_mode<synchronous>, transform_indices = @transform_10, window_bounds = array<i64: 32, 16>}, {pipeline_mode = #tpu.pipeline_mode<synchronous>, transform_indices = @transform_11, window_bounds = array<i64: 1, 16>}, {pipeline_mode = #tpu.pipeline_mode<synchronous>, transform_indices = @transform_12, window_bounds = array<i64: 256, 64>}, {pipeline_mode = #tpu.pipeline_mode<synchronous>, transform_indices = @transform_13, window_bounds = array<i64: 16, 64>}, {pipeline_mode = #tpu.pipeline_mode<synchronous>, transform_indices = @transform_14, window_bounds = array<i64: 1, 64>}, {pipeline_mode = #tpu.pipeline_mode<synchronous>, transform_indices = @transform_15, window_bounds = array<i64: 64, 32>}, {pipeline_mode = #tpu.pipeline_mode<synchronous>, transform_indices = @transform_16, window_bounds = array<i64: 1, 32>}, {pipeline_mode = #tpu.pipeline_mode<synchronous>, transform_indices = @transform_17, window_bounds = array<i64: 1, 32>}, {pipeline_mode = #tpu.pipeline_mode<synchronous>, transform_indices = @transform_18, window_bounds = array<i64: 1, 1>}, {transform_indices = @transform_19, window_bounds = array<i64: 16, 128>}]} {
    %c0_i32 = arith.constant 0 : i32
    %0 = arith.cmpi eq, %arg1, %c0_i32 : i32
    %1 = arith.extui %0 : i1 to i32
    %c0_i32_0 = arith.constant 0 : i32
    %2 = arith.cmpi ne, %1, %c0_i32_0 : i32
    scf.if %2 {
      %cst_9 = arith.constant 0.000000e+00 : f32
      %12 = vector.broadcast %cst_9 : f32 to vector<16x512xf32>
      %c0_10 = arith.constant 0 : index
      %c0_11 = arith.constant 0 : index
      %13 = vector.load %arg22[%c0_10, %c0_11] : memref<16x512xf32, #tpu.memory_space<vmem>>, vector<16x512xf32>
      tpu.vector_store %arg22[%c0_10, %c0_11], %12 {strides = array<i32>} : memref<16x512xf32, #tpu.memory_space<vmem>>, vector<16x512xf32>,
    } else {
    }
    %c0 = arith.constant 0 : index
    %c0_1 = arith.constant 0 : index
    %3 = vector.load %arg22[%c0, %c0_1] : memref<16x512xf32, #tpu.memory_space<vmem>>, vector<16x512xf32>
    %c0_2 = arith.constant 0 : index
    %c0_3 = arith.constant 0 : index
    %4 = vector.load %arg2[%c0_2, %c0_3] : memref<16x128xbf16, #tpu.memory_space<vmem>>, vector<16x128xbf16>
    %c0_4 = arith.constant 0 : index
    %c0_5 = arith.constant 0 : index
    %5 = vector.load %arg4[%c0_4, %c0_5] : memref<128x512xbf16, #tpu.memory_space<vmem>>, vector<128x512xbf16>
    %cst = arith.constant dense<0.000000e+00> : vector<16x512xf32>
    %6 = tpu.matmul %4, %5, %cst {dimension_numbers = #tpu.dot_dimension_numbers<[1], [0], [0], [1], [0, 0, 1, 1], [], []>} : vector<16x128xbf16>, vector<128x512xbf16>, vector<16x512xf32> -> vector<16x512xf32>
    %7 = arith.addf %3, %6 : vector<16x512xf32>
    %c0_6 = arith.constant 0 : index
    %c0_7 = arith.constant 0 : index
    %8 = vector.load %arg22[%c0_6, %c0_7] : memref<16x512xf32, #tpu.memory_space<vmem>>, vector<16x512xf32>
    tpu.vector_store %arg22[%c0_6, %c0_7], %7 {strides = array<i32>} : memref<16x512xf32, #tpu.memory_space<vmem>>, vector<16x512xf32>,
    %c3_i32 = arith.constant 3 : i32
    %9 = arith.cmpi eq, %arg1, %c3_i32 : i32
    %10 = arith.extui %9 : i1 to i32
    %c0_i32_8 = arith.constant 0 : i32
    %11 = arith.cmpi ne, %10, %c0_i32_8 : i32
    scf.if %11 {
      %c0_9 = arith.constant 0 : index
      %c0_10 = arith.constant 0 : index
      %12 = vector.load %arg22[%c0_9, %c0_10] : memref<16x512xf32, #tpu.memory_space<vmem>>, vector<16x512xf32>
      %c0_11 = arith.constant 0 : index
      %c0_12 = arith.constant 0 : index
      %13 = vector.load %arg5[%c0_11, %c0_12] : memref<1x512xf32, #tpu.memory_space<vmem>>, vector<1x512xf32>
      %14 = vector.broadcast %13 : vector<1x512xf32> to vector<16x512xf32>
      %15 = arith.addf %12, %14 : vector<16x512xf32>
      %cst_13 = arith.constant 0.000000e+00 : f32
      %16 = vector.broadcast %cst_13 : f32 to vector<16x512xf32>
      %17 = arith.maximumf %15, %16 : vector<16x512xf32>
      %18 = arith.truncf %17 : vector<16x512xf32> to vector<16x512xbf16>
      %c0_14 = arith.constant 0 : index
      %c0_15 = arith.constant 0 : index
      %19 = vector.load %arg6[%c0_14, %c0_15] : memref<512x512xbf16, #tpu.memory_space<vmem>>, vector<512x512xbf16>
      %cst_16 = arith.constant dense<0.000000e+00> : vector<16x512xf32>
      %20 = tpu.matmul %18, %19, %cst_16 {dimension_numbers = #tpu.dot_dimension_numbers<[1], [0], [0], [1], [0, 0, 1, 1], [], []>} : vector<16x512xbf16>, vector<512x512xbf16>, vector<16x512xf32> -> vector<16x512xf32>
      %c0_17 = arith.constant 0 : index
      %c0_18 = arith.constant 0 : index
      %21 = vector.load %arg7[%c0_17, %c0_18] : memref<1x512xf32, #tpu.memory_space<vmem>>, vector<1x512xf32>
      %22 = vector.broadcast %21 : vector<1x512xf32> to vector<16x512xf32>
      %23 = arith.addf %20, %22 : vector<16x512xf32>
      %cst_19 = arith.constant 0.000000e+00 : f32
      %24 = vector.broadcast %cst_19 : f32 to vector<16x512xf32>
      %25 = arith.maximumf %23, %24 : vector<16x512xf32>
      %26 = arith.truncf %25 : vector<16x512xf32> to vector<16x512xbf16>
      %c0_20 = arith.constant 0 : index
      %c0_21 = arith.constant 0 : index
      %27 = vector.load %arg8[%c0_20, %c0_21] : memref<512x256xbf16, #tpu.memory_space<vmem>>, vector<512x256xbf16>
      %cst_22 = arith.constant dense<0.000000e+00> : vector<16x256xf32>
      %28 = tpu.matmul %26, %27, %cst_22 {dimension_numbers = #tpu.dot_dimension_numbers<[1], [0], [0], [1], [0, 0, 1, 1], [], []>} : vector<16x512xbf16>, vector<512x256xbf16>, vector<16x256xf32> -> vector<16x256xf32>
      %c0_23 = arith.constant 0 : index
      %c0_24 = arith.constant 0 : index
      %29 = vector.load %arg9[%c0_23, %c0_24] : memref<1x256xf32, #tpu.memory_space<vmem>>, vector<1x256xf32>
      %30 = vector.broadcast %29 : vector<1x256xf32> to vector<16x256xf32>
      %31 = arith.addf %28, %30 : vector<16x256xf32>
      %cst_25 = arith.constant 0.000000e+00 : f32
      %32 = vector.broadcast %cst_25 : f32 to vector<16x256xf32>
      %33 = arith.maximumf %31, %32 : vector<16x256xf32>
      %34 = arith.truncf %33 : vector<16x256xf32> to vector<16x256xbf16>
      %c0_26 = arith.constant 0 : index
      %c0_27 = arith.constant 0 : index
      %35 = vector.load %arg3[%c0_26, %c0_27] : memref<16x128xbf16, #tpu.memory_space<vmem>>, vector<16x128xbf16>
      %c0_28 = arith.constant 0 : index
      %c0_29 = arith.constant 0 : index
      %36 = vector.load %arg10[%c0_28, %c0_29] : memref<128x32xbf16, #tpu.memory_space<vmem>>, vector<128x32xbf16>
      %cst_30 = arith.constant dense<0.000000e+00> : vector<16x32xf32>
      %37 = tpu.matmul %35, %36, %cst_30 {dimension_numbers = #tpu.dot_dimension_numbers<[1], [0], [0], [1], [0, 0, 1, 1], [], []>} : vector<16x128xbf16>, vector<128x32xbf16>, vector<16x32xf32> -> vector<16x32xf32>
      %c0_31 = arith.constant 0 : index
      %c0_32 = arith.constant 0 : index
      %38 = vector.load %arg11[%c0_31, %c0_32] : memref<1x32xf32, #tpu.memory_space<vmem>>, vector<1x32xf32>
      %39 = vector.broadcast %38 : vector<1x32xf32> to vector<16x32xf32>
      %40 = arith.addf %37, %39 : vector<16x32xf32>
      %cst_33 = arith.constant 0.000000e+00 : f32
      %41 = vector.broadcast %cst_33 : f32 to vector<16x32xf32>
      %42 = arith.maximumf %40, %41 : vector<16x32xf32>
      %43 = arith.truncf %42 : vector<16x32xf32> to vector<16x32xbf16>
      %c0_34 = arith.constant 0 : index
      %c0_35 = arith.constant 0 : index
      %44 = vector.load %arg12[%c0_34, %c0_35] : memref<32x16xbf16, #tpu.memory_space<vmem>>, vector<32x16xbf16>
      %cst_36 = arith.constant dense<0.000000e+00> : vector<16x16xf32>
      %45 = tpu.matmul %43, %44, %cst_36 {dimension_numbers = #tpu.dot_dimension_numbers<[1], [0], [0], [1], [0, 0, 1, 1], [], []>} : vector<16x32xbf16>, vector<32x16xbf16>, vector<16x16xf32> -> vector<16x16xf32>
      %c0_37 = arith.constant 0 : index
      %c0_38 = arith.constant 0 : index
      %46 = vector.load %arg13[%c0_37, %c0_38] : memref<1x16xf32, #tpu.memory_space<vmem>>, vector<1x16xf32>
      %47 = vector.broadcast %46 : vector<1x16xf32> to vector<16x16xf32>
      %48 = arith.addf %45, %47 : vector<16x16xf32>
      %cst_39 = arith.constant 0.000000e+00 : f32
      %49 = vector.broadcast %cst_39 : f32 to vector<16x16xf32>
      %50 = arith.maximumf %48, %49 : vector<16x16xf32>
      %51 = arith.truncf %50 : vector<16x16xf32> to vector<16x16xbf16>
      %c0_40 = arith.constant 0 : index
      %c0_41 = arith.constant 0 : index
      %52 = vector.load %arg14[%c0_40, %c0_41] : memref<256x64xbf16, #tpu.memory_space<vmem>>, vector<256x64xbf16>
      %cst_42 = arith.constant dense<0.000000e+00> : vector<16x64xf32>
      %53 = tpu.matmul %34, %52, %cst_42 {dimension_numbers = #tpu.dot_dimension_numbers<[1], [0], [0], [1], [0, 0, 1, 1], [], []>} : vector<16x256xbf16>, vector<256x64xbf16>, vector<16x64xf32> -> vector<16x64xf32>
      %c0_43 = arith.constant 0 : index
      %c0_44 = arith.constant 0 : index
      %54 = vector.load %arg15[%c0_43, %c0_44] : memref<16x64xbf16, #tpu.memory_space<vmem>>, vector<16x64xbf16>
      %cst_45 = arith.constant dense<0.000000e+00> : vector<16x64xf32>
      %55 = tpu.matmul %51, %54, %cst_45 {dimension_numbers = #tpu.dot_dimension_numbers<[1], [0], [0], [1], [0, 0, 1, 1], [], []>} : vector<16x16xbf16>, vector<16x64xbf16>, vector<16x64xf32> -> vector<16x64xf32>
      %56 = arith.addf %53, %55 : vector<16x64xf32>
      %c0_46 = arith.constant 0 : index
      %c0_47 = arith.constant 0 : index
      %57 = vector.load %arg16[%c0_46, %c0_47] : memref<1x64xf32, #tpu.memory_space<vmem>>, vector<1x64xf32>
      %58 = vector.broadcast %57 : vector<1x64xf32> to vector<16x64xf32>
      %59 = arith.addf %56, %58 : vector<16x64xf32>
      %cst_48 = arith.constant 0.000000e+00 : f32
      %60 = vector.broadcast %cst_48 : f32 to vector<16x64xf32>
      %61 = arith.maximumf %59, %60 : vector<16x64xf32>
      %62 = arith.truncf %61 : vector<16x64xf32> to vector<16x64xbf16>
      %c0_49 = arith.constant 0 : index
      %c0_50 = arith.constant 0 : index
      %63 = vector.load %arg17[%c0_49, %c0_50] : memref<64x32xbf16, #tpu.memory_space<vmem>>, vector<64x32xbf16>
      %cst_51 = arith.constant dense<0.000000e+00> : vector<16x32xf32>
      %64 = tpu.matmul %62, %63, %cst_51 {dimension_numbers = #tpu.dot_dimension_numbers<[1], [0], [0], [1], [0, 0, 1, 1], [], []>} : vector<16x64xbf16>, vector<64x32xbf16>, vector<16x32xf32> -> vector<16x32xf32>
      %c0_52 = arith.constant 0 : index
      %c0_53 = arith.constant 0 : index
      %65 = vector.load %arg18[%c0_52, %c0_53] : memref<1x32xf32, #tpu.memory_space<vmem>>, vector<1x32xf32>
      %66 = vector.broadcast %65 : vector<1x32xf32> to vector<16x32xf32>
      %67 = arith.addf %64, %66 : vector<16x32xf32>
      %cst_54 = arith.constant 0.000000e+00 : f32
      %68 = vector.broadcast %cst_54 : f32 to vector<16x32xf32>
      %69 = arith.maximumf %67, %68 : vector<16x32xf32>
      %c0_55 = arith.constant 0 : index
      %c0_56 = arith.constant 0 : index
      %70 = vector.load %arg19[%c0_55, %c0_56] : memref<1x32xbf16, #tpu.memory_space<vmem>>, vector<1x32xbf16>
      %71 = arith.extf %70 : vector<1x32xbf16> to vector<1x32xf32>
      %72 = vector.broadcast %71 : vector<1x32xf32> to vector<16x32xf32>
      %73 = arith.mulf %69, %72 : vector<16x32xf32>
      %cst_57 = arith.constant dense<0.000000e+00> : vector<16xf32>
      %74 = vector.multi_reduction <add>, %73, %cst_57 [1] : vector<16x32xf32> to vector<16xf32>
      %75 = vector.shape_cast %74 : vector<16xf32> to vector<16x1xf32>
      %c0_58 = arith.constant 0 : index
      %c0_59 = arith.constant 0 : index
      %76 = vector.load %arg20[%c0_58, %c0_59] : memref<1x1xf32, #tpu.memory_space<vmem>>, vector<1x1xf32>
      %77 = vector.broadcast %76 : vector<1x1xf32> to vector<16x1xf32>
      %78 = arith.addf %75, %77 : vector<16x1xf32>
      %79 = vector.shape_cast %78 : vector<16x1xf32> to vector<16x1xf32>
      %80 = vector.broadcast %79 : vector<16x1xf32> to vector<16x128xf32>
      %c0_60 = arith.constant 0 : index
      %c0_61 = arith.constant 0 : index
      %81 = vector.load %arg21[%c0_60, %c0_61] : memref<16x128xf32, #tpu.memory_space<vmem>>, vector<16x128xf32>
      tpu.vector_store %arg21[%c0_60, %c0_61], %80 {strides = array<i32>} : memref<16x128xf32, #tpu.memory_space<vmem>>, vector<16x128xf32>,
    } else {
    }
    return
  }
  func.func @transform_0(%arg0: i32, %arg1: i32) -> (i32, i32) {
    %c0_i32 = arith.constant 0 : i32
    return %arg0, %arg1 : i32, i32
  }
  func.func @transform_1(%arg0: i32, %arg1: i32) -> (i32, i32) {
    %c0_i32 = arith.constant 0 : i32
    %c0_i32_0 = arith.constant 0 : i32
    return %arg0, %c0_i32 : i32, i32
  }
  func.func @transform_2(%arg0: i32, %arg1: i32) -> (i32, i32) {
    %c0_i32 = arith.constant 0 : i32
    %c0_i32_0 = arith.constant 0 : i32
    return %arg1, %c0_i32 : i32, i32
  }
  func.func @transform_3(%arg0: i32, %arg1: i32) -> (i32, i32) {
    %c0_i32 = arith.constant 0 : i32
    %c0_i32_0 = arith.constant 0 : i32
    %c0_i32_1 = arith.constant 0 : i32
    return %c0_i32, %c0_i32_0 : i32, i32
  }
  func.func @transform_4(%arg0: i32, %arg1: i32) -> (i32, i32) {
    %c0_i32 = arith.constant 0 : i32
    %c0_i32_0 = arith.constant 0 : i32
    %c0_i32_1 = arith.constant 0 : i32
    return %c0_i32, %c0_i32_0 : i32, i32
  }
  func.func @transform_5(%arg0: i32, %arg1: i32) -> (i32, i32) {
    %c0_i32 = arith.constant 0 : i32
    %c0_i32_0 = arith.constant 0 : i32
    %c0_i32_1 = arith.constant 0 : i32
    return %c0_i32, %c0_i32_0 : i32, i32
  }
  func.func @transform_6(%arg0: i32, %arg1: i32) -> (i32, i32) {
    %c0_i32 = arith.constant 0 : i32
    %c0_i32_0 = arith.constant 0 : i32
    %c0_i32_1 = arith.constant 0 : i32
    return %c0_i32, %c0_i32_0 : i32, i32
  }
  func.func @transform_7(%arg0: i32, %arg1: i32) -> (i32, i32) {
    %c0_i32 = arith.constant 0 : i32
    %c0_i32_0 = arith.constant 0 : i32
    %c0_i32_1 = arith.constant 0 : i32
    return %c0_i32, %c0_i32_0 : i32, i32
  }
  func.func @transform_8(%arg0: i32, %arg1: i32) -> (i32, i32) {
    %c0_i32 = arith.constant 0 : i32
    %c0_i32_0 = arith.constant 0 : i32
    %c0_i32_1 = arith.constant 0 : i32
    return %c0_i32, %c0_i32_0 : i32, i32
  }
  func.func @transform_9(%arg0: i32, %arg1: i32) -> (i32, i32) {
    %c0_i32 = arith.constant 0 : i32
    %c0_i32_0 = arith.constant 0 : i32
    %c0_i32_1 = arith.constant 0 : i32
    return %c0_i32, %c0_i32_0 : i32, i32
  }
  func.func @transform_10(%arg0: i32, %arg1: i32) -> (i32, i32) {
    %c0_i32 = arith.constant 0 : i32
    %c0_i32_0 = arith.constant 0 : i32
    %c0_i32_1 = arith.constant 0 : i32
    return %c0_i32, %c0_i32_0 : i32, i32
  }
  func.func @transform_11(%arg0: i32, %arg1: i32) -> (i32, i32) {
    %c0_i32 = arith.constant 0 : i32
    %c0_i32_0 = arith.constant 0 : i32
    %c0_i32_1 = arith.constant 0 : i32
    return %c0_i32, %c0_i32_0 : i32, i32
  }
  func.func @transform_12(%arg0: i32, %arg1: i32) -> (i32, i32) {
    %c0_i32 = arith.constant 0 : i32
    %c0_i32_0 = arith.constant 0 : i32
    %c0_i32_1 = arith.constant 0 : i32
    return %c0_i32, %c0_i32_0 : i32, i32
  }
  func.func @transform_13(%arg0: i32, %arg1: i32) -> (i32, i32) {
    %c0_i32 = arith.constant 0 : i32
    %c0_i32_0 = arith.constant 0 : i32
    %c0_i32_1 = arith.constant 0 : i32
    return %c0_i32, %c0_i32_0 : i32, i32
  }
  func.func @transform_14(%arg0: i32, %arg1: i32) -> (i32, i32) {
    %c0_i32 = arith.constant 0 : i32
    %c0_i32_0 = arith.constant 0 : i32
    %c0_i32_1 = arith.constant 0 : i32
    return %c0_i32, %c0_i32_0 : i32, i32
  }
  func.func @transform_15(%arg0: i32, %arg1: i32) -> (i32, i32) {
    %c0_i32 = arith.constant 0 : i32
    %c0_i32_0 = arith.constant 0 : i32
    %c0_i32_1 = arith.constant 0 : i32
    return %c0_i32, %c0_i32_0 : i32, i32
  }
  func.func @transform_16(%arg0: i32, %arg1: i32) -> (i32, i32) {
    %c0_i32 = arith.constant 0 : i32
    %c0_i32_0 = arith.constant 0 : i32
    %c0_i32_1 = arith.constant 0 : i32
    return %c0_i32, %c0_i32_0 : i32, i32
  }
  func.func @transform_17(%arg0: i32, %arg1: i32) -> (i32, i32) {
    %c0_i32 = arith.constant 0 : i32
    %c0_i32_0 = arith.constant 0 : i32
    %c0_i32_1 = arith.constant 0 : i32
    return %c0_i32, %c0_i32_0 : i32, i32
  }
  func.func @transform_18(%arg0: i32, %arg1: i32) -> (i32, i32) {
    %c0_i32 = arith.constant 0 : i32
    %c0_i32_0 = arith.constant 0 : i32
    %c0_i32_1 = arith.constant 0 : i32
    return %c0_i32, %c0_i32_0 : i32, i32
  }
  func.func @transform_19(%arg0: i32, %arg1: i32) -> (i32, i32) {
    %c0_i32 = arith.constant 0 : i32
    %c0_i32_0 = arith.constant 0 : i32
    return %arg0, %c0_i32 : i32, i32
  }
}

</mosaic_0001>

<llo_original>
// kernel: tpu_custom_call.1
$region0: #{tpu_custom_call.1}
  #allocation0 [shape = 'u32[]', space=smem, size = 0x4, offset = 0x4, fixed_abs, tag = 'smem constant byte address 0x4 - core index']
  #allocation1 [shape = 'u32[144,128]{1,0:T(1,128)}', space=vmem, size = 0x12000, scoped, tag = 'internal scratch']
  #allocation2 [shape = 'f32[16,512]{1,0:T(8,128)}', space=vmem, size = 0x8000, scoped, tag = 'scratch operand']
  #allocation3 [shape = 'f32[1,1]{1,0:T(1,128)S(1)}', space=vmem, size = 0x200, scoped, tag = 'scoped memory for tpu_custom_call.1']
  %s0 = inlined_call_operand.vmem [shape: bf16[32,512], index: 0, kind: input, shape index: {}]
  %s1 = inlined_call_operand.vmem [shape: bf16[32,128], index: 1, kind: input, shape index: {}]
  %s2 = inlined_call_operand.hbm [shape: bf16[512,512], index: 2, kind: input, shape index: {}]
  %s3 = inlined_call_operand.vmem [shape: f32[1,512], index: 3, kind: input, shape index: {}]
  %s4 = inlined_call_operand.hbm [shape: bf16[512,512], index: 4, kind: input, shape index: {}]
  %s5 = inlined_call_operand.vmem [shape: f32[1,512], index: 5, kind: input, shape index: {}]
  %s6 = inlined_call_operand.hbm [shape: bf16[512,256], index: 6, kind: input, shape index: {}]
  %s7 = inlined_call_operand.vmem [shape: f32[1,256], index: 7, kind: input, shape index: {}]
  %s8 = inlined_call_operand.vmem [shape: bf16[128,32], index: 8, kind: input, shape index: {}]
  %s9 = inlined_call_operand.vmem [shape: f32[1,32], index: 9, kind: input, shape index: {}]
  %s10 = inlined_call_operand.vmem [shape: bf16[32,16], index: 10, kind: input, shape index: {}]
  %s11 = inlined_call_operand.vmem [shape: f32[1,16], index: 11, kind: input, shape index: {}]
  %s12 = inlined_call_operand.vmem [shape: bf16[256,64], index: 12, kind: input, shape index: {}]
  %s13 = inlined_call_operand.vmem [shape: bf16[16,64], index: 13, kind: input, shape index: {}]
  %s14 = inlined_call_operand.vmem [shape: f32[1,64], index: 14, kind: input, shape index: {}]
  %s15 = inlined_call_operand.vmem [shape: bf16[64,32], index: 15, kind: input, shape index: {}]
  %s16 = inlined_call_operand.vmem [shape: f32[1,32], index: 16, kind: input, shape index: {}]
  %s17 = inlined_call_operand.vmem [shape: bf16[1,32], index: 17, kind: input, shape index: {}]
  %s18 = inlined_call_operand.<no memory space> [shape: f32[1,1], index: 18, kind: input, shape index: {}]
  %s19 = inlined_call_operand.hbm [shape: f32[32,128], index: 19, kind: output, shape index: {}]
  %s20 = sld [smem:[#allocation0]]
  $region170: #{tpu_custom_call.1} parent=0
    _
  %s22 = ssub.s32 1, %s20
  %s23 = scalar_select 0, %s22, %s20
  %v24 = vstv %s18
  %25 = vst [vmem:[#allocation3] sm:$0x1] %v24
  $region1: #{tpu_custom_call.1} parent=0
    #allocation4 [shape = 'u8[8192]{0}', space=vmem, size = 0x2000, scoped, tag = 'input window, operand 0']
    #allocation5 [shape = 'u8[262144]{0}', space=vmem, size = 0x40000, scoped, tag = 'input window, operand 2']
    #allocation6 [shape = 's32[2]{0}', space=sflag, size = 0x8, scoped, tag = 'scoped memory for tpu_custom_call.1']
    #allocation7 [shape = 's32[2]{0}', space=sflag, size = 0x8, scoped, tag = 'scoped memory for tpu_custom_call.1']
    #allocation8 [shape = 'u8[524288]{0}', space=vmem, size = 0x80000, scoped, tag = 'input window, operand 4, single buffered']
    #allocation9 [shape = 's32[1]{0}', space=sflag, size = 0x4, scoped, tag = 'scoped memory for tpu_custom_call.1']
    #allocation10 [shape = 'u8[262144]{0}', space=vmem, size = 0x40000, scoped, tag = 'input window, operand 6, single buffered']
    #allocation11 [shape = 'u8[16384]{0}', space=vmem, size = 0x4000, scoped, tag = 'output window, operand 0']
    %26 = vsyncpa [#allocation6], 0
    %s27 = scalar_lea.sflag [#allocation6], 1
    %28 = vsyncpa %s27, 0
    %29 = vsyncpa [#allocation9], 0
    %30 = vsyncpa [#allocation7], 0
    %s31 = scalar_lea.sflag [#allocation7], 1
    %32 = vsyncpa %s31, 0
    loop: start=0, step=1, limit=10
    $region2: #{tpu_custom_call.1} parent=1 // loop_pre_header
      _
    $region3: #{tpu_custom_call.1} parent=1 // loop_header
      %s34 = sphi 0, %s38
      %p35 = scmp.ge.s32.totalorder %s34, 10
      %s41 = sphi 0, %s53
      %s42 = sphi 0, %s49
      %s43 = sphi 0, %s41
      %s44 = sphi 0, %s42
      %s45 = sphi 0, %s43
      %s46 = sphi 0, %s44
      %s58 = sphi 0, %s60
      %s61 = sphi 0, %s58
      %s62 = sphi 0, %s61
      %s78 = sphi 0, %s62
      %s84 = sphi 0, %s86
      %s87 = sphi 0, %s84
      %s88 = sphi 0, %s87
      %s104 = sphi 0, %s88
      %s110 = sphi 0, %s112
      %s113 = sphi 0, %s110
      %s114 = sphi 0, %s113
      %s130 = sphi 0, %s114
      %s134 = sphi 0, %s134
      %s136 = sphi 0, %s134
      %s137 = sphi 0, %s136
      %s151 = sphi 0, %s137
      %s155 = sphi 0, %s155
      %s157 = sphi 0, %s155
      %s158 = sphi 0, %s157
      %s172 = sphi 0, %s158
      %s176 = sphi 0, %s176
      %s178 = sphi 0, %s176
      %s179 = sphi 0, %s178
      %s193 = sphi 0, %s179
      %s197 = sphi 0, %s197
      %s199 = sphi 0, %s197
      %s200 = sphi 0, %s199
      %s214 = sphi 0, %s200
      %s218 = sphi 0, %s218
      %s220 = sphi 0, %s218
      %s221 = sphi 0, %s220
      %s235 = sphi 0, %s221
      %s239 = sphi 0, %s239
      %s241 = sphi 0, %s239
      %s242 = sphi 0, %s241
      %s256 = sphi 0, %s242
      %s260 = sphi 0, %s260
      %s262 = sphi 0, %s260
      %s263 = sphi 0, %s262
      %s277 = sphi 0, %s263
      %s281 = sphi 0, %s281
      %s283 = sphi 0, %s281
      %s284 = sphi 0, %s283
      %s298 = sphi 0, %s284
      %s302 = sphi 0, %s302
      %s304 = sphi 0, %s302
      %s305 = sphi 0, %s304
      %s319 = sphi 0, %s305
      %s323 = sphi 0, %s323
      %s325 = sphi 0, %s323
      %s326 = sphi 0, %s325
      %s340 = sphi 0, %s326
      %s344 = sphi 0, %s344
      %s346 = sphi 0, %s344
      %s347 = sphi 0, %s346
      %s361 = sphi 0, %s347
      %s365 = sphi 0, %s365
      %s367 = sphi 0, %s365
      %s368 = sphi 0, %s367
      %s382 = sphi 0, %s368
      %s386 = sphi 0, %s386
      %s388 = sphi 0, %s386
      %s389 = sphi 0, %s388
      %s403 = sphi 0, %s389
      %s407 = sphi 0, %s407
      %s409 = sphi 0, %s407
      %s410 = sphi 0, %s409
      %s424 = sphi 0, %s410
      %s428 = sphi 0, %s428
      %s430 = sphi 0, %s428
      %s431 = sphi 0, %s430
      %s445 = sphi 0, %s431
      %s449 = sphi 0, %s449
      %s451 = sphi 0, %s449
      %s452 = sphi 0, %s451
      %s466 = sphi 0, %s452
      %s472 = sphi 0, %s474
      %s475 = sphi 0, %s472
      %s476 = sphi 0, %s475
      %s492 = sphi 0, %s476
    $region4: #{tpu_custom_call.1} parent=1 // loop_header_branch
      %37 = sbr.rel (%p35) target = $region8
    $region5: #{tpu_custom_call.1} parent=1 // loop_body
      %s39 = ssub.s32 %s34, 1
      %s40 = ssub.s32 %s34, 2
      %s47 = sadd.s32 1, %s42
      %p48 = scmp.ge.s32.totalorder %s47, 4
      %s49 = scalar_select %p48, 0, %s47
      %s50 = sadd.s32 1, %s41
      %s51 = scalar_select %p48, %s50, %s41
      %p52 = scmp.ge.s32.totalorder %s51, 2
      %s53 = scalar_select %p52, 0, %s51
      %s54 = ssub.s32 %s41, %s53
      %s55 = ssub.s32 %s42, %s49
      %s56 = sor.u32 %s54, %s55
      %p57 = scmp.eq.s32.totalorder %s56, 0
      %s59 = sadd.s32 %s58, 1
      %s60 = scalar_select %p57, %s58, %s59
      %p63 = pneg %p57
      %p64 = scmp.eq.s32.totalorder %s34, 7
      %p65 = por %p63, %p64
      %p66 = scmp.ne.s32.totalorder %s58, %s61
      %p67 = scmp.eq.s32.totalorder %s34, 0
      %p68 = por %p66, %p67
      %p69 = scmp.ne.s32.totalorder %s58, %s61
      %p70 = scmp.eq.s32.totalorder %s39, 7
      %p71 = por %p69, %p70
      %p72 = scmp.ne.s32.totalorder %s61, %s62
      %p73 = scmp.eq.s32.totalorder %s39, 0
      %p74 = por %p72, %p73
      %p75 = scmp.ne.s32.totalorder %s61, %s62
      %p76 = scmp.eq.s32.totalorder %s40, 7
      %p77 = por %p75, %p76
      %p79 = scmp.ne.s32.totalorder %s62, %s78
      %p80 = scmp.eq.s32.totalorder %s40, 0
      %p81 = por %p79, %p80
      %s82 = ssub.s32 %s41, %s53
      %p83 = scmp.eq.s32.totalorder %s82, 0
      %s85 = sadd.s32 %s84, 1
      %s86 = scalar_select %p83, %s84, %s85
      %p89 = pneg %p83
      %p90 = scmp.eq.s32.totalorder %s34, 7
      %p91 = por %p89, %p90
      %p92 = scmp.ne.s32.totalorder %s84, %s87
      %p93 = scmp.eq.s32.totalorder %s34, 0
      %p94 = por %p92, %p93
      %p95 = scmp.ne.s32.totalorder %s84, %s87
      %p96 = scmp.eq.s32.totalorder %s39, 7
      %p97 = por %p95, %p96
      %p98 = scmp.ne.s32.totalorder %s87, %s88
      %p99 = scmp.eq.s32.totalorder %s39, 0
      %p100 = por %p98, %p99
      %p101 = scmp.ne.s32.totalorder %s87, %s88
      %p102 = scmp.eq.s32.totalorder %s40, 7
      %p103 = por %p101, %p102
      %p105 = scmp.ne.s32.totalorder %s88, %s104
      %p106 = scmp.eq.s32.totalorder %s40, 0
      %p107 = por %p105, %p106
      %s108 = ssub.s32 %s42, %s49
      %p109 = scmp.eq.s32.totalorder %s108, 0
      %s111 = sadd.s32 %s110, 1
      %s112 = scalar_select %p109, %s110, %s111
      %p115 = pneg %p109
      %p116 = scmp.eq.s32.totalorder %s34, 7
      %p117 = por %p115, %p116
      %p118 = scmp.ne.s32.totalorder %s110, %s113
      %p119 = scmp.eq.s32.totalorder %s34, 0
      %p120 = por %p118, %p119
      %p121 = scmp.ne.s32.totalorder %s110, %s113
      %p122 = scmp.eq.s32.totalorder %s39, 7
      %p123 = por %p121, %p122
      %p124 = scmp.ne.s32.totalorder %s113, %s114
      %p125 = scmp.eq.s32.totalorder %s39, 0
      %p126 = por %p124, %p125
      %p127 = scmp.ne.s32.totalorder %s113, %s114
      %p128 = scmp.eq.s32.totalorder %s40, 7
      %p129 = por %p127, %p128
      %p131 = scmp.ne.s32.totalorder %s114, %s130
      %p132 = scmp.eq.s32.totalorder %s40, 0
      %p133 = por %p131, %p132
      %s135 = sadd.s32 %s134, 1
      %p138 = scmp.eq.s32.totalorder %s34, 7
      %p139 = scmp.ne.s32.totalorder %s134, %s136
      %p140 = scmp.eq.s32.totalorder %s34, 0
      %p141 = por %p139, %p140
      %p142 = scmp.ne.s32.totalorder %s134, %s136
      %p143 = scmp.eq.s32.totalorder %s39, 7
      %p144 = por %p142, %p143
      %p145 = scmp.ne.s32.totalorder %s136, %s137
      %p146 = scmp.eq.s32.totalorder %s39, 0
      %p147 = por %p145, %p146
      %p148 = scmp.ne.s32.totalorder %s136, %s137
      %p149 = scmp.eq.s32.totalorder %s40, 7
      %p150 = por %p148, %p149
      %p152 = scmp.ne.s32.totalorder %s137, %s151
      %p153 = scmp.eq.s32.totalorder %s40, 0
      %p154 = por %p152, %p153
      %s156 = sadd.s32 %s155, 1
      %p159 = scmp.eq.s32.totalorder %s34, 7
      %p160 = scmp.ne.s32.totalorder %s155, %s157
      %p161 = scmp.eq.s32.totalorder %s34, 0
      %p162 = por %p160, %p161
      %p163 = scmp.ne.s32.totalorder %s155, %s157
      %p164 = scmp.eq.s32.totalorder %s39, 7
      %p165 = por %p163, %p164
      %p166 = scmp.ne.s32.totalorder %s157, %s158
      %p167 = scmp.eq.s32.totalorder %s39, 0
      %p168 = por %p166, %p167
      %p169 = scmp.ne.s32.totalorder %s157, %s158
      %p170 = scmp.eq.s32.totalorder %s40, 7
      %p171 = por %p169, %p170
      %p173 = scmp.ne.s32.totalorder %s158, %s172
      %p174 = scmp.eq.s32.totalorder %s40, 0
      %p175 = por %p173, %p174
      %s177 = sadd.s32 %s176, 1
      %p180 = scmp.eq.s32.totalorder %s34, 7
      %p181 = scmp.ne.s32.totalorder %s176, %s178
      %p182 = scmp.eq.s32.totalorder %s34, 0
      %p183 = por %p181, %p182
      %p184 = scmp.ne.s32.totalorder %s176, %s178
      %p185 = scmp.eq.s32.totalorder %s39, 7
      %p186 = por %p184, %p185
      %p187 = scmp.ne.s32.totalorder %s178, %s179
      %p188 = scmp.eq.s32.totalorder %s39, 0
      %p189 = por %p187, %p188
      %p190 = scmp.ne.s32.totalorder %s178, %s179
      %p191 = scmp.eq.s32.totalorder %s40, 7
      %p192 = por %p190, %p191
      %p194 = scmp.ne.s32.totalorder %s179, %s193
      %p195 = scmp.eq.s32.totalorder %s40, 0
      %p196 = por %p194, %p195
      %s198 = sadd.s32 %s197, 1
      %p201 = scmp.eq.s32.totalorder %s34, 7
      %p202 = scmp.ne.s32.totalorder %s197, %s199
      %p203 = scmp.eq.s32.totalorder %s34, 0
      %p204 = por %p202, %p203
      %p205 = scmp.ne.s32.totalorder %s197, %s199
      %p206 = scmp.eq.s32.totalorder %s39, 7
      %p207 = por %p205, %p206
      %p208 = scmp.ne.s32.totalorder %s199, %s200
      %p209 = scmp.eq.s32.totalorder %s39, 0
      %p210 = por %p208, %p209
      %p211 = scmp.ne.s32.totalorder %s199, %s200
      %p212 = scmp.eq.s32.totalorder %s40, 7
      %p213 = por %p211, %p212
      %p215 = scmp.ne.s32.totalorder %s200, %s214
      %p216 = scmp.eq.s32.totalorder %s40, 0
      %p217 = por %p215, %p216
      %s219 = sadd.s32 %s218, 1
      %p222 = scmp.eq.s32.totalorder %s34, 7
      %p223 = scmp.ne.s32.totalorder %s218, %s220
      %p224 = scmp.eq.s32.totalorder %s34, 0
      %p225 = por %p223, %p224
      %p226 = scmp.ne.s32.totalorder %s218, %s220
      %p227 = scmp.eq.s32.totalorder %s39, 7
      %p228 = por %p226, %p227
      %p229 = scmp.ne.s32.totalorder %s220, %s221
      %p230 = scmp.eq.s32.totalorder %s39, 0
      %p231 = por %p229, %p230
      %p232 = scmp.ne.s32.totalorder %s220, %s221
      %p233 = scmp.eq.s32.totalorder %s40, 7
      %p234 = por %p232, %p233
      %p236 = scmp.ne.s32.totalorder %s221, %s235
      %p237 = scmp.eq.s32.totalorder %s40, 0
      %p238 = por %p236, %p237
      %s240 = sadd.s32 %s239, 1
      %p243 = scmp.eq.s32.totalorder %s34, 7
      %p244 = scmp.ne.s32.totalorder %s239, %s241
      %p245 = scmp.eq.s32.totalorder %s34, 0
      %p246 = por %p244, %p245
      %p247 = scmp.ne.s32.totalorder %s239, %s241
      %p248 = scmp.eq.s32.totalorder %s39, 7
      %p249 = por %p247, %p248
      %p250 = scmp.ne.s32.totalorder %s241, %s242
      %p251 = scmp.eq.s32.totalorder %s39, 0
      %p252 = por %p250, %p251
      %p253 = scmp.ne.s32.totalorder %s241, %s242
      %p254 = scmp.eq.s32.totalorder %s40, 7
      %p255 = por %p253, %p254
      %p257 = scmp.ne.s32.totalorder %s242, %s256
      %p258 = scmp.eq.s32.totalorder %s40, 0
      %p259 = por %p257, %p258
      %s261 = sadd.s32 %s260, 1
      %p264 = scmp.eq.s32.totalorder %s34, 7
      %p265 = scmp.ne.s32.totalorder %s260, %s262
      %p266 = scmp.eq.s32.totalorder %s34, 0
      %p267 = por %p265, %p266
      %p268 = scmp.ne.s32.totalorder %s260, %s262
      %p269 = scmp.eq.s32.totalorder %s39, 7
      %p270 = por %p268, %p269
      %p271 = scmp.ne.s32.totalorder %s262, %s263
      %p272 = scmp.eq.s32.totalorder %s39, 0
      %p273 = por %p271, %p272
      %p274 = scmp.ne.s32.totalorder %s262, %s263
      %p275 = scmp.eq.s32.totalorder %s40, 7
      %p276 = por %p274, %p275
      %p278 = scmp.ne.s32.totalorder %s263, %s277
      %p279 = scmp.eq.s32.totalorder %s40, 0
      %p280 = por %p278, %p279
      %s282 = sadd.s32 %s281, 1
      %p285 = scmp.eq.s32.totalorder %s34, 7
      %p286 = scmp.ne.s32.totalorder %s281, %s283
      %p287 = scmp.eq.s32.totalorder %s34, 0
      %p288 = por %p286, %p287
      %p289 = scmp.ne.s32.totalorder %s281, %s283
      %p290 = scmp.eq.s32.totalorder %s39, 7
      %p291 = por %p289, %p290
      %p292 = scmp.ne.s32.totalorder %s283, %s284
      %p293 = scmp.eq.s32.totalorder %s39, 0
      %p294 = por %p292, %p293
      %p295 = scmp.ne.s32.totalorder %s283, %s284
      %p296 = scmp.eq.s32.totalorder %s40, 7
      %p297 = por %p295, %p296
      %p299 = scmp.ne.s32.totalorder %s284, %s298
      %p300 = scmp.eq.s32.totalorder %s40, 0
      %p301 = por %p299, %p300
      %s303 = sadd.s32 %s302, 1
      %p306 = scmp.eq.s32.totalorder %s34, 7
      %p307 = scmp.ne.s32.totalorder %s302, %s304
      %p308 = scmp.eq.s32.totalorder %s34, 0
      %p309 = por %p307, %p308
      %p310 = scmp.ne.s32.totalorder %s302, %s304
      %p311 = scmp.eq.s32.totalorder %s39, 7
      %p312 = por %p310, %p311
      %p313 = scmp.ne.s32.totalorder %s304, %s305
      %p314 = scmp.eq.s32.totalorder %s39, 0
      %p315 = por %p313, %p314
      %p316 = scmp.ne.s32.totalorder %s304, %s305
      %p317 = scmp.eq.s32.totalorder %s40, 7
      %p318 = por %p316, %p317
      %p320 = scmp.ne.s32.totalorder %s305, %s319
      %p321 = scmp.eq.s32.totalorder %s40, 0
      %p322 = por %p320, %p321
      %s324 = sadd.s32 %s323, 1
      %p327 = scmp.eq.s32.totalorder %s34, 7
      %p328 = scmp.ne.s32.totalorder %s323, %s325
      %p329 = scmp.eq.s32.totalorder %s34, 0
      %p330 = por %p328, %p329
      %p331 = scmp.ne.s32.totalorder %s323, %s325
      %p332 = scmp.eq.s32.totalorder %s39, 7
      %p333 = por %p331, %p332
      %p334 = scmp.ne.s32.totalorder %s325, %s326
      %p335 = scmp.eq.s32.totalorder %s39, 0
      %p336 = por %p334, %p335
      %p337 = scmp.ne.s32.totalorder %s325, %s326
      %p338 = scmp.eq.s32.totalorder %s40, 7
      %p339 = por %p337, %p338
      %p341 = scmp.ne.s32.totalorder %s326, %s340
      %p342 = scmp.eq.s32.totalorder %s40, 0
      %p343 = por %p341, %p342
      %s345 = sadd.s32 %s344, 1
      %p348 = scmp.eq.s32.totalorder %s34, 7
      %p349 = scmp.ne.s32.totalorder %s344, %s346
      %p350 = scmp.eq.s32.totalorder %s34, 0
      %p351 = por %p349, %p350
      %p352 = scmp.ne.s32.totalorder %s344, %s346
      %p353 = scmp.eq.s32.totalorder %s39, 7
      %p354 = por %p352, %p353
      %p355 = scmp.ne.s32.totalorder %s346, %s347
      %p356 = scmp.eq.s32.totalorder %s39, 0
      %p357 = por %p355, %p356
      %p358 = scmp.ne.s32.totalorder %s346, %s347
      %p359 = scmp.eq.s32.totalorder %s40, 7
      %p360 = por %p358, %p359
      %p362 = scmp.ne.s32.totalorder %s347, %s361
      %p363 = scmp.eq.s32.totalorder %s40, 0
      %p364 = por %p362, %p363
      %s366 = sadd.s32 %s365, 1
      %p369 = scmp.eq.s32.totalorder %s34, 7
      %p370 = scmp.ne.s32.totalorder %s365, %s367
      %p371 = scmp.eq.s32.totalorder %s34, 0
      %p372 = por %p370, %p371
      %p373 = scmp.ne.s32.totalorder %s365, %s367
      %p374 = scmp.eq.s32.totalorder %s39, 7
      %p375 = por %p373, %p374
      %p376 = scmp.ne.s32.totalorder %s367, %s368
      %p377 = scmp.eq.s32.totalorder %s39, 0
      %p378 = por %p376, %p377
      %p379 = scmp.ne.s32.totalorder %s367, %s368
      %p380 = scmp.eq.s32.totalorder %s40, 7
      %p381 = por %p379, %p380
      %p383 = scmp.ne.s32.totalorder %s368, %s382
      %p384 = scmp.eq.s32.totalorder %s40, 0
      %p385 = por %p383, %p384
      %s387 = sadd.s32 %s386, 1
      %p390 = scmp.eq.s32.totalorder %s34, 7
      %p391 = scmp.ne.s32.totalorder %s386, %s388
      %p392 = scmp.eq.s32.totalorder %s34, 0
      %p393 = por %p391, %p392
      %p394 = scmp.ne.s32.totalorder %s386, %s388
      %p395 = scmp.eq.s32.totalorder %s39, 7
      %p396 = por %p394, %p395
      %p397 = scmp.ne.s32.totalorder %s388, %s389
      %p398 = scmp.eq.s32.totalorder %s39, 0
      %p399 = por %p397, %p398
      %p400 = scmp.ne.s32.totalorder %s388, %s389
      %p401 = scmp.eq.s32.totalorder %s40, 7
      %p402 = por %p400, %p401
      %p404 = scmp.ne.s32.totalorder %s389, %s403
      %p405 = scmp.eq.s32.totalorder %s40, 0
      %p406 = por %p404, %p405
      %s408 = sadd.s32 %s407, 1
      %p411 = scmp.eq.s32.totalorder %s34, 7
      %p412 = scmp.ne.s32.totalorder %s407, %s409
      %p413 = scmp.eq.s32.totalorder %s34, 0
      %p414 = por %p412, %p413
      %p415 = scmp.ne.s32.totalorder %s407, %s409
      %p416 = scmp.eq.s32.totalorder %s39, 7
      %p417 = por %p415, %p416
      %p418 = scmp.ne.s32.totalorder %s409, %s410
      %p419 = scmp.eq.s32.totalorder %s39, 0
      %p420 = por %p418, %p419
      %p421 = scmp.ne.s32.totalorder %s409, %s410
      %p422 = scmp.eq.s32.totalorder %s40, 7
      %p423 = por %p421, %p422
      %p425 = scmp.ne.s32.totalorder %s410, %s424
      %p426 = scmp.eq.s32.totalorder %s40, 0
      %p427 = por %p425, %p426
      %s429 = sadd.s32 %s428, 1
      %p432 = scmp.eq.s32.totalorder %s34, 7
      %p433 = scmp.ne.s32.totalorder %s428, %s430
      %p434 = scmp.eq.s32.totalorder %s34, 0
      %p435 = por %p433, %p434
      %p436 = scmp.ne.s32.totalorder %s428, %s430
      %p437 = scmp.eq.s32.totalorder %s39, 7
      %p438 = por %p436, %p437
      %p439 = scmp.ne.s32.totalorder %s430, %s431
      %p440 = scmp.eq.s32.totalorder %s39, 0
      %p441 = por %p439, %p440
      %p442 = scmp.ne.s32.totalorder %s430, %s431
      %p443 = scmp.eq.s32.totalorder %s40, 7
      %p444 = por %p442, %p443
      %p446 = scmp.ne.s32.totalorder %s431, %s445
      %p447 = scmp.eq.s32.totalorder %s40, 0
      %p448 = por %p446, %p447
      %s450 = sadd.s32 %s449, 1
      %p453 = scmp.eq.s32.totalorder %s34, 7
      %p454 = scmp.ne.s32.totalorder %s449, %s451
      %p455 = scmp.eq.s32.totalorder %s34, 0
      %p456 = por %p454, %p455
      %p457 = scmp.ne.s32.totalorder %s449, %s451
      %p458 = scmp.eq.s32.totalorder %s39, 7
      %p459 = por %p457, %p458
      %p460 = scmp.ne.s32.totalorder %s451, %s452
      %p461 = scmp.eq.s32.totalorder %s39, 0
      %p462 = por %p460, %p461
      %p463 = scmp.ne.s32.totalorder %s451, %s452
      %p464 = scmp.eq.s32.totalorder %s40, 7
      %p465 = por %p463, %p464
      %p467 = scmp.ne.s32.totalorder %s452, %s466
      %p468 = scmp.eq.s32.totalorder %s40, 0
      %p469 = por %p467, %p468
      %s470 = ssub.s32 %s41, %s53
      %p471 = scmp.eq.s32.totalorder %s470, 0
      %s473 = sadd.s32 %s472, 1
      %s474 = scalar_select %p471, %s472, %s473
      %p477 = pneg %p471
      %p478 = scmp.eq.s32.totalorder %s34, 7
      %p479 = por %p477, %p478
      %p480 = scmp.ne.s32.totalorder %s472, %s475
      %p481 = scmp.eq.s32.totalorder %s34, 0
      %p482 = por %p480, %p481
      %p483 = scmp.ne.s32.totalorder %s472, %s475
      %p484 = scmp.eq.s32.totalorder %s39, 7
      %p485 = por %p483, %p484
      %p486 = scmp.ne.s32.totalorder %s475, %s476
      %p487 = scmp.eq.s32.totalorder %s39, 0
      %p488 = por %p486, %p487
      %p489 = scmp.ne.s32.totalorder %s475, %s476
      %p490 = scmp.eq.s32.totalorder %s40, 7
      %p491 = por %p489, %p490
      %p493 = scmp.ne.s32.totalorder %s476, %s492
      %p494 = scmp.eq.s32.totalorder %s40, 0
      %p495 = por %p493, %p494
      %p496 = scmp.le.s32.totalorder 1, %s34
      %p497 = scmp.lt.s32.totalorder %s34, 9
      %p498 = pnand %p496, %p497
      %p499 = pneg %p498
      // Predicated region
      $region9: #{tpu_custom_call.1} parent=5 // pred_check
        _
      $region10: #{tpu_custom_call.1} parent=5 // pred_check_branch
        %501 = sbr.rel (%p498) target = $region12
      $region11: #{tpu_custom_call.1} parent=5 // pred_region
        %s502 = ssub.s32 %s34, 1
        // Predicated region
        $region13: #{tpu_custom_call.1} parent=11 // pred_check
          %p503 = pneg %p147
        $region14: #{tpu_custom_call.1} parent=11 // pred_check_branch
          %505 = sbr.rel (%p503) target = $region16
        $region15: #{tpu_custom_call.1} parent=11 // pred_region
          _
        $region16: #{tpu_custom_call.1} parent=11 // pred_fallthru
          _
        // Predicated region
        $region17: #{tpu_custom_call.1} parent=11 // pred_check
          %p506 = pneg %p168
        $region18: #{tpu_custom_call.1} parent=11 // pred_check_branch
          %508 = sbr.rel (%p506) target = $region20
        $region19: #{tpu_custom_call.1} parent=11 // pred_region
          %s510 = ssub.s32 16384, 16384
          %511 = vsyncadd [#allocation9], %s510
          %s512 = sshll.u32 [#allocation8], 4
          %s513 = int_to_ptr.vmem [resolvable:$true] %s512
          %518 = dma.hbm_to_vmem [thread:$0]  %s4, 16384, %s513, [#allocation9], 256, 256, 16
        $region20: #{tpu_custom_call.1} parent=11 // pred_fallthru
          _
        // Predicated region
        $region21: #{tpu_custom_call.1} parent=11 // pred_check
          %p519 = pneg %p189
        $region22: #{tpu_custom_call.1} parent=11 // pred_check_branch
          %521 = sbr.rel (%p519) target = $region24
        $region23: #{tpu_custom_call.1} parent=11 // pred_region
          _
        $region24: #{tpu_custom_call.1} parent=11 // pred_fallthru
          _
        // Predicated region
        $region25: #{tpu_custom_call.1} parent=11 // pred_check
          %p522 = pneg %p210
        $region26: #{tpu_custom_call.1} parent=11 // pred_check_branch
          %524 = sbr.rel (%p522) target = $region28
        $region27: #{tpu_custom_call.1} parent=11 // pred_region
          %s526 = ssub.s32 8192, 8192
          %527 = vsyncadd [#allocation9], %s526
          %s528 = sshll.u32 [#allocation10], 4
          %s529 = int_to_ptr.vmem [resolvable:$true] %s528
          %534 = dma.hbm_to_vmem [thread:$0]  %s6, 8192, %s529, [#allocation9], 128, 128, 8
        $region28: #{tpu_custom_call.1} parent=11 // pred_fallthru
          _
        // Predicated region
        $region29: #{tpu_custom_call.1} parent=11 // pred_check
          %p535 = pneg %p231
        $region30: #{tpu_custom_call.1} parent=11 // pred_check_branch
          %537 = sbr.rel (%p535) target = $region32
        $region31: #{tpu_custom_call.1} parent=11 // pred_region
          _
        $region32: #{tpu_custom_call.1} parent=11 // pred_fallthru
          _
        // Predicated region
        $region33: #{tpu_custom_call.1} parent=11 // pred_check
          %p538 = pneg %p252
        $region34: #{tpu_custom_call.1} parent=11 // pred_check_branch
          %540 = sbr.rel (%p538) target = $region36
        $region35: #{tpu_custom_call.1} parent=11 // pred_region
          _
        $region36: #{tpu_custom_call.1} parent=11 // pred_fallthru
          _
        // Predicated region
        $region37: #{tpu_custom_call.1} parent=11 // pred_check
          %p541 = pneg %p273
        $region38: #{tpu_custom_call.1} parent=11 // pred_check_branch
          %543 = sbr.rel (%p541) target = $region40
        $region39: #{tpu_custom_call.1} parent=11 // pred_region
          _
        $region40: #{tpu_custom_call.1} parent=11 // pred_fallthru
          _
        // Predicated region
        $region41: #{tpu_custom_call.1} parent=11 // pred_check
          %p544 = pneg %p294
        $region42: #{tpu_custom_call.1} parent=11 // pred_check_branch
          %546 = sbr.rel (%p544) target = $region44
        $region43: #{tpu_custom_call.1} parent=11 // pred_region
          _
        $region44: #{tpu_custom_call.1} parent=11 // pred_fallthru
          _
        // Predicated region
        $region45: #{tpu_custom_call.1} parent=11 // pred_check
          %p547 = pneg %p315
        $region46: #{tpu_custom_call.1} parent=11 // pred_check_branch
          %549 = sbr.rel (%p547) target = $region48
        $region47: #{tpu_custom_call.1} parent=11 // pred_region
          _
        $region48: #{tpu_custom_call.1} parent=11 // pred_fallthru
          _
        // Predicated region
        $region49: #{tpu_custom_call.1} parent=11 // pred_check
          %p550 = pneg %p336
        $region50: #{tpu_custom_call.1} parent=11 // pred_check_branch
          %552 = sbr.rel (%p550) target = $region52
        $region51: #{tpu_custom_call.1} parent=11 // pred_region
          _
        $region52: #{tpu_custom_call.1} parent=11 // pred_fallthru
          _
        // Predicated region
        $region53: #{tpu_custom_call.1} parent=11 // pred_check
          %p553 = pneg %p357
        $region54: #{tpu_custom_call.1} parent=11 // pred_check_branch
          %555 = sbr.rel (%p553) target = $region56
        $region55: #{tpu_custom_call.1} parent=11 // pred_region
          _
        $region56: #{tpu_custom_call.1} parent=11 // pred_fallthru
          _
        // Predicated region
        $region57: #{tpu_custom_call.1} parent=11 // pred_check
          %p556 = pneg %p378
        $region58: #{tpu_custom_call.1} parent=11 // pred_check_branch
          %558 = sbr.rel (%p556) target = $region60
        $region59: #{tpu_custom_call.1} parent=11 // pred_region
          _
        $region60: #{tpu_custom_call.1} parent=11 // pred_fallthru
          _
        // Predicated region
        $region61: #{tpu_custom_call.1} parent=11 // pred_check
          %p559 = pneg %p399
        $region62: #{tpu_custom_call.1} parent=11 // pred_check_branch
          %561 = sbr.rel (%p559) target = $region64
        $region63: #{tpu_custom_call.1} parent=11 // pred_region
          _
        $region64: #{tpu_custom_call.1} parent=11 // pred_fallthru
          _
        // Predicated region
        $region65: #{tpu_custom_call.1} parent=11 // pred_check
          %p562 = pneg %p420
        $region66: #{tpu_custom_call.1} parent=11 // pred_check_branch
          %564 = sbr.rel (%p562) target = $region68
        $region67: #{tpu_custom_call.1} parent=11 // pred_region
          _
        $region68: #{tpu_custom_call.1} parent=11 // pred_fallthru
          _
        // Predicated region
        $region69: #{tpu_custom_call.1} parent=11 // pred_check
          %p565 = pneg %p441
        $region70: #{tpu_custom_call.1} parent=11 // pred_check_branch
          %567 = sbr.rel (%p565) target = $region72
        $region71: #{tpu_custom_call.1} parent=11 // pred_region
          _
        $region72: #{tpu_custom_call.1} parent=11 // pred_fallthru
          _
        // Predicated region
        $region73: #{tpu_custom_call.1} parent=11 // pred_check
          %p568 = pneg %p462
        $region74: #{tpu_custom_call.1} parent=11 // pred_check_branch
          %570 = sbr.rel (%p568) target = $region76
        $region75: #{tpu_custom_call.1} parent=11 // pred_region
          _
        $region76: #{tpu_custom_call.1} parent=11 // pred_fallthru
          _
      $region12: #{tpu_custom_call.1} parent=5 // pred_fallthru
        _
      %p571 = scmp.lt.s32.totalorder %s34, 8
      // Predicated region
      $region77: #{tpu_custom_call.1} parent=5 // pred_check
        %p572 = pneg %p571
      $region78: #{tpu_custom_call.1} parent=5 // pred_check_branch
        %574 = sbr.rel (%p572) target = $region80
      $region79: #{tpu_custom_call.1} parent=5 // pred_region
        // Predicated region
        $region81: #{tpu_custom_call.1} parent=79 // pred_check
          %p575 = pneg %p68
        $region82: #{tpu_custom_call.1} parent=79 // pred_check_branch
          %577 = sbr.rel (%p575) target = $region84
        $region83: #{tpu_custom_call.1} parent=79 // pred_region
          %s578 = sand.u32 %s58, 1
          %s579 = sand.u32 %s58, 1
          %s580 = smul.addr %s579, 8
          %s581 = scalar_lea.vmem [#allocation4], %s580
          %s582 = smul.u32 2, %s41
          %s583 = smul.addr %s582, 4
          %s584 = sadd.s32 %s42, %s583
          %s585 = smul.addr %s584, 4
          %s586 = scalar_lea.vmem %s0, %s585
          // Predicated region
          $region85: #{tpu_custom_call.1} parent=83 // pred_check
            _
          $region86: #{tpu_custom_call.1} parent=83 // pred_check_branch
            %588 = sbr.rel (0) target = $region88
          $region87: #{tpu_custom_call.1} parent=83 // pred_region
            // Predicated region
            $region89: #{tpu_custom_call.1} parent=87 // pred_check
              _
            $region90: #{tpu_custom_call.1} parent=87 // pred_check_branch
              %590 = sbr.rel target = $region92
            $region91: #{tpu_custom_call.1} parent=87 // pred_region
              // Predicated region
              $region104: #{tpu_custom_call.1} parent=91 // pred_check
                _
              $region105: #{tpu_custom_call.1} parent=91 // pred_check_branch
                %607 = sbr.rel (0) target = $region107
              $region106: #{tpu_custom_call.1} parent=91 // pred_region
                loop: start=0, step=1, limit=1
                $region108: #{tpu_custom_call.1} parent=106 // loop_pre_header
                  _
                $region109: #{tpu_custom_call.1} parent=106 // loop_header
                  %s609 = sphi 0, %s613
                  %p610 = scmp.ge.s32.totalorder %s609, 1
                  %s614 = sphi %s586, %s586
                  %s615 = sphi %s581, %s581
                $region110: #{tpu_custom_call.1} parent=106 // loop_header_branch
                  %612 = sbr.rel (%p610) target = $region114
                $region111: #{tpu_custom_call.1} parent=106 // loop_body
                  _
                $region112: #{tpu_custom_call.1} parent=106 // loop_footer
                  %s613 = sadd.s32 1, %s609
                $region113: #{tpu_custom_call.1} parent=106 // loop_footer_branch
                  %608 = sbr.rel target = $region109
                $region114: #{tpu_custom_call.1} parent=106 // loop_exit
                  _
                loop: start=0, step=1, limit=1
                $region115: #{tpu_custom_call.1} parent=106 // loop_pre_header
                  _
                $region116: #{tpu_custom_call.1} parent=106 // loop_header
                  %s618 = sphi 0, %s622
                  %p619 = scmp.ge.s32.totalorder %s618, 1
                  %s623 = sphi %s586, %s586
                  %s624 = sphi %s581, %s581
                $region117: #{tpu_custom_call.1} parent=106 // loop_header_branch
                  %621 = sbr.rel (%p619) target = $region121
                $region118: #{tpu_custom_call.1} parent=106 // loop_body
                  %v625 = vld [vmem:[%s623] sm:$0xf]
                  %626 = vst [vmem:[%s624] sm:$0xf] %v625
                  %v627 = vld [vmem:[%s623 + $0x10] sm:$0xf]
                  %628 = vst [vmem:[%s624 + $0x4] sm:$0xf] %v627
                $region119: #{tpu_custom_call.1} parent=106 // loop_footer
                  %s622 = sadd.s32 1, %s618
                $region120: #{tpu_custom_call.1} parent=106 // loop_footer_branch
                  %617 = sbr.rel target = $region116
                $region121: #{tpu_custom_call.1} parent=106 // loop_exit
                  _
              $region107: #{tpu_custom_call.1} parent=91 // pred_fallthru
                _
            $region92: #{tpu_custom_call.1} parent=87 // pred_fallthru
              _
            // Predicated region
            $region93: #{tpu_custom_call.1} parent=87 // pred_check
              _
            $region94: #{tpu_custom_call.1} parent=87 // pred_check_branch
              %592 = sbr.rel (0) target = $region96
            $region95: #{tpu_custom_call.1} parent=87 // pred_region
              loop: start=0, step=1, limit=1
              $region97: #{tpu_custom_call.1} parent=95 // loop_pre_header
                _
              $region98: #{tpu_custom_call.1} parent=95 // loop_header
                %s595 = sphi 0, %s599
                %p596 = scmp.ge.s32.totalorder %s595, 1
                %s600 = sphi %s586, %s586
                %s601 = sphi %s581, %s581
              $region99: #{tpu_custom_call.1} parent=95 // loop_header_branch
                %598 = sbr.rel (%p596) target = $region103
              $region100: #{tpu_custom_call.1} parent=95 // loop_body
                %v602 = vld [vmem:[%s600] sm:$0xf]
                %603 = vst [vmem:[%s601] sm:$0xf] %v602
                %v604 = vld [vmem:[%s600 + $0x10] sm:$0xf]
                %605 = vst [vmem:[%s601 + $0x4] sm:$0xf] %v604
              $region101: #{tpu_custom_call.1} parent=95 // loop_footer
                %s599 = sadd.s32 1, %s595
              $region102: #{tpu_custom_call.1} parent=95 // loop_footer_branch
                %594 = sbr.rel target = $region98
              $region103: #{tpu_custom_call.1} parent=95 // loop_exit
                _
            $region96: #{tpu_custom_call.1} parent=87 // pred_fallthru
              _
          $region88: #{tpu_custom_call.1} parent=83 // pred_fallthru
            _
          %629 = vnop
        $region84: #{tpu_custom_call.1} parent=79 // pred_fallthru
          _
        // Predicated region
        $region122: #{tpu_custom_call.1} parent=79 // pred_check
          %p630 = pneg %p94
        $region123: #{tpu_custom_call.1} parent=79 // pred_check_branch
          %632 = sbr.rel (%p630) target = $region125
        $region124: #{tpu_custom_call.1} parent=79 // pred_region
          %s633 = smul.u32 2, %s41
          %p634 = scmp.lt.s32.totalorder %s633, 3
          %s635 = scalar_select %p634, %s633, 3
          %s636 = smul.addr %s635, 4
          %s637 = scalar_lea.vmem %s1, %s636
          %s638 = smul.u32 2, %s41
        $region125: #{tpu_custom_call.1} parent=79 // pred_fallthru
          _
        // Predicated region
        $region126: #{tpu_custom_call.1} parent=79 // pred_check
          %p639 = pneg %p120
        $region127: #{tpu_custom_call.1} parent=79 // pred_check_branch
          %641 = sbr.rel (%p639) target = $region129
        $region128: #{tpu_custom_call.1} parent=79 // pred_region
          %s642 = sand.u32 %s110, 1
          %s643 = scalar_lea.sflag [#allocation6], %s642
          %s644 = sand.u32 %s110, 1
          %s645 = smul.addr %s644, 256
          %s646 = scalar_lea.vmem [#allocation5], %s645
          %s647 = smul.u32 16, %s42
          %s649 = ssub.s32 4096, 4096
          %650 = vsyncadd %s643, %s649
          %s651 = smul.addr %s647, 4
          %s652 = smul.addr %s651, 64
          %s653 = scalar_lea.hbm %s2, %s652
          %s654 = sshll.u32 %s646, 4
          %s655 = int_to_ptr.vmem [resolvable:$true] %s654
          %660 = dma.hbm_to_vmem [thread:$0]  %s653, 4096, %s655, %s643, 256, 256, 16
        $region129: #{tpu_custom_call.1} parent=79 // pred_fallthru
          _
      $region80: #{tpu_custom_call.1} parent=5 // pred_fallthru
        _
      %p661 = scmp.le.s32.totalorder 1, %s34
      %p662 = scmp.lt.s32.totalorder %s34, 9
      %p663 = pnand %p661, %p662
      %p664 = pneg %p663
      // Predicated region
      $region130: #{tpu_custom_call.1} parent=5 // pred_check
        _
      $region131: #{tpu_custom_call.1} parent=5 // pred_check_branch
        %666 = sbr.rel (%p663) target = $region133
      $region132: #{tpu_custom_call.1} parent=5 // pred_region
        %s667 = ssub.s32 %s34, 1
        %s668 = sand.u32 %s61, 1
        %s669 = sand.u32 %s61, 1
        %s670 = smul.addr %s669, 8
        %s671 = scalar_lea.vmem [#allocation4], %s670
        // Predicated region
        $region134: #{tpu_custom_call.1} parent=132 // pred_check
          %p672 = pneg %p74
        $region135: #{tpu_custom_call.1} parent=132 // pred_check_branch
          %674 = sbr.rel (%p672) target = $region137
        $region136: #{tpu_custom_call.1} parent=132 // pred_region
          _
        $region137: #{tpu_custom_call.1} parent=132 // pred_fallthru
          _
        %s675 = sand.u32 %s113, 1
        %s676 = scalar_lea.sflag [#allocation6], %s675
        %s677 = sand.u32 %s113, 1
        %s678 = smul.addr %s677, 256
        %s679 = scalar_lea.vmem [#allocation5], %s678
        // Predicated region
        $region138: #{tpu_custom_call.1} parent=132 // pred_check
          %p680 = pneg %p126
        $region139: #{tpu_custom_call.1} parent=132 // pred_check_branch
          %682 = sbr.rel (%p680) target = $region141
        $region140: #{tpu_custom_call.1} parent=132 // pred_region
          %683 = dma.done %s676, 4096
        $region141: #{tpu_custom_call.1} parent=132 // pred_fallthru
          _
        // Predicated region
        $region142: #{tpu_custom_call.1} parent=132 // pred_check
          %p684 = pneg %p168
        $region143: #{tpu_custom_call.1} parent=132 // pred_check_branch
          %686 = sbr.rel (%p684) target = $region145
        $region144: #{tpu_custom_call.1} parent=132 // pred_region
          %687 = dma.done [#allocation9], 16384
        $region145: #{tpu_custom_call.1} parent=132 // pred_fallthru
          _
        // Predicated region
        $region146: #{tpu_custom_call.1} parent=132 // pred_check
          %p688 = pneg %p210
        $region147: #{tpu_custom_call.1} parent=132 // pred_check_branch
          %690 = sbr.rel (%p688) target = $region149
        $region148: #{tpu_custom_call.1} parent=132 // pred_region
          %691 = dma.done [#allocation9], 8192
        $region149: #{tpu_custom_call.1} parent=132 // pred_fallthru
          _
        %s692 = sand.u32 %s61, 1
        %s693 = sand.u32 %s61, 1
        %s694 = smul.addr %s693, 8
        %s695 = scalar_lea.vmem [#allocation4], %s694
        %p696 = pneg %p74
        %p697 = pneg %p71
        %s698 = smul.u32 2, %s43
        %p699 = scmp.lt.s32.totalorder %s698, 3
        %s700 = scalar_select %p699, %s698, 3
        %s701 = smul.addr %s700, 4
        %s702 = scalar_lea.vmem %s1, %s701
        %p703 = pneg %p100
        %p704 = pneg %p97
        %s705 = sand.u32 %s113, 1
        %s706 = scalar_lea.sflag [#allocation6], %s705
        %s707 = sand.u32 %s113, 1
        %s708 = smul.addr %s707, 256
        %s709 = scalar_lea.vmem [#allocation5], %s708
        %p710 = pneg %p126
        %p711 = pneg %p123
        %p712 = pneg %p147
        %p713 = pneg %p144
        %p714 = pneg %p168
        %p715 = pneg %p165
        %p716 = pneg %p189
        %p717 = pneg %p186
        %p718 = pneg %p210
        %p719 = pneg %p207
        %p720 = pneg %p231
        %p721 = pneg %p228
        %p722 = pneg %p252
        %p723 = pneg %p249
        %p724 = pneg %p273
        %p725 = pneg %p270
        %p726 = pneg %p294
        %p727 = pneg %p291
        %p728 = pneg %p315
        %p729 = pneg %p312
        %p730 = pneg %p336
        %p731 = pneg %p333
        %p732 = pneg %p357
        %p733 = pneg %p354
        %p734 = pneg %p378
        %p735 = pneg %p375
        %p736 = pneg %p399
        %p737 = pneg %p396
        %p738 = pneg %p420
        %p739 = pneg %p417
        %p740 = pneg %p441
        %p741 = pneg %p438
        %p742 = pneg %p462
        %p743 = pneg %p459
        %p744 = pneg %p488
        %p745 = pneg %p485
        %s746 = sand.u32 %s475, 1
        %s747 = scalar_lea.sflag [#allocation7], %s746
        %s748 = sand.u32 %s475, 1
        %s749 = smul.addr %s748, 16
        %s750 = scalar_lea.vmem [#allocation11], %s749
        %s751 = smul.u32 2, %s43
        %s752 = smul.u32 2, %s43
        %p753 = scmp.lt.s32.totalorder %s752, 3
        %s754 = scalar_select %p753, %s752, 3
        %s755 = smul.addr %s754, 4
        %s756 = scalar_lea.vmem %s1, %s755
        %s757 = smul.u32 2, %s43
        %s758 = smul.u32 16, %s44
        %s759 = smul.u32 2, %s43
        %p761 = scmp.eq.s32.totalorder %s44, 0
        // Predicated region
        $region150: #{tpu_custom_call.1} parent=132 // pred_check
          %p762 = pneg %p761
        $region151: #{tpu_custom_call.1} parent=132 // pred_check_branch
          %764 = sbr.rel (%p762) target = $region153
        $region152: #{tpu_custom_call.1} parent=132 // pred_region
          %765 = vst [vmem:[#allocation2] sm:$0xff] 0.0
          %766 = vst [vmem:[#allocation2 + $0x8] sm:$0xff] 0.0
          %767 = vst [vmem:[#allocation2 + $0x10] sm:$0xff] 0.0
          %768 = vst [vmem:[#allocation2 + $0x18] sm:$0xff] 0.0
          %769 = vst [vmem:[#allocation2 + $0x20] sm:$0xff] 0.0
          %770 = vst [vmem:[#allocation2 + $0x28] sm:$0xff] 0.0
          %771 = vst [vmem:[#allocation2 + $0x30] sm:$0xff] 0.0
          %772 = vst [vmem:[#allocation2 + $0x38] sm:$0xff] 0.0
        $region153: #{tpu_custom_call.1} parent=132 // pred_fallthru
          _
        %v773 = vld [vmem:[#allocation2] sm:$0xff]
        %v774 = vld [vmem:[#allocation2 + $0x8] sm:$0xff]
        %v775 = vld [vmem:[#allocation2 + $0x10] sm:$0xff]
        %v776 = vld [vmem:[#allocation2 + $0x18] sm:$0xff]
        %v777 = vld [vmem:[#allocation2 + $0x20] sm:$0xff]
        %v778 = vld [vmem:[#allocation2 + $0x28] sm:$0xff]
        %v779 = vld [vmem:[#allocation2 + $0x30] sm:$0xff]
        %v780 = vld [vmem:[#allocation2 + $0x38] sm:$0xff]
        %v781 = vld [vmem:[%s671] sm:$0xf]
        %v782 = vld [vmem:[%s671 + $0x4] sm:$0xf]
        %v783 = vld [vmem:[%s679] sm:$0xff]
        %v784 = vld [vmem:[%s679 + $0x8] sm:$0xff]
        %v785 = vld [vmem:[%s679 + $0x10] sm:$0xff]
        %v786 = vld [vmem:[%s679 + $0x18] sm:$0xff]
        %v787 = vld [vmem:[%s679 + $0x20] sm:$0xff]
        %v788 = vld [vmem:[%s679 + $0x28] sm:$0xff]
        %v789 = vld [vmem:[%s679 + $0x30] sm:$0xff]
        %v790 = vld [vmem:[%s679 + $0x38] sm:$0xff]
        %v791 = vld [vmem:[%s679 + $0x40] sm:$0xff]
        %v792 = vld [vmem:[%s679 + $0x48] sm:$0xff]
        %v793 = vld [vmem:[%s679 + $0x50] sm:$0xff]
        %v794 = vld [vmem:[%s679 + $0x58] sm:$0xff]
        %v795 = vld [vmem:[%s679 + $0x60] sm:$0xff]
        %v796 = vld [vmem:[%s679 + $0x68] sm:$0xff]
        %v797 = vld [vmem:[%s679 + $0x70] sm:$0xff]
        %v798 = vld [vmem:[%s679 + $0x78] sm:$0xff]
        %v799 = vld [vmem:[%s679 + $0x80] sm:$0xff]
        %v800 = vld [vmem:[%s679 + $0x88] sm:$0xff]
        %v801 = vld [vmem:[%s679 + $0x90] sm:$0xff]
        %v802 = vld [vmem:[%s679 + $0x98] sm:$0xff]
        %v803 = vld [vmem:[%s679 + $0xa0] sm:$0xff]
        %v804 = vld [vmem:[%s679 + $0xa8] sm:$0xff]
        %v805 = vld [vmem:[%s679 + $0xb0] sm:$0xff]
        %v806 = vld [vmem:[%s679 + $0xb8] sm:$0xff]
        %v807 = vld [vmem:[%s679 + $0xc0] sm:$0xff]
        %v808 = vld [vmem:[%s679 + $0xc8] sm:$0xff]
        %v809 = vld [vmem:[%s679 + $0xd0] sm:$0xff]
        %v810 = vld [vmem:[%s679 + $0xd8] sm:$0xff]
        %v811 = vld [vmem:[%s679 + $0xe0] sm:$0xff]
        %v812 = vld [vmem:[%s679 + $0xe8] sm:$0xff]
        %v813 = vld [vmem:[%s679 + $0xf0] sm:$0xff]
        %v814 = vld [vmem:[%s679 + $0xf8] sm:$0xff]
        %v817 = vunpack.c.l.b16 %v781
        %v818 = vunpack.c.l.b16 %v782
        %v819 = vpack.c.b16 %v818, %v817
        %v853 = vunpack.c.l.b16 %v783
        %v854 = vunpack.c.h.b16 %v783
        %v855 = vunpack.c.l.b16 %v784
        %v856 = vunpack.c.h.b16 %v784
        %v857 = vunpack.c.l.b16 %v785
        %v858 = vunpack.c.h.b16 %v785
        %v859 = vunpack.c.l.b16 %v786
        %v860 = vunpack.c.h.b16 %v786
        %v861 = vunpack.c.l.b16 %v787
        %v862 = vunpack.c.h.b16 %v787
        %v863 = vunpack.c.l.b16 %v788
        %v864 = vunpack.c.h.b16 %v788
        %v865 = vunpack.c.l.b16 %v789
        %v866 = vunpack.c.h.b16 %v789
        %v867 = vunpack.c.l.b16 %v790
        %v868 = vunpack.c.h.b16 %v790
        %v869 = vunpack.c.l.b16 %v791
        %v870 = vunpack.c.h.b16 %v791
        %v871 = vunpack.c.l.b16 %v792
        %v872 = vunpack.c.h.b16 %v792
        %v873 = vunpack.c.l.b16 %v793
        %v874 = vunpack.c.h.b16 %v793
        %v875 = vunpack.c.l.b16 %v794
        %v876 = vunpack.c.h.b16 %v794
        %v877 = vunpack.c.l.b16 %v795
        %v878 = vunpack.c.h.b16 %v795
        %v879 = vunpack.c.l.b16 %v796
        %v880 = vunpack.c.h.b16 %v796
        %v881 = vunpack.c.l.b16 %v797
        %v882 = vunpack.c.h.b16 %v797
        %v883 = vunpack.c.l.b16 %v798
        %v884 = vunpack.c.h.b16 %v798
        %v885 = vunpack.c.l.b16 %v799
        %v886 = vunpack.c.h.b16 %v799
        %v887 = vunpack.c.l.b16 %v800
        %v888 = vunpack.c.h.b16 %v800
        %v889 = vunpack.c.l.b16 %v801
        %v890 = vunpack.c.h.b16 %v801
        %v891 = vunpack.c.l.b16 %v802
        %v892 = vunpack.c.h.b16 %v802
        %v893 = vunpack.c.l.b16 %v803
        %v894 = vunpack.c.h.b16 %v803
        %v895 = vunpack.c.l.b16 %v804
        %v896 = vunpack.c.h.b16 %v804
        %v897 = vunpack.c.l.b16 %v805
        %v898 = vunpack.c.h.b16 %v805
        %v899 = vunpack.c.l.b16 %v806
        %v900 = vunpack.c.h.b16 %v806
        %v901 = vunpack.c.l.b16 %v807
        %v902 = vunpack.c.h.b16 %v807
        %v903 = vunpack.c.l.b16 %v808
        %v904 = vunpack.c.h.b16 %v808
        %v905 = vunpack.c.l.b16 %v809
        %v906 = vunpack.c.h.b16 %v809
        %v907 = vunpack.c.l.b16 %v810
        %v908 = vunpack.c.h.b16 %v810
        %v909 = vunpack.c.l.b16 %v811
        %v910 = vunpack.c.h.b16 %v811
        %v911 = vunpack.c.l.b16 %v812
        %v912 = vunpack.c.h.b16 %v812
        %v913 = vunpack.c.l.b16 %v813
        %v914 = vunpack.c.h.b16 %v813
        %v915 = vunpack.c.l.b16 %v814
        %v916 = vunpack.c.h.b16 %v814
        %v917 = vpack.c.b16 %v857, %v853
        %v918 = vpack.c.b16 %v858, %v854
        %v919 = vpack.c.b16 %v859, %v855
        %v920 = vpack.c.b16 %v860, %v856
        %v921 = vpack.c.b16 %v865, %v861
        %v922 = vpack.c.b16 %v866, %v862
        %v923 = vpack.c.b16 %v867, %v863
        %v924 = vpack.c.b16 %v868, %v864
        %v925 = vpack.c.b16 %v873, %v869
        %v926 = vpack.c.b16 %v874, %v870
        %v927 = vpack.c.b16 %v875, %v871
        %v928 = vpack.c.b16 %v876, %v872
        %v929 = vpack.c.b16 %v881, %v877
        %v930 = vpack.c.b16 %v882, %v878
        %v931 = vpack.c.b16 %v883, %v879
        %v932 = vpack.c.b16 %v884, %v880
        %v933 = vpack.c.b16 %v889, %v885
        %v934 = vpack.c.b16 %v890, %v886
        %v935 = vpack.c.b16 %v891, %v887
        %v936 = vpack.c.b16 %v892, %v888
        %v937 = vpack.c.b16 %v897, %v893
        %v938 = vpack.c.b16 %v898, %v894
        %v939 = vpack.c.b16 %v899, %v895
        %v940 = vpack.c.b16 %v900, %v896
        %v941 = vpack.c.b16 %v905, %v901
        %v942 = vpack.c.b16 %v906, %v902
        %v943 = vpack.c.b16 %v907, %v903
        %v944 = vpack.c.b16 %v908, %v904
        %v945 = vpack.c.b16 %v913, %v909
        %v946 = vpack.c.b16 %v914, %v910
        %v947 = vpack.c.b16 %v915, %v911
        %v948 = vpack.c.b16 %v916, %v912
        %981 = vmatprep.subr.bf16.mxu0 %v918
        %982 = vmatpush1.bf16.msra.mxu0 %v917
        %983 = vmatprep.subr.bf16.mxu0 %v922
        %984 = vmatpush1.bf16.msra.mxu0 %v921
        %985 = vmatprep.subr.bf16.mxu0 %v926
        %986 = vmatpush1.bf16.msra.mxu0 %v925
        %987 = vmatprep.subr.bf16.mxu0 %v930
        %988 = vmatpush1.bf16.msra.mxu0 %v929
        %989 = vmatprep.subr.bf16.mxu0 %v934
        %990 = vmatpush1.bf16.msra.mxu0 %v933
        %991 = vmatprep.subr.bf16.mxu0 %v938
        %992 = vmatpush1.bf16.msra.mxu0 %v937
        %993 = vmatprep.subr.bf16.mxu0 %v942
        %994 = vmatpush1.bf16.msra.mxu0 %v941
        %995 = vmatprep.subr.bf16.mxu0 %v946
        %996 = vmatpush1.bf16.msra.mxu0 %v945
        %997 = vmatprep.subr.bf16.mxu0 0
        %998 = vmatpush1.bf16.msra.mxu0 0
        %999 = vmatprep.subr.bf16.mxu0 0
        %1000 = vmatpush1.bf16.msra.mxu0 0
        %1001 = vmatprep.subr.bf16.mxu0 0
        %1002 = vmatpush1.bf16.msra.mxu0 0
        %1003 = vmatprep.subr.bf16.mxu0 0
        %1004 = vmatpush1.bf16.msra.mxu0 0
        %1005 = vmatprep.subr.bf16.mxu0 0
        %1006 = vmatpush1.bf16.msra.mxu0 0
        %1007 = vmatprep.subr.bf16.mxu0 0
        %1008 = vmatpush1.bf16.msra.mxu0 0
        %1009 = vmatprep.subr.bf16.mxu0 0
        %1010 = vmatpush1.bf16.msra.mxu0 0
        %1011 = vmatprep.subr.bf16.mxu0 0
        %1012 = vmatpush1.bf16.msra.mxu0 0
        %1013 = vmatprep.mubr.bf16.mxu0 0
        %1014 = vmatmul.mubr.bf16.gmra.mrb[0].mxu0 %v819
        %v1015 = vpop.f32.mrb[0].mxu0
        %v1016 = vadd.f32 0.0, %v1015
        %v1017 = vpop.f32.mrb[0].mxu0
        %v1018 = vadd.f32 0.0, %v1017
        %v1019 = vpop.f32.mrb[0].mxu0
        %v1020 = vadd.f32 0.0, %v1019
        %v1021 = vpop.f32.mrb[0].mxu0
        %v1022 = vadd.f32 0.0, %v1021
        %1023 = vdwg.mxu0
        %1024 = vmatprep.subr.bf16.mxu0 %v920
        %1025 = vmatpush1.bf16.msra.mxu0 %v919
        %1026 = vmatprep.subr.bf16.mxu0 %v924
        %1027 = vmatpush1.bf16.msra.mxu0 %v923
        %1028 = vmatprep.subr.bf16.mxu0 %v928
        %1029 = vmatpush1.bf16.msra.mxu0 %v927
        %1030 = vmatprep.subr.bf16.mxu0 %v932
        %1031 = vmatpush1.bf16.msra.mxu0 %v931
        %1032 = vmatprep.subr.bf16.mxu0 %v936
        %1033 = vmatpush1.bf16.msra.mxu0 %v935
        %1034 = vmatprep.subr.bf16.mxu0 %v940
        %1035 = vmatpush1.bf16.msra.mxu0 %v939
        %1036 = vmatprep.subr.bf16.mxu0 %v944
        %1037 = vmatpush1.bf16.msra.mxu0 %v943
        %1038 = vmatprep.subr.bf16.mxu0 %v948
        %1039 = vmatpush1.bf16.msra.mxu0 %v947
        %1040 = vmatprep.subr.bf16.mxu0 0
        %1041 = vmatpush1.bf16.msra.mxu0 0
        %1042 = vmatprep.subr.bf16.mxu0 0
        %1043 = vmatpush1.bf16.msra.mxu0 0
        %1044 = vmatprep.subr.bf16.mxu0 0
        %1045 = vmatpush1.bf16.msra.mxu0 0
        %1046 = vmatprep.subr.bf16.mxu0 0
        %1047 = vmatpush1.bf16.msra.mxu0 0
        %1048 = vmatprep.subr.bf16.mxu0 0
        %1049 = vmatpush1.bf16.msra.mxu0 0
        %1050 = vmatprep.subr.bf16.mxu0 0
        %1051 = vmatpush1.bf16.msra.mxu0 0
        %1052 = vmatprep.subr.bf16.mxu0 0
        %1053 = vmatpush1.bf16.msra.mxu0 0
        %1054 = vmatprep.subr.bf16.mxu0 0
        %1055 = vmatpush1.bf16.msra.mxu0 0
        %1056 = vmatprep.mubr.bf16.mxu0 0
        %1057 = vmatmul.mubr.bf16.gmra.mrb[0].mxu0 %v819
        %v1058 = vpop.f32.mrb[0].mxu0
        %v1059 = vadd.f32 0.0, %v1058
        %v1060 = vpop.f32.mrb[0].mxu0
        %v1061 = vadd.f32 0.0, %v1060
        %v1062 = vpop.f32.mrb[0].mxu0
        %v1063 = vadd.f32 0.0, %v1062
        %v1064 = vpop.f32.mrb[0].mxu0
        %v1065 = vadd.f32 0.0, %v1064
        %1066 = vdwg.mxu0
        %v1067 = vadd.f32 %v773, %v1016
        %v1068 = vadd.f32 %v774, %v1018
        %v1069 = vadd.f32 %v775, %v1059
        %v1070 = vadd.f32 %v776, %v1061
        %v1071 = vadd.f32 %v777, %v1020
        %v1072 = vadd.f32 %v778, %v1022
        %v1073 = vadd.f32 %v779, %v1063
        %v1074 = vadd.f32 %v780, %v1065
        %1075 = vst [vmem:[#allocation2] sm:$0xff] %v1067
        %1076 = vst [vmem:[#allocation2 + $0x8] sm:$0xff] %v1068
        %1077 = vst [vmem:[#allocation2 + $0x10] sm:$0xff] %v1069
        %1078 = vst [vmem:[#allocation2 + $0x18] sm:$0xff] %v1070
        %1079 = vst [vmem:[#allocation2 + $0x20] sm:$0xff] %v1071
        %1080 = vst [vmem:[#allocation2 + $0x28] sm:$0xff] %v1072
        %1081 = vst [vmem:[#allocation2 + $0x30] sm:$0xff] %v1073
        %1082 = vst [vmem:[#allocation2 + $0x38] sm:$0xff] %v1074
        %p1083 = scmp.eq.s32.totalorder %s44, 3
        // Predicated region
        $region154: #{tpu_custom_call.1} parent=132 // pred_check
          %p1084 = pneg %p1083
        $region155: #{tpu_custom_call.1} parent=132 // pred_check_branch
          %1086 = sbr.rel (%p1084) target = $region157
        $region156: #{tpu_custom_call.1} parent=132 // pred_region
          %v1087 = vld [vmem:[#allocation2] sm:$0xff]
          %v1088 = vld [vmem:[#allocation2 + $0x8] sm:$0xff]
          %v1089 = vld [vmem:[#allocation2 + $0x10] sm:$0xff]
          %v1090 = vld [vmem:[#allocation2 + $0x18] sm:$0xff]
          %v1091 = vld [vmem:[#allocation2 + $0x20] sm:$0xff]
          %v1092 = vld [vmem:[#allocation2 + $0x28] sm:$0xff]
          %v1093 = vld [vmem:[#allocation2 + $0x30] sm:$0xff]
          %v1094 = vld [vmem:[#allocation2 + $0x38] sm:$0xff]
          %v1095 = vld [vmem:[%s3] sm:$0xf]
          %v1097 = vlaneseq
          %v1098 = vshrl.u32 %v1097, 7
          %v1099 = vsub.s32 0, %v1098
          %v1100 = vrot.slane %v1095, %v1099
          %v1101 = vlaneseq
          %v1102 = vshrl.u32 %v1101, 7
          %v1103 = vsub.s32 1, %v1102
          %v1104 = vrot.slane %v1095, %v1103
          %v1105 = vlaneseq
          %v1106 = vshrl.u32 %v1105, 7
          %v1107 = vsub.s32 2, %v1106
          %v1108 = vrot.slane %v1095, %v1107
          %v1109 = vlaneseq
          %v1110 = vshrl.u32 %v1109, 7
          %v1111 = vsub.s32 3, %v1110
          %v1112 = vrot.slane %v1095, %v1111
          %v1117 = vadd.f32 %v1087, %v1100
          %v1118 = vadd.f32 %v1088, %v1104
          %v1119 = vadd.f32 %v1089, %v1108
          %v1120 = vadd.f32 %v1090, %v1112
          %v1121 = vadd.f32 %v1091, %v1100
          %v1122 = vadd.f32 %v1092, %v1104
          %v1123 = vadd.f32 %v1093, %v1108
          %v1124 = vadd.f32 %v1094, %v1112
          %v1125 = vmax.f32 %v1117, 0.0
          %v1126 = vmax.f32 %v1118, 0.0
          %v1127 = vmax.f32 %v1119, 0.0
          %v1128 = vmax.f32 %v1120, 0.0
          %v1129 = vmax.f32 %v1121, 0.0
          %v1130 = vmax.f32 %v1122, 0.0
          %v1131 = vmax.f32 %v1123, 0.0
          %v1132 = vmax.f32 %v1124, 0.0
          %v1133 = vpack.c.bf16 %v1129, %v1125
          %v1134 = vpack.c.bf16 %v1130, %v1126
          %v1135 = vpack.c.bf16 %v1131, %v1127
          %v1136 = vpack.c.bf16 %v1132, %v1128
          %v1137 = vld [vmem:[#allocation8] sm:$0xff]
          %v1138 = vld [vmem:[#allocation8 + $0x8] sm:$0xff]
          %v1139 = vld [vmem:[#allocation8 + $0x10] sm:$0xff]
          %v1140 = vld [vmem:[#allocation8 + $0x18] sm:$0xff]
          %v1141 = vld [vmem:[#allocation8 + $0x20] sm:$0xff]
          %v1142 = vld [vmem:[#allocation8 + $0x28] sm:$0xff]
          %v1143 = vld [vmem:[#allocation8 + $0x30] sm:$0xff]
          %v1144 = vld [vmem:[#allocation8 + $0x38] sm:$0xff]
          %v1145 = vld [vmem:[#allocation8 + $0x40] sm:$0xff]
          %v1146 = vld [vmem:[#allocation8 + $0x48] sm:$0xff]
          %v1147 = vld [vmem:[#allocation8 + $0x50] sm:$0xff]
          %v1148 = vld [vmem:[#allocation8 + $0x58] sm:$0xff]
          %v1149 = vld [vmem:[#allocation8 + $0x60] sm:$0xff]
          %v1150 = vld [vmem:[#allocation8 + $0x68] sm:$0xff]
          %v1151 = vld [vmem:[#allocation8 + $0x70] sm:$0xff]
          %v1152 = vld [vmem:[#allocation8 + $0x78] sm:$0xff]
          %v1153 = vld [vmem:[#allocation8 + $0x80] sm:$0xff]
          %v1154 = vld [vmem:[#allocation8 + $0x88] sm:$0xff]
          %v1155 = vld [vmem:[#allocation8 + $0x90] sm:$0xff]
          %v1156 = vld [vmem:[#allocation8 + $0x98] sm:$0xff]
          %v1157 = vld [vmem:[#allocation8 + $0xa0] sm:$0xff]
          %v1158 = vld [vmem:[#allocation8 + $0xa8] sm:$0xff]
          %v1159 = vld [vmem:[#allocation8 + $0xb0] sm:$0xff]
          %v1160 = vld [vmem:[#allocation8 + $0xb8] sm:$0xff]
          %v1161 = vld [vmem:[#allocation8 + $0xc0] sm:$0xff]
          %v1162 = vld [vmem:[#allocation8 + $0xc8] sm:$0xff]
          %v1163 = vld [vmem:[#allocation8 + $0xd0] sm:$0xff]
          %v1164 = vld [vmem:[#allocation8 + $0xd8] sm:$0xff]
          %v1165 = vld [vmem:[#allocation8 + $0xe0] sm:$0xff]
          %v1166 = vld [vmem:[#allocation8 + $0xe8] sm:$0xff]
          %v1167 = vld [vmem:[#allocation8 + $0xf0] sm:$0xff]
          %v1168 = vld [vmem:[#allocation8 + $0xf8] sm:$0xff]
          %v1169 = vld [vmem:[#allocation8 + $0x100] sm:$0xff]
          %v1170 = vld [vmem:[#allocation8 + $0x108] sm:$0xff]
          %v1171 = vld [vmem:[#allocation8 + $0x110] sm:$0xff]
          %v1172 = vld [vmem:[#allocation8 + $0x118] sm:$0xff]
          %v1173 = vld [vmem:[#allocation8 + $0x120] sm:$0xff]
          %v1174 = vld [vmem:[#allocation8 + $0x128] sm:$0xff]
          %v1175 = vld [vmem:[#allocation8 + $0x130] sm:$0xff]
          %v1176 = vld [vmem:[#allocation8 + $0x138] sm:$0xff]
          %v1177 = vld [vmem:[#allocation8 + $0x140] sm:$0xff]
          %v1178 = vld [vmem:[#allocation8 + $0x148] sm:$0xff]
          %v1179 = vld [vmem:[#allocation8 + $0x150] sm:$0xff]
          %v1180 = vld [vmem:[#allocation8 + $0x158] sm:$0xff]
          %v1181 = vld [vmem:[#allocation8 + $0x160] sm:$0xff]
          %v1182 = vld [vmem:[#allocation8 + $0x168] sm:$0xff]
          %v1183 = vld [vmem:[#allocation8 + $0x170] sm:$0xff]
          %v1184 = vld [vmem:[#allocation8 + $0x178] sm:$0xff]
          %v1185 = vld [vmem:[#allocation8 + $0x180] sm:$0xff]
          %v1186 = vld [vmem:[#allocation8 + $0x188] sm:$0xff]
          %v1187 = vld [vmem:[#allocation8 + $0x190] sm:$0xff]
          %v1188 = vld [vmem:[#allocation8 + $0x198] sm:$0xff]
          %v1189 = vld [vmem:[#allocation8 + $0x1a0] sm:$0xff]
          %v1190 = vld [vmem:[#allocation8 + $0x1a8] sm:$0xff]
          %v1191 = vld [vmem:[#allocation8 + $0x1b0] sm:$0xff]
          %v1192 = vld [vmem:[#allocation8 + $0x1b8] sm:$0xff]
          %v1193 = vld [vmem:[#allocation8 + $0x1c0] sm:$0xff]
          %v1194 = vld [vmem:[#allocation8 + $0x1c8] sm:$0xff]
          %v1195 = vld [vmem:[#allocation8 + $0x1d0] sm:$0xff]
          %v1196 = vld [vmem:[#allocation8 + $0x1d8] sm:$0xff]
          %v1197 = vld [vmem:[#allocation8 + $0x1e0] sm:$0xff]
          %v1198 = vld [vmem:[#allocation8 + $0x1e8] sm:$0xff]
          %v1199 = vld [vmem:[#allocation8 + $0x1f0] sm:$0xff]
          %v1200 = vld [vmem:[#allocation8 + $0x1f8] sm:$0xff]
          %v1201 = vld [vmem:[#allocation8 + $0x200] sm:$0xff]
          %v1202 = vld [vmem:[#allocation8 + $0x208] sm:$0xff]
          %v1203 = vld [vmem:[#allocation8 + $0x210] sm:$0xff]
          %v1204 = vld [vmem:[#allocation8 + $0x218] sm:$0xff]
          %v1205 = vld [vmem:[#allocation8 + $0x220] sm:$0xff]
          %v1206 = vld [vmem:[#allocation8 + $0x228] sm:$0xff]
          %v1207 = vld [vmem:[#allocation8 + $0x230] sm:$0xff]
          %v1208 = vld [vmem:[#allocation8 + $0x238] sm:$0xff]
          %v1209 = vld [vmem:[#allocation8 + $0x240] sm:$0xff]
          %v1210 = vld [vmem:[#allocation8 + $0x248] sm:$0xff]
          %v1211 = vld [vmem:[#allocation8 + $0x250] sm:$0xff]
          %v1212 = vld [vmem:[#allocation8 + $0x258] sm:$0xff]
          %v1213 = vld [vmem:[#allocation8 + $0x260] sm:$0xff]
          %v1214 = vld [vmem:[#allocation8 + $0x268] sm:$0xff]
          %v1215 = vld [vmem:[#allocation8 + $0x270] sm:$0xff]
          %v1216 = vld [vmem:[#allocation8 + $0x278] sm:$0xff]
          %v1217 = vld [vmem:[#allocation8 + $0x280] sm:$0xff]
          %v1218 = vld [vmem:[#allocation8 + $0x288] sm:$0xff]
          %v1219 = vld [vmem:[#allocation8 + $0x290] sm:$0xff]
          %v1220 = vld [vmem:[#allocation8 + $0x298] sm:$0xff]
          %v1221 = vld [vmem:[#allocation8 + $0x2a0] sm:$0xff]
          %v1222 = vld [vmem:[#allocation8 + $0x2a8] sm:$0xff]
          %v1223 = vld [vmem:[#allocation8 + $0x2b0] sm:$0xff]
          %v1224 = vld [vmem:[#allocation8 + $0x2b8] sm:$0xff]
          %v1225 = vld [vmem:[#allocation8 + $0x2c0] sm:$0xff]
          %v1226 = vld [vmem:[#allocation8 + $0x2c8] sm:$0xff]
          %v1227 = vld [vmem:[#allocation8 + $0x2d0] sm:$0xff]
          %v1228 = vld [vmem:[#allocation8 + $0x2d8] sm:$0xff]
          %v1229 = vld [vmem:[#allocation8 + $0x2e0] sm:$0xff]
          %v1230 = vld [vmem:[#allocation8 + $0x2e8] sm:$0xff]
          %v1231 = vld [vmem:[#allocation8 + $0x2f0] sm:$0xff]
          %v1232 = vld [vmem:[#allocation8 + $0x2f8] sm:$0xff]
          %v1233 = vld [vmem:[#allocation8 + $0x300] sm:$0xff]
          %v1234 = vld [vmem:[#allocation8 + $0x308] sm:$0xff]
          %v1235 = vld [vmem:[#allocation8 + $0x310] sm:$0xff]
          %v1236 = vld [vmem:[#allocation8 + $0x318] sm:$0xff]
          %v1237 = vld [vmem:[#allocation8 + $0x320] sm:$0xff]
          %v1238 = vld [vmem:[#allocation8 + $0x328] sm:$0xff]
          %v1239 = vld [vmem:[#allocation8 + $0x330] sm:$0xff]
          %v1240 = vld [vmem:[#allocation8 + $0x338] sm:$0xff]
          %v1241 = vld [vmem:[#allocation8 + $0x340] sm:$0xff]
          %v1242 = vld [vmem:[#allocation8 + $0x348] sm:$0xff]
          %v1243 = vld [vmem:[#allocation8 + $0x350] sm:$0xff]
          %v1244 = vld [vmem:[#allocation8 + $0x358] sm:$0xff]
          %v1245 = vld [vmem:[#allocation8 + $0x360] sm:$0xff]
          %v1246 = vld [vmem:[#allocation8 + $0x368] sm:$0xff]
          %v1247 = vld [vmem:[#allocation8 + $0x370] sm:$0xff]
          %v1248 = vld [vmem:[#allocation8 + $0x378] sm:$0xff]
          %v1249 = vld [vmem:[#allocation8 + $0x380] sm:$0xff]
          %v1250 = vld [vmem:[#allocation8 + $0x388] sm:$0xff]
          %v1251 = vld [vmem:[#allocation8 + $0x390] sm:$0xff]
          %v1252 = vld [vmem:[#allocation8 + $0x398] sm:$0xff]
          %v1253 = vld [vmem:[#allocation8 + $0x3a0] sm:$0xff]
          %v1254 = vld [vmem:[#allocation8 + $0x3a8] sm:$0xff]
          %v1255 = vld [vmem:[#allocation8 + $0x3b0] sm:$0xff]
          %v1256 = vld [vmem:[#allocation8 + $0x3b8] sm:$0xff]
          %v1257 = vld [vmem:[#allocation8 + $0x3c0] sm:$0xff]
          %v1258 = vld [vmem:[#allocation8 + $0x3c8] sm:$0xff]
          %v1259 = vld [vmem:[#allocation8 + $0x3d0] sm:$0xff]
          %v1260 = vld [vmem:[#allocation8 + $0x3d8] sm:$0xff]
          %v1261 = vld [vmem:[#allocation8 + $0x3e0] sm:$0xff]
          %v1262 = vld [vmem:[#allocation8 + $0x3e8] sm:$0xff]
          %v1263 = vld [vmem:[#allocation8 + $0x3f0] sm:$0xff]
          %v1264 = vld [vmem:[#allocation8 + $0x3f8] sm:$0xff]
          %v1265 = vld [vmem:[%s5] sm:$0xf]
          %v1267 = vlaneseq
          %v1268 = vshrl.u32 %v1267, 7
          %v1269 = vsub.s32 0, %v1268
          %v1270 = vrot.slane %v1265, %v1269
          %v1271 = vlaneseq
          %v1272 = vshrl.u32 %v1271, 7
          %v1273 = vsub.s32 1, %v1272
          %v1274 = vrot.slane %v1265, %v1273
          %v1275 = vlaneseq
          %v1276 = vshrl.u32 %v1275, 7
          %v1277 = vsub.s32 2, %v1276
          %v1278 = vrot.slane %v1265, %v1277
          %v1279 = vlaneseq
          %v1280 = vshrl.u32 %v1279, 7
          %v1281 = vsub.s32 3, %v1280
          %v1282 = vrot.slane %v1265, %v1281
          %v1415 = vunpack.c.l.b16 %v1137
          %v1416 = vunpack.c.h.b16 %v1137
          %v1417 = vunpack.c.l.b16 %v1138
          %v1418 = vunpack.c.h.b16 %v1138
          %v1419 = vunpack.c.l.b16 %v1139
          %v1420 = vunpack.c.h.b16 %v1139
          %v1421 = vunpack.c.l.b16 %v1140
          %v1422 = vunpack.c.h.b16 %v1140
          %v1423 = vunpack.c.l.b16 %v1141
          %v1424 = vunpack.c.h.b16 %v1141
          %v1425 = vunpack.c.l.b16 %v1142
          %v1426 = vunpack.c.h.b16 %v1142
          %v1427 = vunpack.c.l.b16 %v1143
          %v1428 = vunpack.c.h.b16 %v1143
          %v1429 = vunpack.c.l.b16 %v1144
          %v1430 = vunpack.c.h.b16 %v1144
          %v1431 = vunpack.c.l.b16 %v1145
          %v1432 = vunpack.c.h.b16 %v1145
          %v1433 = vunpack.c.l.b16 %v1146
          %v1434 = vunpack.c.h.b16 %v1146
          %v1435 = vunpack.c.l.b16 %v1147
          %v1436 = vunpack.c.h.b16 %v1147
          %v1437 = vunpack.c.l.b16 %v1148
          %v1438 = vunpack.c.h.b16 %v1148
          %v1439 = vunpack.c.l.b16 %v1149
          %v1440 = vunpack.c.h.b16 %v1149
          %v1441 = vunpack.c.l.b16 %v1150
          %v1442 = vunpack.c.h.b16 %v1150
          %v1443 = vunpack.c.l.b16 %v1151
          %v1444 = vunpack.c.h.b16 %v1151
          %v1445 = vunpack.c.l.b16 %v1152
          %v1446 = vunpack.c.h.b16 %v1152
          %v1447 = vunpack.c.l.b16 %v1153
          %v1448 = vunpack.c.h.b16 %v1153
          %v1449 = vunpack.c.l.b16 %v1154
          %v1450 = vunpack.c.h.b16 %v1154
          %v1451 = vunpack.c.l.b16 %v1155
          %v1452 = vunpack.c.h.b16 %v1155
          %v1453 = vunpack.c.l.b16 %v1156
          %v1454 = vunpack.c.h.b16 %v1156
          %v1455 = vunpack.c.l.b16 %v1157
          %v1456 = vunpack.c.h.b16 %v1157
          %v1457 = vunpack.c.l.b16 %v1158
          %v1458 = vunpack.c.h.b16 %v1158
          %v1459 = vunpack.c.l.b16 %v1159
          %v1460 = vunpack.c.h.b16 %v1159
          %v1461 = vunpack.c.l.b16 %v1160
          %v1462 = vunpack.c.h.b16 %v1160
          %v1463 = vunpack.c.l.b16 %v1161
          %v1464 = vunpack.c.h.b16 %v1161
          %v1465 = vunpack.c.l.b16 %v1162
          %v1466 = vunpack.c.h.b16 %v1162
          %v1467 = vunpack.c.l.b16 %v1163
          %v1468 = vunpack.c.h.b16 %v1163
          %v1469 = vunpack.c.l.b16 %v1164
          %v1470 = vunpack.c.h.b16 %v1164
          %v1471 = vunpack.c.l.b16 %v1165
          %v1472 = vunpack.c.h.b16 %v1165
          %v1473 = vunpack.c.l.b16 %v1166
          %v1474 = vunpack.c.h.b16 %v1166
          %v1475 = vunpack.c.l.b16 %v1167
          %v1476 = vunpack.c.h.b16 %v1167
          %v1477 = vunpack.c.l.b16 %v1168
          %v1478 = vunpack.c.h.b16 %v1168
          %v1479 = vunpack.c.l.b16 %v1169
          %v1480 = vunpack.c.h.b16 %v1169
          %v1481 = vunpack.c.l.b16 %v1170
          %v1482 = vunpack.c.h.b16 %v1170
          %v1483 = vunpack.c.l.b16 %v1171
          %v1484 = vunpack.c.h.b16 %v1171
          %v1485 = vunpack.c.l.b16 %v1172
          %v1486 = vunpack.c.h.b16 %v1172
          %v1487 = vunpack.c.l.b16 %v1173
          %v1488 = vunpack.c.h.b16 %v1173
          %v1489 = vunpack.c.l.b16 %v1174
          %v1490 = vunpack.c.h.b16 %v1174
          %v1491 = vunpack.c.l.b16 %v1175
          %v1492 = vunpack.c.h.b16 %v1175
          %v1493 = vunpack.c.l.b16 %v1176
          %v1494 = vunpack.c.h.b16 %v1176
          %v1495 = vunpack.c.l.b16 %v1177
          %v1496 = vunpack.c.h.b16 %v1177
          %v1497 = vunpack.c.l.b16 %v1178
          %v1498 = vunpack.c.h.b16 %v1178
          %v1499 = vunpack.c.l.b16 %v1179
          %v1500 = vunpack.c.h.b16 %v1179
          %v1501 = vunpack.c.l.b16 %v1180
          %v1502 = vunpack.c.h.b16 %v1180
          %v1503 = vunpack.c.l.b16 %v1181
          %v1504 = vunpack.c.h.b16 %v1181
          %v1505 = vunpack.c.l.b16 %v1182
          %v1506 = vunpack.c.h.b16 %v1182
          %v1507 = vunpack.c.l.b16 %v1183
          %v1508 = vunpack.c.h.b16 %v1183
          %v1509 = vunpack.c.l.b16 %v1184
          %v1510 = vunpack.c.h.b16 %v1184
          %v1511 = vunpack.c.l.b16 %v1185
          %v1512 = vunpack.c.h.b16 %v1185
          %v1513 = vunpack.c.l.b16 %v1186
          %v1514 = vunpack.c.h.b16 %v1186
          %v1515 = vunpack.c.l.b16 %v1187
          %v1516 = vunpack.c.h.b16 %v1187
          %v1517 = vunpack.c.l.b16 %v1188
          %v1518 = vunpack.c.h.b16 %v1188
          %v1519 = vunpack.c.l.b16 %v1189
          %v1520 = vunpack.c.h.b16 %v1189
          %v1521 = vunpack.c.l.b16 %v1190
          %v1522 = vunpack.c.h.b16 %v1190
          %v1523 = vunpack.c.l.b16 %v1191
          %v1524 = vunpack.c.h.b16 %v1191
          %v1525 = vunpack.c.l.b16 %v1192
          %v1526 = vunpack.c.h.b16 %v1192
          %v1527 = vunpack.c.l.b16 %v1193
          %v1528 = vunpack.c.h.b16 %v1193
          %v1529 = vunpack.c.l.b16 %v1194
          %v1530 = vunpack.c.h.b16 %v1194
          %v1531 = vunpack.c.l.b16 %v1195
          %v1532 = vunpack.c.h.b16 %v1195
          %v1533 = vunpack.c.l.b16 %v1196
          %v1534 = vunpack.c.h.b16 %v1196
          %v1535 = vunpack.c.l.b16 %v1197
          %v1536 = vunpack.c.h.b16 %v1197
          %v1537 = vunpack.c.l.b16 %v1198
          %v1538 = vunpack.c.h.b16 %v1198
          %v1539 = vunpack.c.l.b16 %v1199
          %v1540 = vunpack.c.h.b16 %v1199
          %v1541 = vunpack.c.l.b16 %v1200
          %v1542 = vunpack.c.h.b16 %v1200
          %v1543 = vunpack.c.l.b16 %v1201
          %v1544 = vunpack.c.h.b16 %v1201
          %v1545 = vunpack.c.l.b16 %v1202
          %v1546 = vunpack.c.h.b16 %v1202
          %v1547 = vunpack.c.l.b16 %v1203
          %v1548 = vunpack.c.h.b16 %v1203
          %v1549 = vunpack.c.l.b16 %v1204
          %v1550 = vunpack.c.h.b16 %v1204
          %v1551 = vunpack.c.l.b16 %v1205
          %v1552 = vunpack.c.h.b16 %v1205
          %v1553 = vunpack.c.l.b16 %v1206
          %v1554 = vunpack.c.h.b16 %v1206
          %v1555 = vunpack.c.l.b16 %v1207
          %v1556 = vunpack.c.h.b16 %v1207
          %v1557 = vunpack.c.l.b16 %v1208
          %v1558 = vunpack.c.h.b16 %v1208
          %v1559 = vunpack.c.l.b16 %v1209
          %v1560 = vunpack.c.h.b16 %v1209
          %v1561 = vunpack.c.l.b16 %v1210
          %v1562 = vunpack.c.h.b16 %v1210
          %v1563 = vunpack.c.l.b16 %v1211
          %v1564 = vunpack.c.h.b16 %v1211
          %v1565 = vunpack.c.l.b16 %v1212
          %v1566 = vunpack.c.h.b16 %v1212
          %v1567 = vunpack.c.l.b16 %v1213
          %v1568 = vunpack.c.h.b16 %v1213
          %v1569 = vunpack.c.l.b16 %v1214
          %v1570 = vunpack.c.h.b16 %v1214
          %v1571 = vunpack.c.l.b16 %v1215
          %v1572 = vunpack.c.h.b16 %v1215
          %v1573 = vunpack.c.l.b16 %v1216
          %v1574 = vunpack.c.h.b16 %v1216
          %v1575 = vunpack.c.l.b16 %v1217
          %v1576 = vunpack.c.h.b16 %v1217
          %v1577 = vunpack.c.l.b16 %v1218
          %v1578 = vunpack.c.h.b16 %v1218
          %v1579 = vunpack.c.l.b16 %v1219
          %v1580 = vunpack.c.h.b16 %v1219
          %v1581 = vunpack.c.l.b16 %v1220
          %v1582 = vunpack.c.h.b16 %v1220
          %v1583 = vunpack.c.l.b16 %v1221
          %v1584 = vunpack.c.h.b16 %v1221
          %v1585 = vunpack.c.l.b16 %v1222
          %v1586 = vunpack.c.h.b16 %v1222
          %v1587 = vunpack.c.l.b16 %v1223
          %v1588 = vunpack.c.h.b16 %v1223
          %v1589 = vunpack.c.l.b16 %v1224
          %v1590 = vunpack.c.h.b16 %v1224
          %v1591 = vunpack.c.l.b16 %v1225
          %v1592 = vunpack.c.h.b16 %v1225
          %v1593 = vunpack.c.l.b16 %v1226
          %v1594 = vunpack.c.h.b16 %v1226
          %v1595 = vunpack.c.l.b16 %v1227
          %v1596 = vunpack.c.h.b16 %v1227
          %v1597 = vunpack.c.l.b16 %v1228
          %v1598 = vunpack.c.h.b16 %v1228
          %v1599 = vunpack.c.l.b16 %v1229
          %v1600 = vunpack.c.h.b16 %v1229
          %v1601 = vunpack.c.l.b16 %v1230
          %v1602 = vunpack.c.h.b16 %v1230
          %v1603 = vunpack.c.l.b16 %v1231
          %v1604 = vunpack.c.h.b16 %v1231
          %v1605 = vunpack.c.l.b16 %v1232
          %v1606 = vunpack.c.h.b16 %v1232
          %v1607 = vunpack.c.l.b16 %v1233
          %v1608 = vunpack.c.h.b16 %v1233
          %v1609 = vunpack.c.l.b16 %v1234
          %v1610 = vunpack.c.h.b16 %v1234
          %v1611 = vunpack.c.l.b16 %v1235
          %v1612 = vunpack.c.h.b16 %v1235
          %v1613 = vunpack.c.l.b16 %v1236
          %v1614 = vunpack.c.h.b16 %v1236
          %v1615 = vunpack.c.l.b16 %v1237
          %v1616 = vunpack.c.h.b16 %v1237
          %v1617 = vunpack.c.l.b16 %v1238
          %v1618 = vunpack.c.h.b16 %v1238
          %v1619 = vunpack.c.l.b16 %v1239
          %v1620 = vunpack.c.h.b16 %v1239
          %v1621 = vunpack.c.l.b16 %v1240
          %v1622 = vunpack.c.h.b16 %v1240
          %v1623 = vunpack.c.l.b16 %v1241
          %v1624 = vunpack.c.h.b16 %v1241
          %v1625 = vunpack.c.l.b16 %v1242
          %v1626 = vunpack.c.h.b16 %v1242
          %v1627 = vunpack.c.l.b16 %v1243
          %v1628 = vunpack.c.h.b16 %v1243
          %v1629 = vunpack.c.l.b16 %v1244
          %v1630 = vunpack.c.h.b16 %v1244
          %v1631 = vunpack.c.l.b16 %v1245
          %v1632 = vunpack.c.h.b16 %v1245
          %v1633 = vunpack.c.l.b16 %v1246
          %v1634 = vunpack.c.h.b16 %v1246
          %v1635 = vunpack.c.l.b16 %v1247
          %v1636 = vunpack.c.h.b16 %v1247
          %v1637 = vunpack.c.l.b16 %v1248
          %v1638 = vunpack.c.h.b16 %v1248
          %v1639 = vunpack.c.l.b16 %v1249
          %v1640 = vunpack.c.h.b16 %v1249
          %v1641 = vunpack.c.l.b16 %v1250
          %v1642 = vunpack.c.h.b16 %v1250
          %v1643 = vunpack.c.l.b16 %v1251
          %v1644 = vunpack.c.h.b16 %v1251
          %v1645 = vunpack.c.l.b16 %v1252
          %v1646 = vunpack.c.h.b16 %v1252
          %v1647 = vunpack.c.l.b16 %v1253
          %v1648 = vunpack.c.h.b16 %v1253
          %v1649 = vunpack.c.l.b16 %v1254
          %v1650 = vunpack.c.h.b16 %v1254
          %v1651 = vunpack.c.l.b16 %v1255
          %v1652 = vunpack.c.h.b16 %v1255
          %v1653 = vunpack.c.l.b16 %v1256
          %v1654 = vunpack.c.h.b16 %v1256
          %v1655 = vunpack.c.l.b16 %v1257
          %v1656 = vunpack.c.h.b16 %v1257
          %v1657 = vunpack.c.l.b16 %v1258
          %v1658 = vunpack.c.h.b16 %v1258
          %v1659 = vunpack.c.l.b16 %v1259
          %v1660 = vunpack.c.h.b16 %v1259
          %v1661 = vunpack.c.l.b16 %v1260
          %v1662 = vunpack.c.h.b16 %v1260
          %v1663 = vunpack.c.l.b16 %v1261
          %v1664 = vunpack.c.h.b16 %v1261
          %v1665 = vunpack.c.l.b16 %v1262
          %v1666 = vunpack.c.h.b16 %v1262
          %v1667 = vunpack.c.l.b16 %v1263
          %v1668 = vunpack.c.h.b16 %v1263
          %v1669 = vunpack.c.l.b16 %v1264
          %v1670 = vunpack.c.h.b16 %v1264
          %v1671 = vpack.c.b16 %v1419, %v1415
          %v1672 = vpack.c.b16 %v1420, %v1416
          %v1673 = vpack.c.b16 %v1421, %v1417
          %v1674 = vpack.c.b16 %v1422, %v1418
          %v1675 = vpack.c.b16 %v1427, %v1423
          %v1676 = vpack.c.b16 %v1428, %v1424
          %v1677 = vpack.c.b16 %v1429, %v1425
          %v1678 = vpack.c.b16 %v1430, %v1426
          %v1679 = vpack.c.b16 %v1435, %v1431
          %v1680 = vpack.c.b16 %v1436, %v1432
          %v1681 = vpack.c.b16 %v1437, %v1433
          %v1682 = vpack.c.b16 %v1438, %v1434
          %v1683 = vpack.c.b16 %v1443, %v1439
          %v1684 = vpack.c.b16 %v1444, %v1440
          %v1685 = vpack.c.b16 %v1445, %v1441
          %v1686 = vpack.c.b16 %v1446, %v1442
          %v1687 = vpack.c.b16 %v1451, %v1447
          %v1688 = vpack.c.b16 %v1452, %v1448
          %v1689 = vpack.c.b16 %v1453, %v1449
          %v1690 = vpack.c.b16 %v1454, %v1450
          %v1691 = vpack.c.b16 %v1459, %v1455
          %v1692 = vpack.c.b16 %v1460, %v1456
          %v1693 = vpack.c.b16 %v1461, %v1457
          %v1694 = vpack.c.b16 %v1462, %v1458
          %v1695 = vpack.c.b16 %v1467, %v1463
          %v1696 = vpack.c.b16 %v1468, %v1464
          %v1697 = vpack.c.b16 %v1469, %v1465
          %v1698 = vpack.c.b16 %v1470, %v1466
          %v1699 = vpack.c.b16 %v1475, %v1471
          %v1700 = vpack.c.b16 %v1476, %v1472
          %v1701 = vpack.c.b16 %v1477, %v1473
          %v1702 = vpack.c.b16 %v1478, %v1474
          %v1703 = vpack.c.b16 %v1483, %v1479
          %v1704 = vpack.c.b16 %v1484, %v1480
          %v1705 = vpack.c.b16 %v1485, %v1481
          %v1706 = vpack.c.b16 %v1486, %v1482
          %v1707 = vpack.c.b16 %v1491, %v1487
          %v1708 = vpack.c.b16 %v1492, %v1488
          %v1709 = vpack.c.b16 %v1493, %v1489
          %v1710 = vpack.c.b16 %v1494, %v1490
          %v1711 = vpack.c.b16 %v1499, %v1495
          %v1712 = vpack.c.b16 %v1500, %v1496
          %v1713 = vpack.c.b16 %v1501, %v1497
          %v1714 = vpack.c.b16 %v1502, %v1498
          %v1715 = vpack.c.b16 %v1507, %v1503
          %v1716 = vpack.c.b16 %v1508, %v1504
          %v1717 = vpack.c.b16 %v1509, %v1505
          %v1718 = vpack.c.b16 %v1510, %v1506
          %v1719 = vpack.c.b16 %v1515, %v1511
          %v1720 = vpack.c.b16 %v1516, %v1512
          %v1721 = vpack.c.b16 %v1517, %v1513
          %v1722 = vpack.c.b16 %v1518, %v1514
          %v1723 = vpack.c.b16 %v1523, %v1519
          %v1724 = vpack.c.b16 %v1524, %v1520
          %v1725 = vpack.c.b16 %v1525, %v1521
          %v1726 = vpack.c.b16 %v1526, %v1522
          %v1727 = vpack.c.b16 %v1531, %v1527
          %v1728 = vpack.c.b16 %v1532, %v1528
          %v1729 = vpack.c.b16 %v1533, %v1529
          %v1730 = vpack.c.b16 %v1534, %v1530
          %v1731 = vpack.c.b16 %v1539, %v1535
          %v1732 = vpack.c.b16 %v1540, %v1536
          %v1733 = vpack.c.b16 %v1541, %v1537
          %v1734 = vpack.c.b16 %v1542, %v1538
          %v1735 = vpack.c.b16 %v1547, %v1543
          %v1736 = vpack.c.b16 %v1548, %v1544
          %v1737 = vpack.c.b16 %v1549, %v1545
          %v1738 = vpack.c.b16 %v1550, %v1546
          %v1739 = vpack.c.b16 %v1555, %v1551
          %v1740 = vpack.c.b16 %v1556, %v1552
          %v1741 = vpack.c.b16 %v1557, %v1553
          %v1742 = vpack.c.b16 %v1558, %v1554
          %v1743 = vpack.c.b16 %v1563, %v1559
          %v1744 = vpack.c.b16 %v1564, %v1560
          %v1745 = vpack.c.b16 %v1565, %v1561
          %v1746 = vpack.c.b16 %v1566, %v1562
          %v1747 = vpack.c.b16 %v1571, %v1567
          %v1748 = vpack.c.b16 %v1572, %v1568
          %v1749 = vpack.c.b16 %v1573, %v1569
          %v1750 = vpack.c.b16 %v1574, %v1570
          %v1751 = vpack.c.b16 %v1579, %v1575
          %v1752 = vpack.c.b16 %v1580, %v1576
          %v1753 = vpack.c.b16 %v1581, %v1577
          %v1754 = vpack.c.b16 %v1582, %v1578
          %v1755 = vpack.c.b16 %v1587, %v1583
          %v1756 = vpack.c.b16 %v1588, %v1584
          %v1757 = vpack.c.b16 %v1589, %v1585
          %v1758 = vpack.c.b16 %v1590, %v1586
          %v1759 = vpack.c.b16 %v1595, %v1591
          %v1760 = vpack.c.b16 %v1596, %v1592
          %v1761 = vpack.c.b16 %v1597, %v1593
          %v1762 = vpack.c.b16 %v1598, %v1594
          %v1763 = vpack.c.b16 %v1603, %v1599
          %v1764 = vpack.c.b16 %v1604, %v1600
          %v1765 = vpack.c.b16 %v1605, %v1601
          %v1766 = vpack.c.b16 %v1606, %v1602
          %v1767 = vpack.c.b16 %v1611, %v1607
          %v1768 = vpack.c.b16 %v1612, %v1608
          %v1769 = vpack.c.b16 %v1613, %v1609
          %v1770 = vpack.c.b16 %v1614, %v1610
          %v1771 = vpack.c.b16 %v1619, %v1615
          %v1772 = vpack.c.b16 %v1620, %v1616
          %v1773 = vpack.c.b16 %v1621, %v1617
          %v1774 = vpack.c.b16 %v1622, %v1618
          %v1775 = vpack.c.b16 %v1627, %v1623
          %v1776 = vpack.c.b16 %v1628, %v1624
          %v1777 = vpack.c.b16 %v1629, %v1625
          %v1778 = vpack.c.b16 %v1630, %v1626
          %v1779 = vpack.c.b16 %v1635, %v1631
          %v1780 = vpack.c.b16 %v1636, %v1632
          %v1781 = vpack.c.b16 %v1637, %v1633
          %v1782 = vpack.c.b16 %v1638, %v1634
          %v1783 = vpack.c.b16 %v1643, %v1639
          %v1784 = vpack.c.b16 %v1644, %v1640
          %v1785 = vpack.c.b16 %v1645, %v1641
          %v1786 = vpack.c.b16 %v1646, %v1642
          %v1787 = vpack.c.b16 %v1651, %v1647
          %v1788 = vpack.c.b16 %v1652, %v1648
          %v1789 = vpack.c.b16 %v1653, %v1649
          %v1790 = vpack.c.b16 %v1654, %v1650
          %v1791 = vpack.c.b16 %v1659, %v1655
          %v1792 = vpack.c.b16 %v1660, %v1656
          %v1793 = vpack.c.b16 %v1661, %v1657
          %v1794 = vpack.c.b16 %v1662, %v1658
          %v1795 = vpack.c.b16 %v1667, %v1663
          %v1796 = vpack.c.b16 %v1668, %v1664
          %v1797 = vpack.c.b16 %v1669, %v1665
          %v1798 = vpack.c.b16 %v1670, %v1666
          %1927 = vmatprep.subr.bf16.mxu0 %v1672
          %1928 = vmatpush1.bf16.msra.mxu0 %v1671
          %1929 = vmatprep.subr.bf16.mxu0 %v1676
          %1930 = vmatpush1.bf16.msra.mxu0 %v1675
          %1931 = vmatprep.subr.bf16.mxu0 %v1680
          %1932 = vmatpush1.bf16.msra.mxu0 %v1679
          %1933 = vmatprep.subr.bf16.mxu0 %v1684
          %1934 = vmatpush1.bf16.msra.mxu0 %v1683
          %1935 = vmatprep.subr.bf16.mxu0 %v1688
          %1936 = vmatpush1.bf16.msra.mxu0 %v1687
          %1937 = vmatprep.subr.bf16.mxu0 %v1692
          %1938 = vmatpush1.bf16.msra.mxu0 %v1691
          %1939 = vmatprep.subr.bf16.mxu0 %v1696
          %1940 = vmatpush1.bf16.msra.mxu0 %v1695
          %1941 = vmatprep.subr.bf16.mxu0 %v1700
          %1942 = vmatpush1.bf16.msra.mxu0 %v1699
          %1943 = vmatprep.subr.bf16.mxu0 %v1704
          %1944 = vmatpush1.bf16.msra.mxu0 %v1703
          %1945 = vmatprep.subr.bf16.mxu0 %v1708
          %1946 = vmatpush1.bf16.msra.mxu0 %v1707
          %1947 = vmatprep.subr.bf16.mxu0 %v1712
          %1948 = vmatpush1.bf16.msra.mxu0 %v1711
          %1949 = vmatprep.subr.bf16.mxu0 %v1716
          %1950 = vmatpush1.bf16.msra.mxu0 %v1715
          %1951 = vmatprep.subr.bf16.mxu0 %v1720
          %1952 = vmatpush1.bf16.msra.mxu0 %v1719
          %1953 = vmatprep.subr.bf16.mxu0 %v1724
          %1954 = vmatpush1.bf16.msra.mxu0 %v1723
          %1955 = vmatprep.subr.bf16.mxu0 %v1728
          %1956 = vmatpush1.bf16.msra.mxu0 %v1727
          %1957 = vmatprep.subr.bf16.mxu0 %v1732
          %1958 = vmatpush1.bf16.msra.mxu0 %v1731
          %1959 = vmatprep.mubr.bf16.mxu0 %v1134
          %1960 = vmatmul.mubr.bf16.gmra.mrb[0].mxu0 %v1133
          %v1961 = vpop.f32.mrb[0].mxu0
          %v1962 = vadd.f32 %v1270, %v1961
          %v1963 = vpop.f32.mrb[0].mxu0
          %v1964 = vadd.f32 %v1274, %v1963
          %v1965 = vpop.f32.mrb[0].mxu0
          %v1966 = vadd.f32 %v1270, %v1965
          %v1967 = vpop.f32.mrb[0].mxu0
          %v1968 = vadd.f32 %v1274, %v1967
          %1969 = vdwg.mxu0
          %1970 = vmatprep.subr.bf16.mxu0 %v1736
          %1971 = vmatpush1.bf16.msra.mxu0 %v1735
          %1972 = vmatprep.subr.bf16.mxu0 %v1740
          %1973 = vmatpush1.bf16.msra.mxu0 %v1739
          %1974 = vmatprep.subr.bf16.mxu0 %v1744
          %1975 = vmatpush1.bf16.msra.mxu0 %v1743
          %1976 = vmatprep.subr.bf16.mxu0 %v1748
          %1977 = vmatpush1.bf16.msra.mxu0 %v1747
          %1978 = vmatprep.subr.bf16.mxu0 %v1752
          %1979 = vmatpush1.bf16.msra.mxu0 %v1751
          %1980 = vmatprep.subr.bf16.mxu0 %v1756
          %1981 = vmatpush1.bf16.msra.mxu0 %v1755
          %1982 = vmatprep.subr.bf16.mxu0 %v1760
          %1983 = vmatpush1.bf16.msra.mxu0 %v1759
          %1984 = vmatprep.subr.bf16.mxu0 %v1764
          %1985 = vmatpush1.bf16.msra.mxu0 %v1763
          %1986 = vmatprep.subr.bf16.mxu0 %v1768
          %1987 = vmatpush1.bf16.msra.mxu0 %v1767
          %1988 = vmatprep.subr.bf16.mxu0 %v1772
          %1989 = vmatpush1.bf16.msra.mxu0 %v1771
          %1990 = vmatprep.subr.bf16.mxu0 %v1776
          %1991 = vmatpush1.bf16.msra.mxu0 %v1775
          %1992 = vmatprep.subr.bf16.mxu0 %v1780
          %1993 = vmatpush1.bf16.msra.mxu0 %v1779
          %1994 = vmatprep.subr.bf16.mxu0 %v1784
          %1995 = vmatpush1.bf16.msra.mxu0 %v1783
          %1996 = vmatprep.subr.bf16.mxu0 %v1788
          %1997 = vmatpush1.bf16.msra.mxu0 %v1787
          %1998 = vmatprep.subr.bf16.mxu0 %v1792
          %1999 = vmatpush1.bf16.msra.mxu0 %v1791
          %2000 = vmatprep.subr.bf16.mxu0 %v1796
          %2001 = vmatpush1.bf16.msra.mxu0 %v1795
          %2002 = vmatprep.mubr.bf16.mxu0 %v1136
          %2003 = vmatmul.mubr.bf16.gmra.mrb[0].mxu0 %v1135
          %v2004 = vpop.f32.mrb[0].mxu0
          %v2005 = vadd.f32 %v1962, %v2004
          %v2006 = vpop.f32.mrb[0].mxu0
          %v2007 = vadd.f32 %v1964, %v2006
          %v2008 = vpop.f32.mrb[0].mxu0
          %v2009 = vadd.f32 %v1966, %v2008
          %v2010 = vpop.f32.mrb[0].mxu0
          %v2011 = vadd.f32 %v1968, %v2010
          %2012 = vdwg.mxu0
          %2013 = vmatprep.subr.bf16.mxu0 %v1674
          %2014 = vmatpush1.bf16.msra.mxu0 %v1673
          %2015 = vmatprep.subr.bf16.mxu0 %v1678
          %2016 = vmatpush1.bf16.msra.mxu0 %v1677
          %2017 = vmatprep.subr.bf16.mxu0 %v1682
          %2018 = vmatpush1.bf16.msra.mxu0 %v1681
          %2019 = vmatprep.subr.bf16.mxu0 %v1686
          %2020 = vmatpush1.bf16.msra.mxu0 %v1685
          %2021 = vmatprep.subr.bf16.mxu0 %v1690
          %2022 = vmatpush1.bf16.msra.mxu0 %v1689
          %2023 = vmatprep.subr.bf16.mxu0 %v1694
          %2024 = vmatpush1.bf16.msra.mxu0 %v1693
          %2025 = vmatprep.subr.bf16.mxu0 %v1698
          %2026 = vmatpush1.bf16.msra.mxu0 %v1697
          %2027 = vmatprep.subr.bf16.mxu0 %v1702
          %2028 = vmatpush1.bf16.msra.mxu0 %v1701
          %2029 = vmatprep.subr.bf16.mxu0 %v1706
          %2030 = vmatpush1.bf16.msra.mxu0 %v1705
          %2031 = vmatprep.subr.bf16.mxu0 %v1710
          %2032 = vmatpush1.bf16.msra.mxu0 %v1709
          %2033 = vmatprep.subr.bf16.mxu0 %v1714
          %2034 = vmatpush1.bf16.msra.mxu0 %v1713
          %2035 = vmatprep.subr.bf16.mxu0 %v1718
          %2036 = vmatpush1.bf16.msra.mxu0 %v1717
          %2037 = vmatprep.subr.bf16.mxu0 %v1722
          %2038 = vmatpush1.bf16.msra.mxu0 %v1721
          %2039 = vmatprep.subr.bf16.mxu0 %v1726
          %2040 = vmatpush1.bf16.msra.mxu0 %v1725
          %2041 = vmatprep.subr.bf16.mxu0 %v1730
          %2042 = vmatpush1.bf16.msra.mxu0 %v1729
          %2043 = vmatprep.subr.bf16.mxu0 %v1734
          %2044 = vmatpush1.bf16.msra.mxu0 %v1733
          %2045 = vmatprep.mubr.bf16.mxu0 %v1134
          %2046 = vmatmul.mubr.bf16.gmra.mrb[0].mxu0 %v1133
          %v2047 = vpop.f32.mrb[0].mxu0
          %v2048 = vadd.f32 %v1278, %v2047
          %v2049 = vpop.f32.mrb[0].mxu0
          %v2050 = vadd.f32 %v1282, %v2049
          %v2051 = vpop.f32.mrb[0].mxu0
          %v2052 = vadd.f32 %v1278, %v2051
          %v2053 = vpop.f32.mrb[0].mxu0
          %v2054 = vadd.f32 %v1282, %v2053
          %2055 = vdwg.mxu0
          %2056 = vmatprep.subr.bf16.mxu0 %v1738
          %2057 = vmatpush1.bf16.msra.mxu0 %v1737
          %2058 = vmatprep.subr.bf16.mxu0 %v1742
          %2059 = vmatpush1.bf16.msra.mxu0 %v1741
          %2060 = vmatprep.subr.bf16.mxu0 %v1746
          %2061 = vmatpush1.bf16.msra.mxu0 %v1745
          %2062 = vmatprep.subr.bf16.mxu0 %v1750
          %2063 = vmatpush1.bf16.msra.mxu0 %v1749
          %2064 = vmatprep.subr.bf16.mxu0 %v1754
          %2065 = vmatpush1.bf16.msra.mxu0 %v1753
          %2066 = vmatprep.subr.bf16.mxu0 %v1758
          %2067 = vmatpush1.bf16.msra.mxu0 %v1757
          %2068 = vmatprep.subr.bf16.mxu0 %v1762
          %2069 = vmatpush1.bf16.msra.mxu0 %v1761
          %2070 = vmatprep.subr.bf16.mxu0 %v1766
          %2071 = vmatpush1.bf16.msra.mxu0 %v1765
          %2072 = vmatprep.subr.bf16.mxu0 %v1770
          %2073 = vmatpush1.bf16.msra.mxu0 %v1769
          %2074 = vmatprep.subr.bf16.mxu0 %v1774
          %2075 = vmatpush1.bf16.msra.mxu0 %v1773
          %2076 = vmatprep.subr.bf16.mxu0 %v1778
          %2077 = vmatpush1.bf16.msra.mxu0 %v1777
          %2078 = vmatprep.subr.bf16.mxu0 %v1782
          %2079 = vmatpush1.bf16.msra.mxu0 %v1781
          %2080 = vmatprep.subr.bf16.mxu0 %v1786
          %2081 = vmatpush1.bf16.msra.mxu0 %v1785
          %2082 = vmatprep.subr.bf16.mxu0 %v1790
          %2083 = vmatpush1.bf16.msra.mxu0 %v1789
          %2084 = vmatprep.subr.bf16.mxu0 %v1794
          %2085 = vmatpush1.bf16.msra.mxu0 %v1793
          %2086 = vmatprep.subr.bf16.mxu0 %v1798
          %2087 = vmatpush1.bf16.msra.mxu0 %v1797
          %2088 = vmatprep.mubr.bf16.mxu0 %v1136
          %2089 = vmatmul.mubr.bf16.gmra.mrb[0].mxu0 %v1135
          %v2090 = vpop.f32.mrb[0].mxu0
          %v2091 = vadd.f32 %v2048, %v2090
          %v2092 = vpop.f32.mrb[0].mxu0
          %v2093 = vadd.f32 %v2050, %v2092
          %v2094 = vpop.f32.mrb[0].mxu0
          %v2095 = vadd.f32 %v2052, %v2094
          %v2096 = vpop.f32.mrb[0].mxu0
          %v2097 = vadd.f32 %v2054, %v2096
          %2098 = vdwg.mxu0
          %v2099 = vmax.f32 %v2005, 0.0
          %v2100 = vmax.f32 %v2007, 0.0
          %v2101 = vmax.f32 %v2091, 0.0
          %v2102 = vmax.f32 %v2093, 0.0
          %v2103 = vmax.f32 %v2009, 0.0
          %v2104 = vmax.f32 %v2011, 0.0
          %v2105 = vmax.f32 %v2095, 0.0
          %v2106 = vmax.f32 %v2097, 0.0
          %v2107 = vpack.c.bf16 %v2103, %v2099
          %v2108 = vpack.c.bf16 %v2104, %v2100
          %v2109 = vpack.c.bf16 %v2105, %v2101
          %v2110 = vpack.c.bf16 %v2106, %v2102
          %v2111 = vld [vmem:[#allocation10] sm:$0xff]
          %v2112 = vld [vmem:[#allocation10 + $0x8] sm:$0xff]
          %v2113 = vld [vmem:[#allocation10 + $0x10] sm:$0xff]
          %v2114 = vld [vmem:[#allocation10 + $0x18] sm:$0xff]
          %v2115 = vld [vmem:[#allocation10 + $0x20] sm:$0xff]
          %v2116 = vld [vmem:[#allocation10 + $0x28] sm:$0xff]
          %v2117 = vld [vmem:[#allocation10 + $0x30] sm:$0xff]
          %v2118 = vld [vmem:[#allocation10 + $0x38] sm:$0xff]
          %v2119 = vld [vmem:[#allocation10 + $0x40] sm:$0xff]
          %v2120 = vld [vmem:[#allocation10 + $0x48] sm:$0xff]
          %v2121 = vld [vmem:[#allocation10 + $0x50] sm:$0xff]
          %v2122 = vld [vmem:[#allocation10 + $0x58] sm:$0xff]
          %v2123 = vld [vmem:[#allocation10 + $0x60] sm:$0xff]
          %v2124 = vld [vmem:[#allocation10 + $0x68] sm:$0xff]
          %v2125 = vld [vmem:[#allocation10 + $0x70] sm:$0xff]
          %v2126 = vld [vmem:[#allocation10 + $0x78] sm:$0xff]
          %v2127 = vld [vmem:[#allocation10 + $0x80] sm:$0xff]
          %v2128 = vld [vmem:[#allocation10 + $0x88] sm:$0xff]
          %v2129 = vld [vmem:[#allocation10 + $0x90] sm:$0xff]
          %v2130 = vld [vmem:[#allocation10 + $0x98] sm:$0xff]
          %v2131 = vld [vmem:[#allocation10 + $0xa0] sm:$0xff]
          %v2132 = vld [vmem:[#allocation10 + $0xa8] sm:$0xff]
          %v2133 = vld [vmem:[#allocation10 + $0xb0] sm:$0xff]
          %v2134 = vld [vmem:[#allocation10 + $0xb8] sm:$0xff]
          %v2135 = vld [vmem:[#allocation10 + $0xc0] sm:$0xff]
          %v2136 = vld [vmem:[#allocation10 + $0xc8] sm:$0xff]
          %v2137 = vld [vmem:[#allocation10 + $0xd0] sm:$0xff]
          %v2138 = vld [vmem:[#allocation10 + $0xd8] sm:$0xff]
          %v2139 = vld [vmem:[#allocation10 + $0xe0] sm:$0xff]
          %v2140 = vld [vmem:[#allocation10 + $0xe8] sm:$0xff]
          %v2141 = vld [vmem:[#allocation10 + $0xf0] sm:$0xff]
          %v2142 = vld [vmem:[#allocation10 + $0xf8] sm:$0xff]
          %v2143 = vld [vmem:[#allocation10 + $0x100] sm:$0xff]
          %v2144 = vld [vmem:[#allocation10 + $0x108] sm:$0xff]
          %v2145 = vld [vmem:[#allocation10 + $0x110] sm:$0xff]
          %v2146 = vld [vmem:[#allocation10 + $0x118] sm:$0xff]
          %v2147 = vld [vmem:[#allocation10 + $0x120] sm:$0xff]
          %v2148 = vld [vmem:[#allocation10 + $0x128] sm:$0xff]
          %v2149 = vld [vmem:[#allocation10 + $0x130] sm:$0xff]
          %v2150 = vld [vmem:[#allocation10 + $0x138] sm:$0xff]
          %v2151 = vld [vmem:[#allocation10 + $0x140] sm:$0xff]
          %v2152 = vld [vmem:[#allocation10 + $0x148] sm:$0xff]
          %v2153 = vld [vmem:[#allocation10 + $0x150] sm:$0xff]
          %v2154 = vld [vmem:[#allocation10 + $0x158] sm:$0xff]
          %v2155 = vld [vmem:[#allocation10 + $0x160] sm:$0xff]
          %v2156 = vld [vmem:[#allocation10 + $0x168] sm:$0xff]
          %v2157 = vld [vmem:[#allocation10 + $0x170] sm:$0xff]
          %v2158 = vld [vmem:[#allocation10 + $0x178] sm:$0xff]
          %v2159 = vld [vmem:[#allocation10 + $0x180] sm:$0xff]
          %v2160 = vld [vmem:[#allocation10 + $0x188] sm:$0xff]
          %v2161 = vld [vmem:[#allocation10 + $0x190] sm:$0xff]
          %v2162 = vld [vmem:[#allocation10 + $0x198] sm:$0xff]
          %v2163 = vld [vmem:[#allocation10 + $0x1a0] sm:$0xff]
          %v2164 = vld [vmem:[#allocation10 + $0x1a8] sm:$0xff]
          %v2165 = vld [vmem:[#allocation10 + $0x1b0] sm:$0xff]
          %v2166 = vld [vmem:[#allocation10 + $0x1b8] sm:$0xff]
          %v2167 = vld [vmem:[#allocation10 + $0x1c0] sm:$0xff]
          %v2168 = vld [vmem:[#allocation10 + $0x1c8] sm:$0xff]
          %v2169 = vld [vmem:[#allocation10 + $0x1d0] sm:$0xff]
          %v2170 = vld [vmem:[#allocation10 + $0x1d8] sm:$0xff]
          %v2171 = vld [vmem:[#allocation10 + $0x1e0] sm:$0xff]
          %v2172 = vld [vmem:[#allocation10 + $0x1e8] sm:$0xff]
          %v2173 = vld [vmem:[#allocation10 + $0x1f0] sm:$0xff]
          %v2174 = vld [vmem:[#allocation10 + $0x1f8] sm:$0xff]
          %v2175 = vld [vmem:[%s7] sm:$0x3]
          %v2177 = vlaneseq
          %v2178 = vshrl.u32 %v2177, 7
          %v2179 = vsub.s32 0, %v2178
          %v2180 = vrot.slane %v2175, %v2179
          %v2181 = vlaneseq
          %v2182 = vshrl.u32 %v2181, 7
          %v2183 = vsub.s32 1, %v2182
          %v2184 = vrot.slane %v2175, %v2183
          %v2251 = vunpack.c.l.b16 %v2111
          %v2252 = vunpack.c.h.b16 %v2111
          %v2253 = vunpack.c.l.b16 %v2112
          %v2254 = vunpack.c.h.b16 %v2112
          %v2255 = vunpack.c.l.b16 %v2113
          %v2256 = vunpack.c.h.b16 %v2113
          %v2257 = vunpack.c.l.b16 %v2114
          %v2258 = vunpack.c.h.b16 %v2114
          %v2259 = vunpack.c.l.b16 %v2115
          %v2260 = vunpack.c.h.b16 %v2115
          %v2261 = vunpack.c.l.b16 %v2116
          %v2262 = vunpack.c.h.b16 %v2116
          %v2263 = vunpack.c.l.b16 %v2117
          %v2264 = vunpack.c.h.b16 %v2117
          %v2265 = vunpack.c.l.b16 %v2118
          %v2266 = vunpack.c.h.b16 %v2118
          %v2267 = vunpack.c.l.b16 %v2119
          %v2268 = vunpack.c.h.b16 %v2119
          %v2269 = vunpack.c.l.b16 %v2120
          %v2270 = vunpack.c.h.b16 %v2120
          %v2271 = vunpack.c.l.b16 %v2121
          %v2272 = vunpack.c.h.b16 %v2121
          %v2273 = vunpack.c.l.b16 %v2122
          %v2274 = vunpack.c.h.b16 %v2122
          %v2275 = vunpack.c.l.b16 %v2123
          %v2276 = vunpack.c.h.b16 %v2123
          %v2277 = vunpack.c.l.b16 %v2124
          %v2278 = vunpack.c.h.b16 %v2124
          %v2279 = vunpack.c.l.b16 %v2125
          %v2280 = vunpack.c.h.b16 %v2125
          %v2281 = vunpack.c.l.b16 %v2126
          %v2282 = vunpack.c.h.b16 %v2126
          %v2283 = vunpack.c.l.b16 %v2127
          %v2284 = vunpack.c.h.b16 %v2127
          %v2285 = vunpack.c.l.b16 %v2128
          %v2286 = vunpack.c.h.b16 %v2128
          %v2287 = vunpack.c.l.b16 %v2129
          %v2288 = vunpack.c.h.b16 %v2129
          %v2289 = vunpack.c.l.b16 %v2130
          %v2290 = vunpack.c.h.b16 %v2130
          %v2291 = vunpack.c.l.b16 %v2131
          %v2292 = vunpack.c.h.b16 %v2131
          %v2293 = vunpack.c.l.b16 %v2132
          %v2294 = vunpack.c.h.b16 %v2132
          %v2295 = vunpack.c.l.b16 %v2133
          %v2296 = vunpack.c.h.b16 %v2133
          %v2297 = vunpack.c.l.b16 %v2134
          %v2298 = vunpack.c.h.b16 %v2134
          %v2299 = vunpack.c.l.b16 %v2135
          %v2300 = vunpack.c.h.b16 %v2135
          %v2301 = vunpack.c.l.b16 %v2136
          %v2302 = vunpack.c.h.b16 %v2136
          %v2303 = vunpack.c.l.b16 %v2137
          %v2304 = vunpack.c.h.b16 %v2137
          %v2305 = vunpack.c.l.b16 %v2138
          %v2306 = vunpack.c.h.b16 %v2138
          %v2307 = vunpack.c.l.b16 %v2139
          %v2308 = vunpack.c.h.b16 %v2139
          %v2309 = vunpack.c.l.b16 %v2140
          %v2310 = vunpack.c.h.b16 %v2140
          %v2311 = vunpack.c.l.b16 %v2141
          %v2312 = vunpack.c.h.b16 %v2141
          %v2313 = vunpack.c.l.b16 %v2142
          %v2314 = vunpack.c.h.b16 %v2142
          %v2315 = vunpack.c.l.b16 %v2143
          %v2316 = vunpack.c.h.b16 %v2143
          %v2317 = vunpack.c.l.b16 %v2144
          %v2318 = vunpack.c.h.b16 %v2144
          %v2319 = vunpack.c.l.b16 %v2145
          %v2320 = vunpack.c.h.b16 %v2145
          %v2321 = vunpack.c.l.b16 %v2146
          %v2322 = vunpack.c.h.b16 %v2146
          %v2323 = vunpack.c.l.b16 %v2147
          %v2324 = vunpack.c.h.b16 %v2147
          %v2325 = vunpack.c.l.b16 %v2148
          %v2326 = vunpack.c.h.b16 %v2148
          %v2327 = vunpack.c.l.b16 %v2149
          %v2328 = vunpack.c.h.b16 %v2149
          %v2329 = vunpack.c.l.b16 %v2150
          %v2330 = vunpack.c.h.b16 %v2150
          %v2331 = vunpack.c.l.b16 %v2151
          %v2332 = vunpack.c.h.b16 %v2151
          %v2333 = vunpack.c.l.b16 %v2152
          %v2334 = vunpack.c.h.b16 %v2152
          %v2335 = vunpack.c.l.b16 %v2153
          %v2336 = vunpack.c.h.b16 %v2153
          %v2337 = vunpack.c.l.b16 %v2154
          %v2338 = vunpack.c.h.b16 %v2154
          %v2339 = vunpack.c.l.b16 %v2155
          %v2340 = vunpack.c.h.b16 %v2155
          %v2341 = vunpack.c.l.b16 %v2156
          %v2342 = vunpack.c.h.b16 %v2156
          %v2343 = vunpack.c.l.b16 %v2157
          %v2344 = vunpack.c.h.b16 %v2157
          %v2345 = vunpack.c.l.b16 %v2158
          %v2346 = vunpack.c.h.b16 %v2158
          %v2347 = vunpack.c.l.b16 %v2159
          %v2348 = vunpack.c.h.b16 %v2159
          %v2349 = vunpack.c.l.b16 %v2160
          %v2350 = vunpack.c.h.b16 %v2160
          %v2351 = vunpack.c.l.b16 %v2161
          %v2352 = vunpack.c.h.b16 %v2161
          %v2353 = vunpack.c.l.b16 %v2162
          %v2354 = vunpack.c.h.b16 %v2162
          %v2355 = vunpack.c.l.b16 %v2163
          %v2356 = vunpack.c.h.b16 %v2163
          %v2357 = vunpack.c.l.b16 %v2164
          %v2358 = vunpack.c.h.b16 %v2164
          %v2359 = vunpack.c.l.b16 %v2165
          %v2360 = vunpack.c.h.b16 %v2165
          %v2361 = vunpack.c.l.b16 %v2166
          %v2362 = vunpack.c.h.b16 %v2166
          %v2363 = vunpack.c.l.b16 %v2167
          %v2364 = vunpack.c.h.b16 %v2167
          %v2365 = vunpack.c.l.b16 %v2168
          %v2366 = vunpack.c.h.b16 %v2168
          %v2367 = vunpack.c.l.b16 %v2169
          %v2368 = vunpack.c.h.b16 %v2169
          %v2369 = vunpack.c.l.b16 %v2170
          %v2370 = vunpack.c.h.b16 %v2170
          %v2371 = vunpack.c.l.b16 %v2171
          %v2372 = vunpack.c.h.b16 %v2171
          %v2373 = vunpack.c.l.b16 %v2172
          %v2374 = vunpack.c.h.b16 %v2172
          %v2375 = vunpack.c.l.b16 %v2173
          %v2376 = vunpack.c.h.b16 %v2173
          %v2377 = vunpack.c.l.b16 %v2174
          %v2378 = vunpack.c.h.b16 %v2174
          %v2379 = vpack.c.b16 %v2253, %v2251
          %v2380 = vpack.c.b16 %v2254, %v2252
          %v2381 = vpack.c.b16 %v2257, %v2255
          %v2382 = vpack.c.b16 %v2258, %v2256
          %v2383 = vpack.c.b16 %v2261, %v2259
          %v2384 = vpack.c.b16 %v2262, %v2260
          %v2385 = vpack.c.b16 %v2265, %v2263
          %v2386 = vpack.c.b16 %v2266, %v2264
          %v2387 = vpack.c.b16 %v2269, %v2267
          %v2388 = vpack.c.b16 %v2270, %v2268
          %v2389 = vpack.c.b16 %v2273, %v2271
          %v2390 = vpack.c.b16 %v2274, %v2272
          %v2391 = vpack.c.b16 %v2277, %v2275
          %v2392 = vpack.c.b16 %v2278, %v2276
          %v2393 = vpack.c.b16 %v2281, %v2279
          %v2394 = vpack.c.b16 %v2282, %v2280
          %v2395 = vpack.c.b16 %v2285, %v2283
          %v2396 = vpack.c.b16 %v2286, %v2284
          %v2397 = vpack.c.b16 %v2289, %v2287
          %v2398 = vpack.c.b16 %v2290, %v2288
          %v2399 = vpack.c.b16 %v2293, %v2291
          %v2400 = vpack.c.b16 %v2294, %v2292
          %v2401 = vpack.c.b16 %v2297, %v2295
          %v2402 = vpack.c.b16 %v2298, %v2296
          %v2403 = vpack.c.b16 %v2301, %v2299
          %v2404 = vpack.c.b16 %v2302, %v2300
          %v2405 = vpack.c.b16 %v2305, %v2303
          %v2406 = vpack.c.b16 %v2306, %v2304
          %v2407 = vpack.c.b16 %v2309, %v2307
          %v2408 = vpack.c.b16 %v2310, %v2308
          %v2409 = vpack.c.b16 %v2313, %v2311
          %v2410 = vpack.c.b16 %v2314, %v2312
          %v2411 = vpack.c.b16 %v2317, %v2315
          %v2412 = vpack.c.b16 %v2318, %v2316
          %v2413 = vpack.c.b16 %v2321, %v2319
          %v2414 = vpack.c.b16 %v2322, %v2320
          %v2415 = vpack.c.b16 %v2325, %v2323
          %v2416 = vpack.c.b16 %v2326, %v2324
          %v2417 = vpack.c.b16 %v2329, %v2327
          %v2418 = vpack.c.b16 %v2330, %v2328
          %v2419 = vpack.c.b16 %v2333, %v2331
          %v2420 = vpack.c.b16 %v2334, %v2332
          %v2421 = vpack.c.b16 %v2337, %v2335
          %v2422 = vpack.c.b16 %v2338, %v2336
          %v2423 = vpack.c.b16 %v2341, %v2339
          %v2424 = vpack.c.b16 %v2342, %v2340
          %v2425 = vpack.c.b16 %v2345, %v2343
          %v2426 = vpack.c.b16 %v2346, %v2344
          %v2427 = vpack.c.b16 %v2349, %v2347
          %v2428 = vpack.c.b16 %v2350, %v2348
          %v2429 = vpack.c.b16 %v2353, %v2351
          %v2430 = vpack.c.b16 %v2354, %v2352
          %v2431 = vpack.c.b16 %v2357, %v2355
          %v2432 = vpack.c.b16 %v2358, %v2356
          %v2433 = vpack.c.b16 %v2361, %v2359
          %v2434 = vpack.c.b16 %v2362, %v2360
          %v2435 = vpack.c.b16 %v2365, %v2363
          %v2436 = vpack.c.b16 %v2366, %v2364
          %v2437 = vpack.c.b16 %v2369, %v2367
          %v2438 = vpack.c.b16 %v2370, %v2368
          %v2439 = vpack.c.b16 %v2373, %v2371
          %v2440 = vpack.c.b16 %v2374, %v2372
          %v2441 = vpack.c.b16 %v2377, %v2375
          %v2442 = vpack.c.b16 %v2378, %v2376
          %2507 = vmatprep.subr.bf16.mxu0 %v2380
          %2508 = vmatpush1.bf16.msra.mxu0 %v2379
          %2509 = vmatprep.subr.bf16.mxu0 %v2382
          %2510 = vmatpush1.bf16.msra.mxu0 %v2381
          %2511 = vmatprep.subr.bf16.mxu0 %v2384
          %2512 = vmatpush1.bf16.msra.mxu0 %v2383
          %2513 = vmatprep.subr.bf16.mxu0 %v2386
          %2514 = vmatpush1.bf16.msra.mxu0 %v2385
          %2515 = vmatprep.subr.bf16.mxu0 %v2388
          %2516 = vmatpush1.bf16.msra.mxu0 %v2387
          %2517 = vmatprep.subr.bf16.mxu0 %v2390
          %2518 = vmatpush1.bf16.msra.mxu0 %v2389
          %2519 = vmatprep.subr.bf16.mxu0 %v2392
          %2520 = vmatpush1.bf16.msra.mxu0 %v2391
          %2521 = vmatprep.subr.bf16.mxu0 %v2394
          %2522 = vmatpush1.bf16.msra.mxu0 %v2393
          %2523 = vmatprep.subr.bf16.mxu0 %v2396
          %2524 = vmatpush1.bf16.msra.mxu0 %v2395
          %2525 = vmatprep.subr.bf16.mxu0 %v2398
          %2526 = vmatpush1.bf16.msra.mxu0 %v2397
          %2527 = vmatprep.subr.bf16.mxu0 %v2400
          %2528 = vmatpush1.bf16.msra.mxu0 %v2399
          %2529 = vmatprep.subr.bf16.mxu0 %v2402
          %2530 = vmatpush1.bf16.msra.mxu0 %v2401
          %2531 = vmatprep.subr.bf16.mxu0 %v2404
          %2532 = vmatpush1.bf16.msra.mxu0 %v2403
          %2533 = vmatprep.subr.bf16.mxu0 %v2406
          %2534 = vmatpush1.bf16.msra.mxu0 %v2405
          %2535 = vmatprep.subr.bf16.mxu0 %v2408
          %2536 = vmatpush1.bf16.msra.mxu0 %v2407
          %2537 = vmatprep.subr.bf16.mxu0 %v2410
          %2538 = vmatpush1.bf16.msra.mxu0 %v2409
          %2539 = vmatprep.mubr.bf16.mxu0 %v2108
          %2540 = vmatmul.mubr.bf16.gmra.mrb[0].mxu0 %v2107
          %v2541 = vpop.f32.mrb[0].mxu0
          %v2542 = vadd.f32 %v2180, %v2541
          %v2543 = vpop.f32.mrb[0].mxu0
          %v2544 = vadd.f32 %v2184, %v2543
          %v2545 = vpop.f32.mrb[0].mxu0
          %v2546 = vadd.f32 %v2180, %v2545
          %v2547 = vpop.f32.mrb[0].mxu0
          %v2548 = vadd.f32 %v2184, %v2547
          %2549 = vdwg.mxu0
          %2550 = vmatprep.subr.bf16.mxu0 %v2412
          %2551 = vmatpush1.bf16.msra.mxu0 %v2411
          %2552 = vmatprep.subr.bf16.mxu0 %v2414
          %2553 = vmatpush1.bf16.msra.mxu0 %v2413
          %2554 = vmatprep.subr.bf16.mxu0 %v2416
          %2555 = vmatpush1.bf16.msra.mxu0 %v2415
          %2556 = vmatprep.subr.bf16.mxu0 %v2418
          %2557 = vmatpush1.bf16.msra.mxu0 %v2417
          %2558 = vmatprep.subr.bf16.mxu0 %v2420
          %2559 = vmatpush1.bf16.msra.mxu0 %v2419
          %2560 = vmatprep.subr.bf16.mxu0 %v2422
          %2561 = vmatpush1.bf16.msra.mxu0 %v2421
          %2562 = vmatprep.subr.bf16.mxu0 %v2424
          %2563 = vmatpush1.bf16.msra.mxu0 %v2423
          %2564 = vmatprep.subr.bf16.mxu0 %v2426
          %2565 = vmatpush1.bf16.msra.mxu0 %v2425
          %2566 = vmatprep.subr.bf16.mxu0 %v2428
          %2567 = vmatpush1.bf16.msra.mxu0 %v2427
          %2568 = vmatprep.subr.bf16.mxu0 %v2430
          %2569 = vmatpush1.bf16.msra.mxu0 %v2429
          %2570 = vmatprep.subr.bf16.mxu0 %v2432
          %2571 = vmatpush1.bf16.msra.mxu0 %v2431
          %2572 = vmatprep.subr.bf16.mxu0 %v2434
          %2573 = vmatpush1.bf16.msra.mxu0 %v2433
          %2574 = vmatprep.subr.bf16.mxu0 %v2436
          %2575 = vmatpush1.bf16.msra.mxu0 %v2435
          %2576 = vmatprep.subr.bf16.mxu0 %v2438
          %2577 = vmatpush1.bf16.msra.mxu0 %v2437
          %2578 = vmatprep.subr.bf16.mxu0 %v2440
          %2579 = vmatpush1.bf16.msra.mxu0 %v2439
          %2580 = vmatprep.subr.bf16.mxu0 %v2442
          %2581 = vmatpush1.bf16.msra.mxu0 %v2441
          %2582 = vmatprep.mubr.bf16.mxu0 %v2110
          %2583 = vmatmul.mubr.bf16.gmra.mrb[0].mxu0 %v2109
          %v2584 = vpop.f32.mrb[0].mxu0
          %v2585 = vadd.f32 %v2542, %v2584
          %v2586 = vpop.f32.mrb[0].mxu0
          %v2587 = vadd.f32 %v2544, %v2586
          %v2588 = vpop.f32.mrb[0].mxu0
          %v2589 = vadd.f32 %v2546, %v2588
          %v2590 = vpop.f32.mrb[0].mxu0
          %v2591 = vadd.f32 %v2548, %v2590
          %2592 = vdwg.mxu0
          %v2593 = vmax.f32 %v2585, 0.0
          %v2594 = vmax.f32 %v2587, 0.0
          %v2595 = vmax.f32 %v2589, 0.0
          %v2596 = vmax.f32 %v2591, 0.0
          %v2597 = vpack.c.bf16 %v2595, %v2593
          %v2598 = vpack.c.bf16 %v2596, %v2594
          %v2599 = vld [vmem:[%s756] sm:$0xf]
          %v2600 = vld [vmem:[%s756 + $0x4] sm:$0xf]
          %v2601 = vld [vmem:[%s8] sm:$0xf]
          %v2602 = vld [vmem:[%s8 + $0x4] sm:$0xf]
          %v2603 = vld [vmem:[%s8 + $0x8] sm:$0xf]
          %v2604 = vld [vmem:[%s8 + $0xc] sm:$0xf]
          %v2605 = vld [vmem:[%s8 + $0x10] sm:$0xf]
          %v2606 = vld [vmem:[%s8 + $0x14] sm:$0xf]
          %v2607 = vld [vmem:[%s8 + $0x18] sm:$0xf]
          %v2608 = vld [vmem:[%s8 + $0x1c] sm:$0xf]
          %v2609 = vld [vmem:[%s8 + $0x20] sm:$0xf]
          %v2610 = vld [vmem:[%s8 + $0x24] sm:$0xf]
          %v2611 = vld [vmem:[%s8 + $0x28] sm:$0xf]
          %v2612 = vld [vmem:[%s8 + $0x2c] sm:$0xf]
          %v2613 = vld [vmem:[%s8 + $0x30] sm:$0xf]
          %v2614 = vld [vmem:[%s8 + $0x34] sm:$0xf]
          %v2615 = vld [vmem:[%s8 + $0x38] sm:$0xf]
          %v2616 = vld [vmem:[%s8 + $0x3c] sm:$0xf]
          %v2617 = vld [vmem:[%s9] sm:$0x1]
          %v2619 = vlaneseq
          %v2620 = vshrl.u32 %v2619, 7
          %v2621 = vsub.s32 0, %v2620
          %v2622 = vrot.slane %v2617, %v2621
          %v2626 = vunpack.c.l.b16 %v2599
          %v2627 = vunpack.c.l.b16 %v2600
          %v2628 = vpack.c.b16 %v2627, %v2626
          %v2646 = vunpack.c.l.b16 %v2601
          %v2647 = vunpack.c.l.b16 %v2602
          %v2648 = vunpack.c.l.b16 %v2603
          %v2649 = vunpack.c.l.b16 %v2604
          %v2650 = vunpack.c.l.b16 %v2605
          %v2651 = vunpack.c.l.b16 %v2606
          %v2652 = vunpack.c.l.b16 %v2607
          %v2653 = vunpack.c.l.b16 %v2608
          %v2654 = vunpack.c.l.b16 %v2609
          %v2655 = vunpack.c.l.b16 %v2610
          %v2656 = vunpack.c.l.b16 %v2611
          %v2657 = vunpack.c.l.b16 %v2612
          %v2658 = vunpack.c.l.b16 %v2613
          %v2659 = vunpack.c.l.b16 %v2614
          %v2660 = vunpack.c.l.b16 %v2615
          %v2661 = vunpack.c.l.b16 %v2616
          %v2662 = vpack.c.b16 %v2647, %v2646
          %v2663 = vpack.c.b16 %v2649, %v2648
          %v2664 = vpack.c.b16 %v2651, %v2650
          %v2665 = vpack.c.b16 %v2653, %v2652
          %v2666 = vpack.c.b16 %v2655, %v2654
          %v2667 = vpack.c.b16 %v2657, %v2656
          %v2668 = vpack.c.b16 %v2659, %v2658
          %v2669 = vpack.c.b16 %v2661, %v2660
          %2678 = vmatprep.subr.bf16.mxu0 0
          %2679 = vmatpush1.bf16.msra.mxu0 %v2662
          %2680 = vmatprep.subr.bf16.mxu0 0
          %2681 = vmatpush1.bf16.msra.mxu0 %v2663
          %2682 = vmatprep.subr.bf16.mxu0 0
          %2683 = vmatpush1.bf16.msra.mxu0 %v2664
          %2684 = vmatprep.subr.bf16.mxu0 0
          %2685 = vmatpush1.bf16.msra.mxu0 %v2665
          %2686 = vmatprep.subr.bf16.mxu0 0
          %2687 = vmatpush1.bf16.msra.mxu0 %v2666
          %2688 = vmatprep.subr.bf16.mxu0 0
          %2689 = vmatpush1.bf16.msra.mxu0 %v2667
          %2690 = vmatprep.subr.bf16.mxu0 0
          %2691 = vmatpush1.bf16.msra.mxu0 %v2668
          %2692 = vmatprep.subr.bf16.mxu0 0
          %2693 = vmatpush1.bf16.msra.mxu0 %v2669
          %2694 = vmatprep.subr.bf16.mxu0 0
          %2695 = vmatpush1.bf16.msra.mxu0 0
          %2696 = vmatprep.subr.bf16.mxu0 0
          %2697 = vmatpush1.bf16.msra.mxu0 0
          %2698 = vmatprep.subr.bf16.mxu0 0
          %2699 = vmatpush1.bf16.msra.mxu0 0
          %2700 = vmatprep.subr.bf16.mxu0 0
          %2701 = vmatpush1.bf16.msra.mxu0 0
          %2702 = vmatprep.subr.bf16.mxu0 0
          %2703 = vmatpush1.bf16.msra.mxu0 0
          %2704 = vmatprep.subr.bf16.mxu0 0
          %2705 = vmatpush1.bf16.msra.mxu0 0
          %2706 = vmatprep.subr.bf16.mxu0 0
          %2707 = vmatpush1.bf16.msra.mxu0 0
          %2708 = vmatprep.subr.bf16.mxu0 0
          %2709 = vmatpush1.bf16.msra.mxu0 0
          %2710 = vmatprep.mubr.bf16.mxu0 0
          %2711 = vmatmul.mubr.bf16.gmra.mrb[0].mxu0 %v2628
          %v2712 = vpop.f32.mrb[0].mxu0
          %v2713 = vadd.f32 %v2622, %v2712
          %v2714 = vpop.f32.mrb[0].mxu0
          %v2715 = vpop.f32.mrb[0].mxu0
          %v2716 = vadd.f32 %v2622, %v2715
          %v2717 = vpop.f32.mrb[0].mxu0
          %2718 = vdwg.mxu0
          %v2719 = vmax.f32 %v2713, 0.0
          %v2720 = vmax.f32 %v2716, 0.0
          %v2721 = vpack.c.bf16 %v2720, %v2719
          %v2722 = vld [vmem:[%s10] sm:$0xf]
          %v2723 = vld [vmem:[%s10 + $0x4] sm:$0xf]
          %v2724 = vld [vmem:[%s10 + $0x8] sm:$0xf]
          %v2725 = vld [vmem:[%s10 + $0xc] sm:$0xf]
          %v2726 = vld [vmem:[%s11] sm:$0x1]
          %v2728 = vlaneseq
          %v2729 = vshrl.u32 %v2728, 7
          %v2730 = vsub.s32 0, %v2729
          %v2731 = vrot.slane %v2726, %v2730
          %v2737 = vunpack.c.l.b16 %v2722
          %v2738 = vunpack.c.l.b16 %v2723
          %v2739 = vunpack.c.l.b16 %v2724
          %v2740 = vunpack.c.l.b16 %v2725
          %v2741 = vpack.c.b16 %v2738, %v2737
          %v2742 = vpack.c.b16 %v2740, %v2739
          %vm2745 = vcmask 261120
          %v2747 = vsel %vm2745, %v2721, 0
          %2749 = vmatprep.subr.bf16.mxu0 0
          %2750 = vmatpush1.bf16.msra.mxu0 %v2741
          %2751 = vmatprep.subr.bf16.mxu0 0
          %2752 = vmatpush1.bf16.msra.mxu0 %v2742
          %2753 = vmatprep.subr.bf16.mxu0 0
          %2754 = vmatpush1.bf16.msra.mxu0 0
          %2755 = vmatprep.subr.bf16.mxu0 0
          %2756 = vmatpush1.bf16.msra.mxu0 0
          %2757 = vmatprep.subr.bf16.mxu0 0
          %2758 = vmatpush1.bf16.msra.mxu0 0
          %2759 = vmatprep.subr.bf16.mxu0 0
          %2760 = vmatpush1.bf16.msra.mxu0 0
          %2761 = vmatprep.subr.bf16.mxu0 0
          %2762 = vmatpush1.bf16.msra.mxu0 0
          %2763 = vmatprep.subr.bf16.mxu0 0
          %2764 = vmatpush1.bf16.msra.mxu0 0
          %2765 = vmatprep.subr.bf16.mxu0 0
          %2766 = vmatpush1.bf16.msra.mxu0 0
          %2767 = vmatprep.subr.bf16.mxu0 0
          %2768 = vmatpush1.bf16.msra.mxu0 0
          %2769 = vmatprep.subr.bf16.mxu0 0
          %2770 = vmatpush1.bf16.msra.mxu0 0
          %2771 = vmatprep.subr.bf16.mxu0 0
          %2772 = vmatpush1.bf16.msra.mxu0 0
          %2773 = vmatprep.subr.bf16.mxu0 0
          %2774 = vmatpush1.bf16.msra.mxu0 0
          %2775 = vmatprep.subr.bf16.mxu0 0
          %2776 = vmatpush1.bf16.msra.mxu0 0
          %2777 = vmatprep.subr.bf16.mxu0 0
          %2778 = vmatpush1.bf16.msra.mxu0 0
          %2779 = vmatprep.subr.bf16.mxu0 0
          %2780 = vmatpush1.bf16.msra.mxu0 0
          %2781 = vmatprep.mubr.bf16.mxu0 0
          %2782 = vmatmul.mubr.bf16.gmra.mrb[0].mxu0 %v2747
          %v2783 = vpop.f32.mrb[0].mxu0
          %v2784 = vadd.f32 %v2731, %v2783
          %v2785 = vpop.f32.mrb[0].mxu0
          %v2786 = vpop.f32.mrb[0].mxu0
          %v2787 = vadd.f32 %v2731, %v2786
          %v2788 = vpop.f32.mrb[0].mxu0
          %2789 = vdwg.mxu0
          %v2790 = vmax.f32 %v2784, 0.0
          %v2791 = vmax.f32 %v2787, 0.0
          %v2792 = vpack.c.bf16 %v2791, %v2790
          %v2793 = vld [vmem:[%s12] sm:$0xf]
          %v2794 = vld [vmem:[%s12 + $0x4] sm:$0xf]
          %v2795 = vld [vmem:[%s12 + $0x8] sm:$0xf]
          %v2796 = vld [vmem:[%s12 + $0xc] sm:$0xf]
          %v2797 = vld [vmem:[%s12 + $0x10] sm:$0xf]
          %v2798 = vld [vmem:[%s12 + $0x14] sm:$0xf]
          %v2799 = vld [vmem:[%s12 + $0x18] sm:$0xf]
          %v2800 = vld [vmem:[%s12 + $0x1c] sm:$0xf]
          %v2801 = vld [vmem:[%s12 + $0x20] sm:$0xf]
          %v2802 = vld [vmem:[%s12 + $0x24] sm:$0xf]
          %v2803 = vld [vmem:[%s12 + $0x28] sm:$0xf]
          %v2804 = vld [vmem:[%s12 + $0x2c] sm:$0xf]
          %v2805 = vld [vmem:[%s12 + $0x30] sm:$0xf]
          %v2806 = vld [vmem:[%s12 + $0x34] sm:$0xf]
          %v2807 = vld [vmem:[%s12 + $0x38] sm:$0xf]
          %v2808 = vld [vmem:[%s12 + $0x3c] sm:$0xf]
          %v2809 = vld [vmem:[%s12 + $0x40] sm:$0xf]
          %v2810 = vld [vmem:[%s12 + $0x44] sm:$0xf]
          %v2811 = vld [vmem:[%s12 + $0x48] sm:$0xf]
          %v2812 = vld [vmem:[%s12 + $0x4c] sm:$0xf]
          %v2813 = vld [vmem:[%s12 + $0x50] sm:$0xf]
          %v2814 = vld [vmem:[%s12 + $0x54] sm:$0xf]
          %v2815 = vld [vmem:[%s12 + $0x58] sm:$0xf]
          %v2816 = vld [vmem:[%s12 + $0x5c] sm:$0xf]
          %v2817 = vld [vmem:[%s12 + $0x60] sm:$0xf]
          %v2818 = vld [vmem:[%s12 + $0x64] sm:$0xf]
          %v2819 = vld [vmem:[%s12 + $0x68] sm:$0xf]
          %v2820 = vld [vmem:[%s12 + $0x6c] sm:$0xf]
          %v2821 = vld [vmem:[%s12 + $0x70] sm:$0xf]
          %v2822 = vld [vmem:[%s12 + $0x74] sm:$0xf]
          %v2823 = vld [vmem:[%s12 + $0x78] sm:$0xf]
          %v2824 = vld [vmem:[%s12 + $0x7c] sm:$0xf]
          %v2825 = vld [vmem:[%s13] sm:$0xf]
          %v2826 = vld [vmem:[%s13 + $0x4] sm:$0xf]
          %v2829 = vunpack.c.l.b16 %v2825
          %v2830 = vunpack.c.l.b16 %v2826
          %v2831 = vpack.c.b16 %v2830, %v2829
          %vm2833 = vcmask 130048
          %v2835 = vsel %vm2833, %v2792, 0
          %2837 = vmatprep.subr.bf16.mxu0 0
          %2838 = vmatpush1.bf16.msra.mxu0 %v2831
          %2839 = vmatprep.subr.bf16.mxu0 0
          %2840 = vmatpush1.bf16.msra.mxu0 0
          %2841 = vmatprep.subr.bf16.mxu0 0
          %2842 = vmatpush1.bf16.msra.mxu0 0
          %2843 = vmatprep.subr.bf16.mxu0 0
          %2844 = vmatpush1.bf16.msra.mxu0 0
          %2845 = vmatprep.subr.bf16.mxu0 0
          %2846 = vmatpush1.bf16.msra.mxu0 0
          %2847 = vmatprep.subr.bf16.mxu0 0
          %2848 = vmatpush1.bf16.msra.mxu0 0
          %2849 = vmatprep.subr.bf16.mxu0 0
          %2850 = vmatpush1.bf16.msra.mxu0 0
          %2851 = vmatprep.subr.bf16.mxu0 0
          %2852 = vmatpush1.bf16.msra.mxu0 0
          %2853 = vmatprep.subr.bf16.mxu0 0
          %2854 = vmatpush1.bf16.msra.mxu0 0
          %2855 = vmatprep.subr.bf16.mxu0 0
          %2856 = vmatpush1.bf16.msra.mxu0 0
          %2857 = vmatprep.subr.bf16.mxu0 0
          %2858 = vmatpush1.bf16.msra.mxu0 0
          %2859 = vmatprep.subr.bf16.mxu0 0
          %2860 = vmatpush1.bf16.msra.mxu0 0
          %2861 = vmatprep.subr.bf16.mxu0 0
          %2862 = vmatpush1.bf16.msra.mxu0 0
          %2863 = vmatprep.subr.bf16.mxu0 0
          %2864 = vmatpush1.bf16.msra.mxu0 0
          %2865 = vmatprep.subr.bf16.mxu0 0
          %2866 = vmatpush1.bf16.msra.mxu0 0
          %2867 = vmatprep.subr.bf16.mxu0 0
          %2868 = vmatpush1.bf16.msra.mxu0 0
          %2869 = vmatprep.mubr.bf16.mxu0 0
          %2870 = vmatmul.mubr.bf16.gmra.mrb[0].mxu0 %v2835
          %v2871 = vpop.f32.mrb[0].mxu0
          %v2872 = vadd.f32 0.0, %v2871
          %v2873 = vpop.f32.mrb[0].mxu0
          %v2874 = vpop.f32.mrb[0].mxu0
          %v2875 = vadd.f32 0.0, %v2874
          %v2876 = vpop.f32.mrb[0].mxu0
          %2877 = vdwg.mxu0
          %v2910 = vunpack.c.l.b16 %v2793
          %v2911 = vunpack.c.l.b16 %v2794
          %v2912 = vunpack.c.l.b16 %v2795
          %v2913 = vunpack.c.l.b16 %v2796
          %v2914 = vunpack.c.l.b16 %v2797
          %v2915 = vunpack.c.l.b16 %v2798
          %v2916 = vunpack.c.l.b16 %v2799
          %v2917 = vunpack.c.l.b16 %v2800
          %v2918 = vunpack.c.l.b16 %v2801
          %v2919 = vunpack.c.l.b16 %v2802
          %v2920 = vunpack.c.l.b16 %v2803
          %v2921 = vunpack.c.l.b16 %v2804
          %v2922 = vunpack.c.l.b16 %v2805
          %v2923 = vunpack.c.l.b16 %v2806
          %v2924 = vunpack.c.l.b16 %v2807
          %v2925 = vunpack.c.l.b16 %v2808
          %v2926 = vunpack.c.l.b16 %v2809
          %v2927 = vunpack.c.l.b16 %v2810
          %v2928 = vunpack.c.l.b16 %v2811
          %v2929 = vunpack.c.l.b16 %v2812
          %v2930 = vunpack.c.l.b16 %v2813
          %v2931 = vunpack.c.l.b16 %v2814
          %v2932 = vunpack.c.l.b16 %v2815
          %v2933 = vunpack.c.l.b16 %v2816
          %v2934 = vunpack.c.l.b16 %v2817
          %v2935 = vunpack.c.l.b16 %v2818
          %v2936 = vunpack.c.l.b16 %v2819
          %v2937 = vunpack.c.l.b16 %v2820
          %v2938 = vunpack.c.l.b16 %v2821
          %v2939 = vunpack.c.l.b16 %v2822
          %v2940 = vunpack.c.l.b16 %v2823
          %v2941 = vunpack.c.l.b16 %v2824
          %v2942 = vpack.c.b16 %v2911, %v2910
          %v2943 = vpack.c.b16 %v2913, %v2912
          %v2944 = vpack.c.b16 %v2915, %v2914
          %v2945 = vpack.c.b16 %v2917, %v2916
          %v2946 = vpack.c.b16 %v2919, %v2918
          %v2947 = vpack.c.b16 %v2921, %v2920
          %v2948 = vpack.c.b16 %v2923, %v2922
          %v2949 = vpack.c.b16 %v2925, %v2924
          %v2950 = vpack.c.b16 %v2927, %v2926
          %v2951 = vpack.c.b16 %v2929, %v2928
          %v2952 = vpack.c.b16 %v2931, %v2930
          %v2953 = vpack.c.b16 %v2933, %v2932
          %v2954 = vpack.c.b16 %v2935, %v2934
          %v2955 = vpack.c.b16 %v2937, %v2936
          %v2956 = vpack.c.b16 %v2939, %v2938
          %v2957 = vpack.c.b16 %v2941, %v2940
          %2974 = vmatprep.subr.bf16.mxu0 0
          %2975 = vmatpush1.bf16.msra.mxu0 %v2942
          %2976 = vmatprep.subr.bf16.mxu0 0
          %2977 = vmatpush1.bf16.msra.mxu0 %v2943
          %2978 = vmatprep.subr.bf16.mxu0 0
          %2979 = vmatpush1.bf16.msra.mxu0 %v2944
          %2980 = vmatprep.subr.bf16.mxu0 0
          %2981 = vmatpush1.bf16.msra.mxu0 %v2945
          %2982 = vmatprep.subr.bf16.mxu0 0
          %2983 = vmatpush1.bf16.msra.mxu0 %v2946
          %2984 = vmatprep.subr.bf16.mxu0 0
          %2985 = vmatpush1.bf16.msra.mxu0 %v2947
          %2986 = vmatprep.subr.bf16.mxu0 0
          %2987 = vmatpush1.bf16.msra.mxu0 %v2948
          %2988 = vmatprep.subr.bf16.mxu0 0
          %2989 = vmatpush1.bf16.msra.mxu0 %v2949
          %2990 = vmatprep.subr.bf16.mxu0 0
          %2991 = vmatpush1.bf16.msra.mxu0 %v2950
          %2992 = vmatprep.subr.bf16.mxu0 0
          %2993 = vmatpush1.bf16.msra.mxu0 %v2951
          %2994 = vmatprep.subr.bf16.mxu0 0
          %2995 = vmatpush1.bf16.msra.mxu0 %v2952
          %2996 = vmatprep.subr.bf16.mxu0 0
          %2997 = vmatpush1.bf16.msra.mxu0 %v2953
          %2998 = vmatprep.subr.bf16.mxu0 0
          %2999 = vmatpush1.bf16.msra.mxu0 %v2954
          %3000 = vmatprep.subr.bf16.mxu0 0
          %3001 = vmatpush1.bf16.msra.mxu0 %v2955
          %3002 = vmatprep.subr.bf16.mxu0 0
          %3003 = vmatpush1.bf16.msra.mxu0 %v2956
          %3004 = vmatprep.subr.bf16.mxu0 0
          %3005 = vmatpush1.bf16.msra.mxu0 %v2957
          %3006 = vmatprep.mubr.bf16.mxu0 %v2598
          %3007 = vmatmul.mubr.bf16.gmra.mrb[0].mxu0 %v2597
          %v3008 = vpop.f32.mrb[0].mxu0
          %v3009 = vadd.f32 %v2872, %v3008
          %v3010 = vpop.f32.mrb[0].mxu0
          %v3011 = vpop.f32.mrb[0].mxu0
          %v3012 = vadd.f32 %v2875, %v3011
          %v3013 = vpop.f32.mrb[0].mxu0
          %3014 = vdwg.mxu0
          %v3015 = vld [vmem:[%s14] sm:$0x1]
          %v3017 = vlaneseq
          %v3018 = vshrl.u32 %v3017, 7
          %v3019 = vsub.s32 0, %v3018
          %v3020 = vrot.slane %v3015, %v3019
          %v3022 = vadd.f32 %v3009, %v3020
          %v3023 = vadd.f32 %v3012, %v3020
          %v3024 = vmax.f32 %v3022, 0.0
          %v3025 = vmax.f32 %v3023, 0.0
          %v3026 = vpack.c.bf16 %v3025, %v3024
          %v3027 = vld [vmem:[%s15] sm:$0xf]
          %v3028 = vld [vmem:[%s15 + $0x4] sm:$0xf]
          %v3029 = vld [vmem:[%s15 + $0x8] sm:$0xf]
          %v3030 = vld [vmem:[%s15 + $0xc] sm:$0xf]
          %v3031 = vld [vmem:[%s15 + $0x10] sm:$0xf]
          %v3032 = vld [vmem:[%s15 + $0x14] sm:$0xf]
          %v3033 = vld [vmem:[%s15 + $0x18] sm:$0xf]
          %v3034 = vld [vmem:[%s15 + $0x1c] sm:$0xf]
          %v3035 = vld [vmem:[%s16] sm:$0x1]
          %v3037 = vlaneseq
          %v3038 = vshrl.u32 %v3037, 7
          %v3039 = vsub.s32 0, %v3038
          %v3040 = vrot.slane %v3035, %v3039
          %v3050 = vunpack.c.l.b16 %v3027
          %v3051 = vunpack.c.l.b16 %v3028
          %v3052 = vunpack.c.l.b16 %v3029
          %v3053 = vunpack.c.l.b16 %v3030
          %v3054 = vunpack.c.l.b16 %v3031
          %v3055 = vunpack.c.l.b16 %v3032
          %v3056 = vunpack.c.l.b16 %v3033
          %v3057 = vunpack.c.l.b16 %v3034
          %v3058 = vpack.c.b16 %v3051, %v3050
          %v3059 = vpack.c.b16 %v3053, %v3052
          %v3060 = vpack.c.b16 %v3055, %v3054
          %v3061 = vpack.c.b16 %v3057, %v3056
          %vm3066 = vcmask 523264
          %v3068 = vsel %vm3066, %v3026, 0
          %3070 = vmatprep.subr.bf16.mxu0 0
          %3071 = vmatpush1.bf16.msra.mxu0 %v3058
          %3072 = vmatprep.subr.bf16.mxu0 0
          %3073 = vmatpush1.bf16.msra.mxu0 %v3059
          %3074 = vmatprep.subr.bf16.mxu0 0
          %3075 = vmatpush1.bf16.msra.mxu0 %v3060
          %3076 = vmatprep.subr.bf16.mxu0 0
          %3077 = vmatpush1.bf16.msra.mxu0 %v3061
          %3078 = vmatprep.subr.bf16.mxu0 0
          %3079 = vmatpush1.bf16.msra.mxu0 0
          %3080 = vmatprep.subr.bf16.mxu0 0
          %3081 = vmatpush1.bf16.msra.mxu0 0
          %3082 = vmatprep.subr.bf16.mxu0 0
          %3083 = vmatpush1.bf16.msra.mxu0 0
          %3084 = vmatprep.subr.bf16.mxu0 0
          %3085 = vmatpush1.bf16.msra.mxu0 0
          %3086 = vmatprep.subr.bf16.mxu0 0
          %3087 = vmatpush1.bf16.msra.mxu0 0
          %3088 = vmatprep.subr.bf16.mxu0 0
          %3089 = vmatpush1.bf16.msra.mxu0 0
          %3090 = vmatprep.subr.bf16.mxu0 0
          %3091 = vmatpush1.bf16.msra.mxu0 0
          %3092 = vmatprep.subr.bf16.mxu0 0
          %3093 = vmatpush1.bf16.msra.mxu0 0
          %3094 = vmatprep.subr.bf16.mxu0 0
          %3095 = vmatpush1.bf16.msra.mxu0 0
          %3096 = vmatprep.subr.bf16.mxu0 0
          %3097 = vmatpush1.bf16.msra.mxu0 0
          %3098 = vmatprep.subr.bf16.mxu0 0
          %3099 = vmatpush1.bf16.msra.mxu0 0
          %3100 = vmatprep.subr.bf16.mxu0 0
          %3101 = vmatpush1.bf16.msra.mxu0 0
          %3102 = vmatprep.mubr.bf16.mxu0 0
          %3103 = vmatmul.mubr.bf16.gmra.mrb[0].mxu0 %v3068
          %v3104 = vpop.f32.mrb[0].mxu0
          %v3105 = vadd.f32 %v3040, %v3104
          %v3106 = vpop.f32.mrb[0].mxu0
          %v3107 = vpop.f32.mrb[0].mxu0
          %v3108 = vadd.f32 %v3040, %v3107
          %v3109 = vpop.f32.mrb[0].mxu0
          %3110 = vdwg.mxu0
          %v3111 = vmax.f32 %v3105, 0.0
          %v3112 = vmax.f32 %v3108, 0.0
          %v3113 = vld [vmem:[%s17] sm:$0x1]
          %v3114 = vunpack.c.l.bf16 %v3113
          %v3115 = vlaneseq
          %v3116 = vshrl.u32 %v3115, 7
          %v3117 = vsub.s32 0, %v3116
          %v3118 = vrot.slane %v3114, %v3117
          %v3119 = vmul.f32 %v3111, %v3118
          %v3120 = vmul.f32 %v3112, %v3118
          %v3121 = vsel %vm2745, %v3119, 0.0
          %3122 = vadd.xlane.f32.xlu0 %v3121
          %v3123 = vpop.xlane.xlu0 %3122
          %v3124 = vsel %vm2745, %v3120, 0.0
          %3125 = vadd.xlane.f32.xlu0 %v3124
          %v3126 = vpop.xlane.xlu0 %3125
          %v3127 = vld [vmem:[#allocation3] sm:$0x1]
          %v3129 = vlaneseq
          %v3130 = vshrl.u32 %v3129, 7
          %v3131 = vsub.s32 0, %v3130
          %v3132 = vrot.slane %v3127, %v3131
          %v3134 = vadd.f32 %v3123, %v3132
          %v3135 = vadd.f32 %v3126, %v3132
          %3137 = vset.pattern.permute.xlu0 0
          %3138 = vperm.xlu0 %3137, %v3134
          %v3139 = vpop.permute.xlu0 %3138
          %3142 = vset.pattern.permute.xlu0 0
          %3143 = vperm.xlu0 %3142, %v3135
          %v3144 = vpop.permute.xlu0 %3143
          %3146 = vst [vmem:[%s750] sm:$0xff] %v3139
          %3147 = vst [vmem:[%s750 + $0x8] sm:$0xff] %v3144
        $region157: #{tpu_custom_call.1} parent=132 // pred_fallthru
          _
        %s3148 = sand.u32 %s475, 1
        %s3149 = scalar_lea.sflag [#allocation7], %s3148
        %s3150 = sand.u32 %s475, 1
        %s3151 = smul.addr %s3150, 16
        %s3152 = scalar_lea.vmem [#allocation11], %s3151
        // Predicated region
        $region158: #{tpu_custom_call.1} parent=132 // pred_check
          %p3153 = pneg %p485
        $region159: #{tpu_custom_call.1} parent=132 // pred_check_branch
          %3155 = sbr.rel (%p3153) target = $region161
        $region160: #{tpu_custom_call.1} parent=132 // pred_region
          %s3156 = smul.u32 2, %s43
          %s3158 = ssub.s32 256, 256
          %3159 = vsyncadd %s3149, %s3158
          %s3160 = smul.addr %s3156, 128
          %s3161 = scalar_lea.hbm %s19, %s3160
          %s3162 = sshll.u32 %s3152, 4
          %s3163 = int_to_ptr.vmem [resolvable:$true] %s3162
          %3168 = dma.vmem_to_hbm [thread:$0]  %s3163, 256, %s3161, %s3149, 128, 128, 8
        $region161: #{tpu_custom_call.1} parent=132 // pred_fallthru
          _
      $region133: #{tpu_custom_call.1} parent=5 // pred_fallthru
        _
      %p3169 = scmp.le.s32.totalorder 2, %s34
      // Predicated region
      $region162: #{tpu_custom_call.1} parent=5 // pred_check
        %p3170 = pneg %p3169
      $region163: #{tpu_custom_call.1} parent=5 // pred_check_branch
        %3172 = sbr.rel (%p3170) target = $region165
      $region164: #{tpu_custom_call.1} parent=5 // pred_region
        %s3173 = ssub.s32 %s34, 2
        // Predicated region
        $region166: #{tpu_custom_call.1} parent=164 // pred_check
          %p3174 = pneg %p491
        $region167: #{tpu_custom_call.1} parent=164 // pred_check_branch
          %3176 = sbr.rel (%p3174) target = $region169
        $region168: #{tpu_custom_call.1} parent=164 // pred_region
          %s3177 = sand.u32 %s476, 1
          %s3178 = scalar_lea.sflag [#allocation7], %s3177
          %s3179 = sand.u32 %s476, 1
          %s3180 = smul.addr %s3179, 16
          %s3181 = scalar_lea.vmem [#allocation11], %s3180
          %3182 = dma.done %s3178, 256
        $region169: #{tpu_custom_call.1} parent=164 // pred_fallthru
          _
      $region165: #{tpu_custom_call.1} parent=5 // pred_fallthru
        _
    $region6: #{tpu_custom_call.1} parent=1 // loop_footer
      %s38 = sadd.s32 1, %s34
    $region7: #{tpu_custom_call.1} parent=1 // loop_footer_branch
      %33 = sbr.rel target = $region3
    $region8: #{tpu_custom_call.1} parent=1 // loop_exit
      _
    %3183 = vsyncpa [#allocation6], 1
    %s3184 = scalar_lea.sflag [#allocation6], 1
    %3185 = vsyncpa %s3184, 1
    %3186 = vsyncpa [#allocation9], 1
    %3187 = vsyncpa [#allocation7], 1
    %s3188 = scalar_lea.sflag [#allocation7], 1
    %3189 = vsyncpa %s3188, 1

</llo_original>
